<compile_context>
chip_gen: v7x
topology: tpu7x:2x2x1
jax: 0.10.0
libtpu: 0.0.40
codegen_flags: <defaults>
</compile_context>

<pallas_src>
import functools

import jax
import jax.numpy as jnp
from jax import lax
from jax.experimental import pallas as pl
from jax.experimental.pallas import tpu as pltpu


def _params(*sems):
    return pltpu.CompilerParams(
        dimension_semantics=sems,
        vmem_limit_bytes=32 * 1024 * 1024,
    )


def _pick_block(n, align, max_blk):
    """Largest multiple of `align` that divides n and is <= max_blk (else n)."""
    if n % align != 0:
        return n
    best = align
    b = align
    while b <= min(n, max_blk):
        if n % b == 0:
            best = b
        b += align
    return best


# ----------------------------- Pallas kernels ------------------------------

def _conv1x1_kernel(x_ref, w_ref, b_ref, o_ref):
    # x: (1, Cin, pix) f32, w: (C, Cin) bf16, b: (C, 1) f32 -> o: (1, C, pix) bf16
    y = jnp.dot(w_ref[...], x_ref[0].astype(jnp.bfloat16),
                preferred_element_type=jnp.float32) + b_ref[...]
    o_ref[0] = y.astype(jnp.bfloat16)


def conv1x1(x_flat, w_bf16, bias):
    """ConvX (1x1 conv) as a pixel-tiled bf16 MXU matmul, grid=(B, pixel blocks)."""
    B, Cin, HW = x_flat.shape
    C = w_bf16.shape[0]
    pix_blk = _pick_block(HW, 128, 2048)
    return pl.pallas_call(
        _conv1x1_kernel,
        out_shape=jax.ShapeDtypeStruct((B, C, HW), jnp.bfloat16),
        grid=(B, HW // pix_blk),
        in_specs=[
            pl.BlockSpec((1, Cin, pix_blk), lambda b, p: (b, 0, p)),
            pl.BlockSpec((C, Cin), lambda b, p: (0, 0)),
            pl.BlockSpec((C, 1), lambda b, p: (0, 0)),
        ],
        out_specs=pl.BlockSpec((1, C, pix_blk), lambda b, p: (b, 0, p)),
        compiler_params=_params("parallel", "parallel"),
    )(x_flat, w_bf16, bias)


def _front_kernel(y_ref, rh_ref, rwt_ref, ph_ref, pwt_ref, xr_ref, pooled_ref):
    # y: (1, C, H, W) bf16 (conv output), rh: (Hr, H), rwt: (W, Wr),
    # ph: (Hf, Hr), pwt: (Wr, Wf)   -- all interp/pool matrices in bf16.
    C = y_ref.shape[1]
    rh = rh_ref[...]
    rwt = rwt_ref[...]
    ph = ph_ref[...]
    pwt = pwt_ref[...]

    # Separable bilinear resize (align_corners=True), per class channel.
    # C is a small static int -> unrolled 2-D MXU matmuls (f32 accumulation).
    xs = []
    for c in range(C):
        t = jnp.dot(y_ref[0, c], rwt, preferred_element_type=jnp.float32)
        xc = jnp.dot(rh, t.astype(jnp.bfloat16),
                     preferred_element_type=jnp.float32)          # (Hr, Wr) f32
        xr_ref[0, c] = xc
        xs.append(xc)

    # One-hot of the channel argmax (first max wins == torch scatter of ones).
    maxv = xs[0]
    for c in range(1, C):
        maxv = jnp.maximum(maxv, xs[c])
    taken = jnp.zeros_like(maxv, dtype=jnp.bool_)

    # Grouped ones-kernel conv, stride == kernel == pool_k, / pool_k**2
    # == block average pool.  Fused with the one-hot so the (B,C,Hr,Wr)
    # one-hot tensor never hits HBM.
    for c in range(C):
        hit = jnp.logical_and(xs[c] == maxv, jnp.logical_not(taken))
        taken = jnp.logical_or(taken, hit)
        oh = jnp.where(hit, 1.0, 0.0).astype(jnp.bfloat16)        # (Hr, Wr)
        tp = jnp.dot(oh, pwt, preferred_element_type=jnp.float32)
        pooled_ref[0, c] = jnp.dot(ph, tp.astype(jnp.bfloat16),
                                   preferred_element_type=jnp.float32)


def resize_onehot_pool(y4, rh, rwt, ph, pwt, Hr, Wr, Hf, Wf):
    B, C, H, W = y4.shape
    return pl.pallas_call(
        _front_kernel,
        out_shape=(jax.ShapeDtypeStruct((B, C, Hr, Wr), jnp.float32),
                   jax.ShapeDtypeStruct((B, C, Hf, Wf), jnp.float32)),
        grid=(B,),
        in_specs=[
            pl.BlockSpec((1, C, H, W), lambda b: (b, 0, 0, 0)),
            pl.BlockSpec((Hr, H), lambda b: (0, 0)),
            pl.BlockSpec((W, Wr), lambda b: (0, 0)),
            pl.BlockSpec((Hf, Hr), lambda b: (0, 0)),
            pl.BlockSpec((Wr, Wf), lambda b: (0, 0)),
        ],
        out_specs=(pl.BlockSpec((1, C, Hr, Wr), lambda b: (b, 0, 0, 0)),
                   pl.BlockSpec((1, C, Hf, Wf), lambda b: (b, 0, 0, 0))),
        compiler_params=_params("parallel"),
    )(y4, rh, rwt, ph, pwt)


def _attn_kernel(attn_ref, unf_ref, m_ref):
    attn = attn_ref[0]                                     # (C, Sq, L) f32
    cnt = jnp.sum(jnp.where(attn != 0.0, 1.0, 0.0),
                  axis=-1, keepdims=True) + 1e-5           # count_nonzero + eps
    attn_n = attn * pl.reciprocal(cnt, approx=True)        # EUP, ~free
    # Batched over ALL classes in one step: (C,Sq,L) x (C,PP,L) -> (C,Sq,PP).
    m_ref[0] = lax.dot_general(
        attn_n, unf_ref[0],
        dimension_numbers=(((2,), (2,)), ((0,), (0,))),
        preferred_element_type=jnp.float32)


def attn_correction(attn, unf):
    B, C, Sq, L = attn.shape
    PP = unf.shape[2]
    return pl.pallas_call(
        _attn_kernel,
        out_shape=jax.ShapeDtypeStruct((B, C, Sq, PP), jnp.float32),
        grid=(B,),
        in_specs=[pl.BlockSpec((1, C, Sq, L), lambda b: (b, 0, 0, 0)),
                  pl.BlockSpec((1, C, PP, L), lambda b: (b, 0, 0, 0))],
        out_specs=pl.BlockSpec((1, C, Sq, PP), lambda b: (b, 0, 0, 0)),
        compiler_params=_params("parallel"),
    )(attn, unf)


def _final_kernel(x_ref, corr_ref, o_ref):
    # x/corr: (1, C, rows, lanes) f32; log-softmax over the class axis (dim 1),
    # which is the leading axis of the block view -> pure per-lane VPU work.
    y = (corr_ref[0] + 1.0) * x_ref[0]
    m = jnp.max(y, axis=0, keepdims=True)
    e = jnp.exp(y - m)
    lse = m + jnp.log(jnp.sum(e, axis=0, keepdims=True))
    o_ref[0] = y - lse


def fused_correction_logsoftmax(xr, corr):
    B, C, Hr, Wr = xr.shape
    HW = Hr * Wr
    lanes = 128 if HW % 128 == 0 else HW          # lane-dense packing
    rows = HW // lanes
    rblk = _pick_block(rows, 8, 128)              # up to 16K pixels per step
    x4 = xr.reshape(B, C, rows, lanes)            # free: same linear layout
    c4 = corr.reshape(B, C, rows, lanes)
    out = pl.pallas_call(
        _final_kernel,
        out_shape=jax.ShapeDtypeStruct((B, C, rows, lanes), jnp.float32),
        grid=(B, rows // rblk),
        in_specs=[pl.BlockSpec((1, C, rblk, lanes), lambda b, r: (b, 0, r, 0)),
                  pl.BlockSpec((1, C, rblk, lanes), lambda b, r: (b, 0, r, 0))],
        out_specs=pl.BlockSpec((1, C, rblk, lanes), lambda b, r: (b, 0, r, 0)),
        compiler_params=_params("parallel", "parallel"),
    )(x4, c4)
    return out.reshape(B, C, Hr, Wr)


# ------------------------------- JAX glue -----------------------------------

def _interp_matrix(n_in, n_out):
    """(n_out, n_in) bilinear (align_corners=True) row-interpolation matrix."""
    if n_out == 1:
        pos = jnp.zeros((1,), jnp.float32)
    else:
        pos = jnp.arange(n_out, dtype=jnp.float32) * (n_in - 1) / (n_out - 1)
    lo = jnp.clip(jnp.floor(pos).astype(jnp.int32), 0, max(n_in - 2, 0))
    hi = jnp.minimum(lo + 1, n_in - 1)
    frac = pos - lo.astype(jnp.float32)
    return ((1.0 - frac)[:, None] * jax.nn.one_hot(lo, n_in, dtype=jnp.float32)
            + frac[:, None] * jax.nn.one_hot(hi, n_in, dtype=jnp.float32))


def _pool_matrix(n_in, k):
    """(n_in//k, n_in) block-average matrix with entries 1/k."""
    n_out = n_in // k
    rows = jnp.arange(n_out)[:, None]
    cols = jnp.arange(n_in)[None, :]
    return jnp.where(cols // k == rows, 1.0 / k, 0.0).astype(jnp.float32)


def context_seg_forward(x, attentions, params, *, resize_hw, pool_k, patch):
    B, Cin, H, W = x.shape
    C = params["conv_w"].shape[0]
    Hr, Wr = resize_hw
    Hf, Wf = Hr // pool_k, Wr // pool_k
    P = patch
    Qh, Qw = Hr // P, Wr // P
    Lh, Lw = Hf // P, Wf // P
    L, PP = Lh * Lw, P * P

    # ---- 1x1 conv (ConvX): tiled bf16 matmul over (B, pixel-block) grid ----
    x_flat = x.reshape(B, Cin, H * W)                   # free reshape
    w_bf = params["conv_w"].astype(jnp.bfloat16)        # (C, Cin)
    y = conv1x1(x_flat, w_bf, params["conv_b"])         # (B, C, H*W) bf16
    y4 = y.reshape(B, C, H, W)                          # free reshape

    # ---- fused: bilinear resize -> channel-argmax one-hot -> avg pool ------
    rh = _interp_matrix(H, Hr).astype(jnp.bfloat16)     # (Hr, H)
    rwt = _interp_matrix(W, Wr).T.astype(jnp.bfloat16)  # (W, Wr)
    ph = _pool_matrix(Hr, pool_k).astype(jnp.bfloat16)  # (Hf, Hr)
    pwt = _pool_matrix(Wr, pool_k).T.astype(jnp.bfloat16)  # (Wr, Wf)
    xr, pooled = resize_onehot_pool(y4, rh, rwt, ph, pwt, Hr, Wr, Hf, Wf)

    # ---- Unfold(ArgxFeamap), kernel == stride == P: tiny XLA reshape glue --
    unf = (pooled.reshape(B, C, Lh, P, Lw, P)
                 .transpose(0, 1, 3, 5, 2, 4)
                 .reshape(B, C, PP, L))

    # ---- per-class attention correction, batched over all classes ---------
    m = attn_correction(attentions.astype(jnp.float32), unf)   # (B, C, Sq, PP)

    # ---- Fold back to (B, C, Hr, Wr): kernel == stride --------------------
    # TODO(synk): the fold's sub-(8,128) patch permutation is left to XLA; it
    # has no efficient Mosaic vector-layout equivalent.
    corr = (m.reshape(B, C, Qh, Qw, P, P)
              .transpose(0, 1, 2, 4, 3, 5)
              .reshape(B, C, Hr, Wr))

    # ---- (Correction + 1) * x  +  LogSoftmax(dim=1), lane-dense & tiled ----
    out = fused_correction_logsoftmax(xr, corr)         # (B, C, Hr, Wr) NCHW
    return out, attentions


# --------------------------------- main --------------------------------------

if __name__ == "__main__":
    # Small shapes consistent with the module:
    B, Cin, H, W = 2, 4, 8, 8
    C = 4                        # opt.seg_num_classes
    Hr = Wr = 16                 # opt.resize_shape
    cattn_depth = 2              # pooling window/stride = 2**cattn_depth = 4
    pool_k = 2 ** cattn_depth
    P = 2                        # opt.cattn_patch
    Hf, Wf = Hr // pool_k, Wr // pool_k
    Sq = (Hr // P) * (Wr // P)   # 64 query patches over the resized map
    L = (Hf // P) * (Wf // P)    # 4 key patches over the pooled map

    key = jax.random.PRNGKey(0)
    k1, k2, k3, k4 = jax.random.split(key, 4)
    x = jax.random.normal(k1, (B, Cin, H, W), jnp.float32)
    attentions = jax.random.uniform(k2, (B, C, Sq, L), jnp.float32)

    # Deterministic synthetic parameters (ConvX weight (C, Cin) + bias (C, 1)).
    params = {
        "conv_w": 0.1 * jax.random.normal(k3, (C, Cin), jnp.float32),
        "conv_b": 0.1 * jax.random.normal(k4, (C, 1), jnp.float32),
    }

    fwd = jax.jit(functools.partial(
        context_seg_forward, resize_hw=(Hr, Wr), pool_k=pool_k, patch=P))
    out, attn_out = fwd(x, attentions, params)
    jax.block_until_ready(out)

    assert out.shape == (B, C, Hr, Wr)
    assert attn_out.shape == (B, C, Sq, L)
    # log-softmax rows must (almost) sum to 1 in prob space
    assert jnp.allclose(jnp.sum(jnp.exp(out), axis=1), 1.0, atol=1e-3)
    print("KERNEL_OK")
</pallas_src>

<mosaic_0001>
module attributes {stable_mosaic.version = 11 : i64} {
  func.func @_conv1x1_kernel(%arg0: i32, %arg1: i32, %arg2: memref<1x4x64xf32, #tpu.memory_space<vmem>>, %arg3: memref<4x4xbf16, #tpu.memory_space<vmem>>, %arg4: memref<4x1xf32, #tpu.memory_space<vmem>>, %arg5: memref<1x4x64xbf16, #tpu.memory_space<vmem>>) attributes {dimension_semantics = [#tpu.dimension_semantics<parallel>, #tpu.dimension_semantics<parallel>], iteration_bounds = array<i64: 2, 1>, scalar_prefetch = 0 : i64, scratch_operands = 0 : i64, tpu.core_type = #tpu.core_type<tc>, window_params = [{transform_indices = @transform_0, window_bounds = array<i64: 1, 4, 64>}, {pipeline_mode = #tpu.pipeline_mode<synchronous>, transform_indices = @transform_1, window_bounds = array<i64: 4, 4>}, {pipeline_mode = #tpu.pipeline_mode<synchronous>, transform_indices = @transform_2, window_bounds = array<i64: 4, 1>}, {transform_indices = @transform_3, window_bounds = array<i64: 1, 4, 64>}]} {
    %c0 = arith.constant 0 : index
    %c0_0 = arith.constant 0 : index
    %0 = vector.load %arg3[%c0, %c0_0] : memref<4x4xbf16, #tpu.memory_space<vmem>>, vector<4x4xbf16>
    %c0_1 = arith.constant 0 : index
    %c0_2 = arith.constant 0 : index
    %c0_3 = arith.constant 0 : index
    %1 = vector.load %arg2[%c0_1, %c0_2, %c0_3] : memref<1x4x64xf32, #tpu.memory_space<vmem>>, vector<1x4x64xf32>
    %2 = vector.shape_cast %1 : vector<1x4x64xf32> to vector<4x64xf32>
    %3 = arith.truncf %2 : vector<4x64xf32> to vector<4x64xbf16>
    %cst = arith.constant dense<0.000000e+00> : vector<4x64xf32>
    %4 = tpu.matmul %0, %3, %cst {dimension_numbers = #tpu.dot_dimension_numbers<[1], [0], [0], [1], [0, 0, 1, 1], [], []>} : vector<4x4xbf16>, vector<4x64xbf16>, vector<4x64xf32> -> vector<4x64xf32>
    %c0_4 = arith.constant 0 : index
    %c0_5 = arith.constant 0 : index
    %5 = vector.load %arg4[%c0_4, %c0_5] : memref<4x1xf32, #tpu.memory_space<vmem>>, vector<4x1xf32>
    %6 = vector.broadcast %5 : vector<4x1xf32> to vector<4x64xf32>
    %7 = arith.addf %4, %6 : vector<4x64xf32>
    %8 = arith.truncf %7 : vector<4x64xf32> to vector<4x64xbf16>
    %c0_6 = arith.constant 0 : index
    %c0_7 = arith.constant 0 : index
    %c0_8 = arith.constant 0 : index
    %9 = vector.load %arg5[%c0_6, %c0_7, %c0_8] : memref<1x4x64xbf16, #tpu.memory_space<vmem>>, vector<1x4x64xbf16>
    %10 = vector.shape_cast %9 : vector<1x4x64xbf16> to vector<4x64xbf16>
    %11 = vector.shape_cast %8 : vector<4x64xbf16> to vector<1x4x64xbf16>
    tpu.vector_store %arg5[%c0_6, %c0_7, %c0_8], %11 {strides = array<i32>} : memref<1x4x64xbf16, #tpu.memory_space<vmem>>, vector<1x4x64xbf16>,
    return
  }
  func.func @transform_0(%arg0: i32, %arg1: i32) -> (i32, i32, i32) {
    %c0_i32 = arith.constant 0 : i32
    %c0_i32_0 = arith.constant 0 : i32
    return %arg0, %c0_i32, %arg1 : i32, i32, i32
  }
  func.func @transform_1(%arg0: i32, %arg1: i32) -> (i32, i32) {
    %c0_i32 = arith.constant 0 : i32
    %c0_i32_0 = arith.constant 0 : i32
    %c0_i32_1 = arith.constant 0 : i32
    return %c0_i32, %c0_i32_0 : i32, i32
  }
  func.func @transform_2(%arg0: i32, %arg1: i32) -> (i32, i32) {
    %c0_i32 = arith.constant 0 : i32
    %c0_i32_0 = arith.constant 0 : i32
    %c0_i32_1 = arith.constant 0 : i32
    return %c0_i32, %c0_i32_0 : i32, i32
  }
  func.func @transform_3(%arg0: i32, %arg1: i32) -> (i32, i32, i32) {
    %c0_i32 = arith.constant 0 : i32
    %c0_i32_0 = arith.constant 0 : i32
    return %arg0, %c0_i32, %arg1 : i32, i32, i32
  }
}

module attributes {stable_mosaic.version = 11 : i64} {
  func.func @_front_kernel(%arg0: i32, %arg1: memref<1x4x8x8xbf16, #tpu.memory_space<vmem>>, %arg2: memref<16x8xbf16, #tpu.memory_space<vmem>>, %arg3: memref<8x16xbf16, #tpu.memory_space<vmem>>, %arg4: memref<4x16xbf16, #tpu.memory_space<vmem>>, %arg5: memref<16x4xbf16, #tpu.memory_space<vmem>>, %arg6: memref<1x4x16x16xf32, #tpu.memory_space<vmem>>, %arg7: memref<1x4x4x4xf32, #tpu.memory_space<vmem>>) attributes {dimension_semantics = [#tpu.dimension_semantics<parallel>], iteration_bounds = array<i64: 2>, scalar_prefetch = 0 : i64, scratch_operands = 0 : i64, tpu.core_type = #tpu.core_type<tc>, window_params = [{transform_indices = @transform_0, window_bounds = array<i64: 1, 4, 8, 8>}, {pipeline_mode = #tpu.pipeline_mode<synchronous>, transform_indices = @transform_1, window_bounds = array<i64: 16, 8>}, {pipeline_mode = #tpu.pipeline_mode<synchronous>, transform_indices = @transform_2, window_bounds = array<i64: 8, 16>}, {pipeline_mode = #tpu.pipeline_mode<synchronous>, transform_indices = @transform_3, window_bounds = array<i64: 4, 16>}, {pipeline_mode = #tpu.pipeline_mode<synchronous>, transform_indices = @transform_4, window_bounds = array<i64: 16, 4>}, {transform_indices = @transform_5, window_bounds = array<i64: 1, 4, 16, 16>}, {transform_indices = @transform_6, window_bounds = array<i64: 1, 4, 4, 4>}]} {
    %c0 = arith.constant 0 : index
    %c0_0 = arith.constant 0 : index
    %0 = vector.load %arg2[%c0, %c0_0] : memref<16x8xbf16, #tpu.memory_space<vmem>>, vector<16x8xbf16>
    %c0_1 = arith.constant 0 : index
    %c0_2 = arith.constant 0 : index
    %1 = vector.load %arg3[%c0_1, %c0_2] : memref<8x16xbf16, #tpu.memory_space<vmem>>, vector<8x16xbf16>
    %c0_3 = arith.constant 0 : index
    %c0_4 = arith.constant 0 : index
    %2 = vector.load %arg4[%c0_3, %c0_4] : memref<4x16xbf16, #tpu.memory_space<vmem>>, vector<4x16xbf16>
    %c0_5 = arith.constant 0 : index
    %c0_6 = arith.constant 0 : index
    %3 = vector.load %arg5[%c0_5, %c0_6] : memref<16x4xbf16, #tpu.memory_space<vmem>>, vector<16x4xbf16>
    %c0_7 = arith.constant 0 : index
    %c0_8 = arith.constant 0 : index
    %c0_9 = arith.constant 0 : index
    %c0_10 = arith.constant 0 : index
    %4 = vector.load %arg1[%c0_7, %c0_8, %c0_9, %c0_10] : memref<1x4x8x8xbf16, #tpu.memory_space<vmem>>, vector<1x1x8x8xbf16>
    %5 = vector.shape_cast %4 : vector<1x1x8x8xbf16> to vector<8x8xbf16>
    %cst = arith.constant dense<0.000000e+00> : vector<8x16xf32>
    %6 = tpu.matmul %5, %1, %cst {dimension_numbers = #tpu.dot_dimension_numbers<[1], [0], [0], [1], [0, 0, 1, 1], [], []>} : vector<8x8xbf16>, vector<8x16xbf16>, vector<8x16xf32> -> vector<8x16xf32>
    %7 = arith.truncf %6 : vector<8x16xf32> to vector<8x16xbf16>
    %cst_11 = arith.constant dense<0.000000e+00> : vector<16x16xf32>
    %8 = tpu.matmul %0, %7, %cst_11 {dimension_numbers = #tpu.dot_dimension_numbers<[1], [0], [0], [1], [0, 0, 1, 1], [], []>} : vector<16x8xbf16>, vector<8x16xbf16>, vector<16x16xf32> -> vector<16x16xf32>
    %c0_12 = arith.constant 0 : index
    %c0_13 = arith.constant 0 : index
    %c0_14 = arith.constant 0 : index
    %c0_15 = arith.constant 0 : index
    %9 = vector.load %arg6[%c0_12, %c0_13, %c0_14, %c0_15] : memref<1x4x16x16xf32, #tpu.memory_space<vmem>>, vector<1x1x16x16xf32>
    %10 = vector.shape_cast %9 : vector<1x1x16x16xf32> to vector<16x16xf32>
    %11 = vector.shape_cast %8 : vector<16x16xf32> to vector<1x1x16x16xf32>
    tpu.vector_store %arg6[%c0_12, %c0_13, %c0_14, %c0_15], %11 {strides = array<i32>} : memref<1x4x16x16xf32, #tpu.memory_space<vmem>>, vector<1x1x16x16xf32>,
    %c0_16 = arith.constant 0 : index
    %c1 = arith.constant 1 : index
    %c0_17 = arith.constant 0 : index
    %c0_18 = arith.constant 0 : index
    %12 = vector.load %arg1[%c0_16, %c1, %c0_17, %c0_18] : memref<1x4x8x8xbf16, #tpu.memory_space<vmem>>, vector<1x1x8x8xbf16>
    %13 = vector.shape_cast %12 : vector<1x1x8x8xbf16> to vector<8x8xbf16>
    %cst_19 = arith.constant dense<0.000000e+00> : vector<8x16xf32>
    %14 = tpu.matmul %13, %1, %cst_19 {dimension_numbers = #tpu.dot_dimension_numbers<[1], [0], [0], [1], [0, 0, 1, 1], [], []>} : vector<8x8xbf16>, vector<8x16xbf16>, vector<8x16xf32> -> vector<8x16xf32>
    %15 = arith.truncf %14 : vector<8x16xf32> to vector<8x16xbf16>
    %cst_20 = arith.constant dense<0.000000e+00> : vector<16x16xf32>
    %16 = tpu.matmul %0, %15, %cst_20 {dimension_numbers = #tpu.dot_dimension_numbers<[1], [0], [0], [1], [0, 0, 1, 1], [], []>} : vector<16x8xbf16>, vector<8x16xbf16>, vector<16x16xf32> -> vector<16x16xf32>
    %c0_21 = arith.constant 0 : index
    %c1_22 = arith.constant 1 : index
    %c0_23 = arith.constant 0 : index
    %c0_24 = arith.constant 0 : index
    %17 = vector.load %arg6[%c0_21, %c1_22, %c0_23, %c0_24] : memref<1x4x16x16xf32, #tpu.memory_space<vmem>>, vector<1x1x16x16xf32>
    %18 = vector.shape_cast %17 : vector<1x1x16x16xf32> to vector<16x16xf32>
    %19 = vector.shape_cast %16 : vector<16x16xf32> to vector<1x1x16x16xf32>
    tpu.vector_store %arg6[%c0_21, %c1_22, %c0_23, %c0_24], %19 {strides = array<i32>} : memref<1x4x16x16xf32, #tpu.memory_space<vmem>>, vector<1x1x16x16xf32>,
    %c0_25 = arith.constant 0 : index
    %c2 = arith.constant 2 : index
    %c0_26 = arith.constant 0 : index
    %c0_27 = arith.constant 0 : index
    %20 = vector.load %arg1[%c0_25, %c2, %c0_26, %c0_27] : memref<1x4x8x8xbf16, #tpu.memory_space<vmem>>, vector<1x1x8x8xbf16>
    %21 = vector.shape_cast %20 : vector<1x1x8x8xbf16> to vector<8x8xbf16>
    %cst_28 = arith.constant dense<0.000000e+00> : vector<8x16xf32>
    %22 = tpu.matmul %21, %1, %cst_28 {dimension_numbers = #tpu.dot_dimension_numbers<[1], [0], [0], [1], [0, 0, 1, 1], [], []>} : vector<8x8xbf16>, vector<8x16xbf16>, vector<8x16xf32> -> vector<8x16xf32>
    %23 = arith.truncf %22 : vector<8x16xf32> to vector<8x16xbf16>
    %cst_29 = arith.constant dense<0.000000e+00> : vector<16x16xf32>
    %24 = tpu.matmul %0, %23, %cst_29 {dimension_numbers = #tpu.dot_dimension_numbers<[1], [0], [0], [1], [0, 0, 1, 1], [], []>} : vector<16x8xbf16>, vector<8x16xbf16>, vector<16x16xf32> -> vector<16x16xf32>
    %c0_30 = arith.constant 0 : index
    %c2_31 = arith.constant 2 : index
    %c0_32 = arith.constant 0 : index
    %c0_33 = arith.constant 0 : index
    %25 = vector.load %arg6[%c0_30, %c2_31, %c0_32, %c0_33] : memref<1x4x16x16xf32, #tpu.memory_space<vmem>>, vector<1x1x16x16xf32>
    %26 = vector.shape_cast %25 : vector<1x1x16x16xf32> to vector<16x16xf32>
    %27 = vector.shape_cast %24 : vector<16x16xf32> to vector<1x1x16x16xf32>
    tpu.vector_store %arg6[%c0_30, %c2_31, %c0_32, %c0_33], %27 {strides = array<i32>} : memref<1x4x16x16xf32, #tpu.memory_space<vmem>>, vector<1x1x16x16xf32>,
    %c0_34 = arith.constant 0 : index
    %c3 = arith.constant 3 : index
    %c0_35 = arith.constant 0 : index
    %c0_36 = arith.constant 0 : index
    %28 = vector.load %arg1[%c0_34, %c3, %c0_35, %c0_36] : memref<1x4x8x8xbf16, #tpu.memory_space<vmem>>, vector<1x1x8x8xbf16>
    %29 = vector.shape_cast %28 : vector<1x1x8x8xbf16> to vector<8x8xbf16>
    %cst_37 = arith.constant dense<0.000000e+00> : vector<8x16xf32>
    %30 = tpu.matmul %29, %1, %cst_37 {dimension_numbers = #tpu.dot_dimension_numbers<[1], [0], [0], [1], [0, 0, 1, 1], [], []>} : vector<8x8xbf16>, vector<8x16xbf16>, vector<8x16xf32> -> vector<8x16xf32>
    %31 = arith.truncf %30 : vector<8x16xf32> to vector<8x16xbf16>
    %cst_38 = arith.constant dense<0.000000e+00> : vector<16x16xf32>
    %32 = tpu.matmul %0, %31, %cst_38 {dimension_numbers = #tpu.dot_dimension_numbers<[1], [0], [0], [1], [0, 0, 1, 1], [], []>} : vector<16x8xbf16>, vector<8x16xbf16>, vector<16x16xf32> -> vector<16x16xf32>
    %c0_39 = arith.constant 0 : index
    %c3_40 = arith.constant 3 : index
    %c0_41 = arith.constant 0 : index
    %c0_42 = arith.constant 0 : index
    %33 = vector.load %arg6[%c0_39, %c3_40, %c0_41, %c0_42] : memref<1x4x16x16xf32, #tpu.memory_space<vmem>>, vector<1x1x16x16xf32>
    %34 = vector.shape_cast %33 : vector<1x1x16x16xf32> to vector<16x16xf32>
    %35 = vector.shape_cast %32 : vector<16x16xf32> to vector<1x1x16x16xf32>
    tpu.vector_store %arg6[%c0_39, %c3_40, %c0_41, %c0_42], %35 {strides = array<i32>} : memref<1x4x16x16xf32, #tpu.memory_space<vmem>>, vector<1x1x16x16xf32>,
    %36 = arith.maximumf %8, %16 : vector<16x16xf32>
    %37 = arith.maximumf %36, %24 : vector<16x16xf32>
    %38 = arith.maximumf %37, %32 : vector<16x16xf32>
    %false = arith.constant false
    %39 = vector.broadcast %false : i1 to vector<16x16xi1>
    %40 = arith.cmpf oeq, %8, %38 : vector<16x16xf32>
    %cst_43 = arith.constant dense<true> : vector<16x16xi1>
    %41 = arith.xori %39, %cst_43 : vector<16x16xi1>
    %42 = arith.andi %40, %41 : vector<16x16xi1>
    %43 = arith.ori %39, %42 : vector<16x16xi1>
    %cst_44 = arith.constant 1.000000e+00 : f32
    %cst_45 = arith.constant 0.000000e+00 : f32
    %44 = vector.broadcast %cst_44 : f32 to vector<16x16xf32>
    %45 = vector.broadcast %cst_45 : f32 to vector<16x16xf32>
    %46 = arith.select %42, %44, %45 : vector<16x16xi1>, vector<16x16xf32>
    %47 = arith.truncf %46 : vector<16x16xf32> to vector<16x16xbf16>
    %cst_46 = arith.constant dense<0.000000e+00> : vector<16x4xf32>
    %48 = tpu.matmul %47, %3, %cst_46 {dimension_numbers = #tpu.dot_dimension_numbers<[1], [0], [0], [1], [0, 0, 1, 1], [], []>} : vector<16x16xbf16>, vector<16x4xbf16>, vector<16x4xf32> -> vector<16x4xf32>
    %49 = arith.truncf %48 : vector<16x4xf32> to vector<16x4xbf16>
    %cst_47 = arith.constant dense<0.000000e+00> : vector<4x4xf32>
    %50 = tpu.matmul %2, %49, %cst_47 {dimension_numbers = #tpu.dot_dimension_numbers<[1], [0], [0], [1], [0, 0, 1, 1], [], []>} : vector<4x16xbf16>, vector<16x4xbf16>, vector<4x4xf32> -> vector<4x4xf32>
    %c0_48 = arith.constant 0 : index
    %c0_49 = arith.constant 0 : index
    %c0_50 = arith.constant 0 : index
    %c0_51 = arith.constant 0 : index
    %51 = vector.load %arg7[%c0_48, %c0_49, %c0_50, %c0_51] : memref<1x4x4x4xf32, #tpu.memory_space<vmem>>, vector<1x1x4x4xf32>
    %52 = vector.shape_cast %51 : vector<1x1x4x4xf32> to vector<4x4xf32>
    %53 = vector.shape_cast %50 : vector<4x4xf32> to vector<1x1x4x4xf32>
    tpu.vector_store %arg7[%c0_48, %c0_49, %c0_50, %c0_51], %53 {strides = array<i32>} : memref<1x4x4x4xf32, #tpu.memory_space<vmem>>, vector<1x1x4x4xf32>,
    %54 = arith.cmpf oeq, %16, %38 : vector<16x16xf32>
    %cst_52 = arith.constant dense<true> : vector<16x16xi1>
    %55 = arith.xori %43, %cst_52 : vector<16x16xi1>
    %56 = arith.andi %54, %55 : vector<16x16xi1>
    %57 = arith.ori %43, %56 : vector<16x16xi1>
    %cst_53 = arith.constant 1.000000e+00 : f32
    %cst_54 = arith.constant 0.000000e+00 : f32
    %58 = vector.broadcast %cst_53 : f32 to vector<16x16xf32>
    %59 = vector.broadcast %cst_54 : f32 to vector<16x16xf32>
    %60 = arith.select %56, %58, %59 : vector<16x16xi1>, vector<16x16xf32>
    %61 = arith.truncf %60 : vector<16x16xf32> to vector<16x16xbf16>
    %cst_55 = arith.constant dense<0.000000e+00> : vector<16x4xf32>
    %62 = tpu.matmul %61, %3, %cst_55 {dimension_numbers = #tpu.dot_dimension_numbers<[1], [0], [0], [1], [0, 0, 1, 1], [], []>} : vector<16x16xbf16>, vector<16x4xbf16>, vector<16x4xf32> -> vector<16x4xf32>
    %63 = arith.truncf %62 : vector<16x4xf32> to vector<16x4xbf16>
    %cst_56 = arith.constant dense<0.000000e+00> : vector<4x4xf32>
    %64 = tpu.matmul %2, %63, %cst_56 {dimension_numbers = #tpu.dot_dimension_numbers<[1], [0], [0], [1], [0, 0, 1, 1], [], []>} : vector<4x16xbf16>, vector<16x4xbf16>, vector<4x4xf32> -> vector<4x4xf32>
    %c0_57 = arith.constant 0 : index
    %c1_58 = arith.constant 1 : index
    %c0_59 = arith.constant 0 : index
    %c0_60 = arith.constant 0 : index
    %65 = vector.load %arg7[%c0_57, %c1_58, %c0_59, %c0_60] : memref<1x4x4x4xf32, #tpu.memory_space<vmem>>, vector<1x1x4x4xf32>
    %66 = vector.shape_cast %65 : vector<1x1x4x4xf32> to vector<4x4xf32>
    %67 = vector.shape_cast %64 : vector<4x4xf32> to vector<1x1x4x4xf32>
    tpu.vector_store %arg7[%c0_57, %c1_58, %c0_59, %c0_60], %67 {strides = array<i32>} : memref<1x4x4x4xf32, #tpu.memory_space<vmem>>, vector<1x1x4x4xf32>,
    %68 = arith.cmpf oeq, %24, %38 : vector<16x16xf32>
    %cst_61 = arith.constant dense<true> : vector<16x16xi1>
    %69 = arith.xori %57, %cst_61 : vector<16x16xi1>
    %70 = arith.andi %68, %69 : vector<16x16xi1>
    %71 = arith.ori %57, %70 : vector<16x16xi1>
    %cst_62 = arith.constant 1.000000e+00 : f32
    %cst_63 = arith.constant 0.000000e+00 : f32
    %72 = vector.broadcast %cst_62 : f32 to vector<16x16xf32>
    %73 = vector.broadcast %cst_63 : f32 to vector<16x16xf32>
    %74 = arith.select %70, %72, %73 : vector<16x16xi1>, vector<16x16xf32>
    %75 = arith.truncf %74 : vector<16x16xf32> to vector<16x16xbf16>
    %cst_64 = arith.constant dense<0.000000e+00> : vector<16x4xf32>
    %76 = tpu.matmul %75, %3, %cst_64 {dimension_numbers = #tpu.dot_dimension_numbers<[1], [0], [0], [1], [0, 0, 1, 1], [], []>} : vector<16x16xbf16>, vector<16x4xbf16>, vector<16x4xf32> -> vector<16x4xf32>
    %77 = arith.truncf %76 : vector<16x4xf32> to vector<16x4xbf16>
    %cst_65 = arith.constant dense<0.000000e+00> : vector<4x4xf32>
    %78 = tpu.matmul %2, %77, %cst_65 {dimension_numbers = #tpu.dot_dimension_numbers<[1], [0], [0], [1], [0, 0, 1, 1], [], []>} : vector<4x16xbf16>, vector<16x4xbf16>, vector<4x4xf32> -> vector<4x4xf32>
    %c0_66 = arith.constant 0 : index
    %c2_67 = arith.constant 2 : index
    %c0_68 = arith.constant 0 : index
    %c0_69 = arith.constant 0 : index
    %79 = vector.load %arg7[%c0_66, %c2_67, %c0_68, %c0_69] : memref<1x4x4x4xf32, #tpu.memory_space<vmem>>, vector<1x1x4x4xf32>
    %80 = vector.shape_cast %79 : vector<1x1x4x4xf32> to vector<4x4xf32>
    %81 = vector.shape_cast %78 : vector<4x4xf32> to vector<1x1x4x4xf32>
    tpu.vector_store %arg7[%c0_66, %c2_67, %c0_68, %c0_69], %81 {strides = array<i32>} : memref<1x4x4x4xf32, #tpu.memory_space<vmem>>, vector<1x1x4x4xf32>,
    %82 = arith.cmpf oeq, %32, %38 : vector<16x16xf32>
    %cst_70 = arith.constant dense<true> : vector<16x16xi1>
    %83 = arith.xori %71, %cst_70 : vector<16x16xi1>
    %84 = arith.andi %82, %83 : vector<16x16xi1>
    %cst_71 = arith.constant 1.000000e+00 : f32
    %cst_72 = arith.constant 0.000000e+00 : f32
    %85 = vector.broadcast %cst_71 : f32 to vector<16x16xf32>
    %86 = vector.broadcast %cst_72 : f32 to vector<16x16xf32>
    %87 = arith.select %84, %85, %86 : vector<16x16xi1>, vector<16x16xf32>
    %88 = arith.truncf %87 : vector<16x16xf32> to vector<16x16xbf16>
    %cst_73 = arith.constant dense<0.000000e+00> : vector<16x4xf32>
    %89 = tpu.matmul %88, %3, %cst_73 {dimension_numbers = #tpu.dot_dimension_numbers<[1], [0], [0], [1], [0, 0, 1, 1], [], []>} : vector<16x16xbf16>, vector<16x4xbf16>, vector<16x4xf32> -> vector<16x4xf32>
    %90 = arith.truncf %89 : vector<16x4xf32> to vector<16x4xbf16>
    %cst_74 = arith.constant dense<0.000000e+00> : vector<4x4xf32>
    %91 = tpu.matmul %2, %90, %cst_74 {dimension_numbers = #tpu.dot_dimension_numbers<[1], [0], [0], [1], [0, 0, 1, 1], [], []>} : vector<4x16xbf16>, vector<16x4xbf16>, vector<4x4xf32> -> vector<4x4xf32>
    %c0_75 = arith.constant 0 : index
    %c3_76 = arith.constant 3 : index
    %c0_77 = arith.constant 0 : index
    %c0_78 = arith.constant 0 : index
    %92 = vector.load %arg7[%c0_75, %c3_76, %c0_77, %c0_78] : memref<1x4x4x4xf32, #tpu.memory_space<vmem>>, vector<1x1x4x4xf32>
    %93 = vector.shape_cast %92 : vector<1x1x4x4xf32> to vector<4x4xf32>
    %94 = vector.shape_cast %91 : vector<4x4xf32> to vector<1x1x4x4xf32>
    tpu.vector_store %arg7[%c0_75, %c3_76, %c0_77, %c0_78], %94 {strides = array<i32>} : memref<1x4x4x4xf32, #tpu.memory_space<vmem>>, vector<1x1x4x4xf32>,
    return
  }
  func.func @transform_0(%arg0: i32) -> (i32, i32, i32, i32) {
    %c0_i32 = arith.constant 0 : i32
    %c0_i32_0 = arith.constant 0 : i32
    %c0_i32_1 = arith.constant 0 : i32
    %c0_i32_2 = arith.constant 0 : i32
    return %arg0, %c0_i32, %c0_i32_0, %c0_i32_1 : i32, i32, i32, i32
  }
  func.func @transform_1(%arg0: i32) -> (i32, i32) {
    %c0_i32 = arith.constant 0 : i32
    %c0_i32_0 = arith.constant 0 : i32
    %c0_i32_1 = arith.constant 0 : i32
    return %c0_i32, %c0_i32_0 : i32, i32
  }
  func.func @transform_2(%arg0: i32) -> (i32, i32) {
    %c0_i32 = arith.constant 0 : i32
    %c0_i32_0 = arith.constant 0 : i32
    %c0_i32_1 = arith.constant 0 : i32
    return %c0_i32, %c0_i32_0 : i32, i32
  }
  func.func @transform_3(%arg0: i32) -> (i32, i32) {
    %c0_i32 = arith.constant 0 : i32
    %c0_i32_0 = arith.constant 0 : i32
    %c0_i32_1 = arith.constant 0 : i32
    return %c0_i32, %c0_i32_0 : i32, i32
  }
  func.func @transform_4(%arg0: i32) -> (i32, i32) {
    %c0_i32 = arith.constant 0 : i32
    %c0_i32_0 = arith.constant 0 : i32
    %c0_i32_1 = arith.constant 0 : i32
    return %c0_i32, %c0_i32_0 : i32, i32
  }
  func.func @transform_5(%arg0: i32) -> (i32, i32, i32, i32) {
    %c0_i32 = arith.constant 0 : i32
    %c0_i32_0 = arith.constant 0 : i32
    %c0_i32_1 = arith.constant 0 : i32
    %c0_i32_2 = arith.constant 0 : i32
    return %arg0, %c0_i32, %c0_i32_0, %c0_i32_1 : i32, i32, i32, i32
  }
  func.func @transform_6(%arg0: i32) -> (i32, i32, i32, i32) {
    %c0_i32 = arith.constant 0 : i32
    %c0_i32_0 = arith.constant 0 : i32
    %c0_i32_1 = arith.constant 0 : i32
    %c0_i32_2 = arith.constant 0 : i32
    return %arg0, %c0_i32, %c0_i32_0, %c0_i32_1 : i32, i32, i32, i32
  }
}

module attributes {stable_mosaic.version = 11 : i64} {
  func.func @_attn_kernel(%arg0: i32, %arg1: memref<1x4x64x4xf32, #tpu.memory_space<vmem>>, %arg2: memref<1x4x4x4xf32, #tpu.memory_space<vmem>>, %arg3: memref<1x4x64x4xf32, #tpu.memory_space<vmem>>) attributes {dimension_semantics = [#tpu.dimension_semantics<parallel>], iteration_bounds = array<i64: 2>, scalar_prefetch = 0 : i64, scratch_operands = 0 : i64, tpu.core_type = #tpu.core_type<tc>, window_params = [{transform_indices = @transform_0, window_bounds = array<i64: 1, 4, 64, 4>}, {transform_indices = @transform_1, window_bounds = array<i64: 1, 4, 4, 4>}, {transform_indices = @transform_2, window_bounds = array<i64: 1, 4, 64, 4>}]} {
    %c0 = arith.constant 0 : index
    %c0_0 = arith.constant 0 : index
    %c0_1 = arith.constant 0 : index
    %c0_2 = arith.constant 0 : index
    %0 = vector.load %arg1[%c0, %c0_0, %c0_1, %c0_2] : memref<1x4x64x4xf32, #tpu.memory_space<vmem>>, vector<1x4x64x4xf32>
    %1 = vector.shape_cast %0 : vector<1x4x64x4xf32> to vector<4x64x4xf32>
    %cst = arith.constant 0.000000e+00 : f32
    %2 = vector.broadcast %cst : f32 to vector<4x64x4xf32>
    %3 = arith.cmpf one, %1, %2 : vector<4x64x4xf32>
    %cst_3 = arith.constant 1.000000e+00 : f32
    %cst_4 = arith.constant 0.000000e+00 : f32
    %4 = vector.broadcast %cst_3 : f32 to vector<4x64x4xf32>
    %5 = vector.broadcast %cst_4 : f32 to vector<4x64x4xf32>
    %6 = arith.select %3, %4, %5 : vector<4x64x4xi1>, vector<4x64x4xf32>
    %cst_5 = arith.constant dense<0.000000e+00> : vector<4x64xf32>
    %7 = vector.multi_reduction <add>, %6, %cst_5 [2] : vector<4x64x4xf32> to vector<4x64xf32>
    %8 = vector.shape_cast %7 : vector<4x64xf32> to vector<4x64x1xf32>
    %cst_6 = arith.constant 9.99999974E-6 : f32
    %9 = vector.broadcast %cst_6 : f32 to vector<4x64x1xf32>
    %10 = arith.addf %8, %9 : vector<4x64x1xf32>
    %11 = tpu.reciprocal %10 {approx = true} : vector<4x64x1xf32> -> vector<4x64x1xf32>
    %12 = vector.broadcast %11 : vector<4x64x1xf32> to vector<4x64x4xf32>
    %13 = arith.mulf %1, %12 : vector<4x64x4xf32>
    %c0_7 = arith.constant 0 : index
    %c0_8 = arith.constant 0 : index
    %c0_9 = arith.constant 0 : index
    %c0_10 = arith.constant 0 : index
    %14 = vector.load %arg2[%c0_7, %c0_8, %c0_9, %c0_10] : memref<1x4x4x4xf32, #tpu.memory_space<vmem>>, vector<1x4x4x4xf32>
    %15 = vector.shape_cast %14 : vector<1x4x4x4xf32> to vector<4x4x4xf32>
    %cst_11 = arith.constant dense<0.000000e+00> : vector<4x64x4xf32>
    %16 = tpu.matmul %13, %15, %cst_11 {dimension_numbers = #tpu.dot_dimension_numbers<[2], [2], [1], [1], [0, 0, 0, 1, 1, 1], [0], [0]>} : vector<4x64x4xf32>, vector<4x4x4xf32>, vector<4x64x4xf32> -> vector<4x64x4xf32>
    %c0_12 = arith.constant 0 : index
    %c0_13 = arith.constant 0 : index
    %c0_14 = arith.constant 0 : index
    %c0_15 = arith.constant 0 : index
    %17 = vector.load %arg3[%c0_12, %c0_13, %c0_14, %c0_15] : memref<1x4x64x4xf32, #tpu.memory_space<vmem>>, vector<1x4x64x4xf32>
    %18 = vector.shape_cast %17 : vector<1x4x64x4xf32> to vector<4x64x4xf32>
    %19 = vector.shape_cast %16 : vector<4x64x4xf32> to vector<1x4x64x4xf32>
    tpu.vector_store %arg3[%c0_12, %c0_13, %c0_14, %c0_15], %19 {strides = array<i32>} : memref<1x4x64x4xf32, #tpu.memory_space<vmem>>, vector<1x4x64x4xf32>,
    return
  }
  func.func @transform_0(%arg0: i32) -> (i32, i32, i32, i32) {
    %c0_i32 = arith.constant 0 : i32
    %c0_i32_0 = arith.constant 0 : i32
    %c0_i32_1 = arith.constant 0 : i32
    %c0_i32_2 = arith.constant 0 : i32
    return %arg0, %c0_i32, %c0_i32_0, %c0_i32_1 : i32, i32, i32, i32
  }
  func.func @transform_1(%arg0: i32) -> (i32, i32, i32, i32) {
    %c0_i32 = arith.constant 0 : i32
    %c0_i32_0 = arith.constant 0 : i32
    %c0_i32_1 = arith.constant 0 : i32
    %c0_i32_2 = arith.constant 0 : i32
    return %arg0, %c0_i32, %c0_i32_0, %c0_i32_1 : i32, i32, i32, i32
  }
  func.func @transform_2(%arg0: i32) -> (i32, i32, i32, i32) {
    %c0_i32 = arith.constant 0 : i32
    %c0_i32_0 = arith.constant 0 : i32
    %c0_i32_1 = arith.constant 0 : i32
    %c0_i32_2 = arith.constant 0 : i32
    return %arg0, %c0_i32, %c0_i32_0, %c0_i32_1 : i32, i32, i32, i32
  }
}

module attributes {stable_mosaic.version = 11 : i64} {
  func.func @_final_kernel(%arg0: i32, %arg1: i32, %arg2: memref<1x4x2x128xf32, #tpu.memory_space<vmem>>, %arg3: memref<1x4x2x128xf32, #tpu.memory_space<vmem>>, %arg4: memref<1x4x2x128xf32, #tpu.memory_space<vmem>>) attributes {dimension_semantics = [#tpu.dimension_semantics<parallel>, #tpu.dimension_semantics<parallel>], iteration_bounds = array<i64: 2, 1>, scalar_prefetch = 0 : i64, scratch_operands = 0 : i64, tpu.core_type = #tpu.core_type<tc>, window_params = [{transform_indices = @transform_0, window_bounds = array<i64: 1, 4, 2, 128>}, {transform_indices = @transform_1, window_bounds = array<i64: 1, 4, 2, 128>}, {transform_indices = @transform_2, window_bounds = array<i64: 1, 4, 2, 128>}]} {
    %c0 = arith.constant 0 : index
    %c0_0 = arith.constant 0 : index
    %c0_1 = arith.constant 0 : index
    %c0_2 = arith.constant 0 : index
    %0 = vector.load %arg3[%c0, %c0_0, %c0_1, %c0_2] : memref<1x4x2x128xf32, #tpu.memory_space<vmem>>, vector<1x4x2x128xf32>
    %1 = vector.shape_cast %0 : vector<1x4x2x128xf32> to vector<4x2x128xf32>
    %cst = arith.constant 1.000000e+00 : f32
    %2 = vector.broadcast %cst : f32 to vector<4x2x128xf32>
    %3 = arith.addf %1, %2 : vector<4x2x128xf32>
    %c0_3 = arith.constant 0 : index
    %c0_4 = arith.constant 0 : index
    %c0_5 = arith.constant 0 : index
    %c0_6 = arith.constant 0 : index
    %4 = vector.load %arg2[%c0_3, %c0_4, %c0_5, %c0_6] : memref<1x4x2x128xf32, #tpu.memory_space<vmem>>, vector<1x4x2x128xf32>
    %5 = vector.shape_cast %4 : vector<1x4x2x128xf32> to vector<4x2x128xf32>
    %6 = arith.mulf %3, %5 : vector<4x2x128xf32>
    %cst_7 = arith.constant dense<0xFF800000> : vector<2x128xf32>
    %7 = vector.multi_reduction <maximumf>, %6, %cst_7 [0] : vector<4x2x128xf32> to vector<2x128xf32>
    %8 = vector.shape_cast %7 : vector<2x128xf32> to vector<1x2x128xf32>
    %9 = vector.broadcast %8 : vector<1x2x128xf32> to vector<4x2x128xf32>
    %10 = arith.subf %6, %9 : vector<4x2x128xf32>
    %11 = math.exp %10 : vector<4x2x128xf32>
    %cst_8 = arith.constant dense<0.000000e+00> : vector<2x128xf32>
    %12 = vector.multi_reduction <add>, %11, %cst_8 [0] : vector<4x2x128xf32> to vector<2x128xf32>
    %13 = vector.shape_cast %12 : vector<2x128xf32> to vector<1x2x128xf32>
    %14 = math.log %13 : vector<1x2x128xf32>
    %15 = arith.addf %8, %14 : vector<1x2x128xf32>
    %16 = vector.broadcast %15 : vector<1x2x128xf32> to vector<4x2x128xf32>
    %17 = arith.subf %6, %16 : vector<4x2x128xf32>
    %c0_9 = arith.constant 0 : index
    %c0_10 = arith.constant 0 : index
    %c0_11 = arith.constant 0 : index
    %c0_12 = arith.constant 0 : index
    %18 = vector.load %arg4[%c0_9, %c0_10, %c0_11, %c0_12] : memref<1x4x2x128xf32, #tpu.memory_space<vmem>>, vector<1x4x2x128xf32>
    %19 = vector.shape_cast %18 : vector<1x4x2x128xf32> to vector<4x2x128xf32>
    %20 = vector.shape_cast %17 : vector<4x2x128xf32> to vector<1x4x2x128xf32>
    tpu.vector_store %arg4[%c0_9, %c0_10, %c0_11, %c0_12], %20 {strides = array<i32>} : memref<1x4x2x128xf32, #tpu.memory_space<vmem>>, vector<1x4x2x128xf32>,
    return
  }
  func.func @transform_0(%arg0: i32, %arg1: i32) -> (i32, i32, i32, i32) {
    %c0_i32 = arith.constant 0 : i32
    %c0_i32_0 = arith.constant 0 : i32
    %c0_i32_1 = arith.constant 0 : i32
    return %arg0, %c0_i32, %arg1, %c0_i32_0 : i32, i32, i32, i32
  }
  func.func @transform_1(%arg0: i32, %arg1: i32) -> (i32, i32, i32, i32) {
    %c0_i32 = arith.constant 0 : i32
    %c0_i32_0 = arith.constant 0 : i32
    %c0_i32_1 = arith.constant 0 : i32
    return %arg0, %c0_i32, %arg1, %c0_i32_0 : i32, i32, i32, i32
  }
  func.func @transform_2(%arg0: i32, %arg1: i32) -> (i32, i32, i32, i32) {
    %c0_i32 = arith.constant 0 : i32
    %c0_i32_0 = arith.constant 0 : i32
    %c0_i32_1 = arith.constant 0 : i32
    return %arg0, %c0_i32, %arg1, %c0_i32_0 : i32, i32, i32, i32
  }
}

</mosaic_0001>

<llo_original>
// kernel: context_seg_forward.4
$region0: #{context_seg_forward.4}
  #allocation0 [shape = 'u32[]', space=smem, size = 0x4, offset = 0x4, fixed_abs, tag = 'smem constant byte address 0x4 - core index']
  #allocation1 [shape = 'u32[144,128]{1,0:T(1,128)}', space=vmem, size = 0x12000, scoped, tag = 'internal scratch']
  %s0 = inlined_call_operand.vmem [shape: f32[2,4,64], index: 0, kind: input, shape index: {}]
  %s1 = inlined_call_operand.vmem [shape: bf16[4,4], index: 1, kind: input, shape index: {}]
  %s2 = inlined_call_operand.vmem [shape: f32[4,1], index: 2, kind: input, shape index: {}]
  %s3 = inlined_call_operand.vmem [shape: bf16[2,4,64], index: 3, kind: output, shape index: {}]
  %s4 = sld [smem:[#allocation0]]
  $region45: #{context_seg_forward.4} parent=0
    _
  %s6 = ssub.s32 1, %s4
  %s7 = scalar_select 0, %s6, %s4
  loop: start=0, step=1, limit=4
  $region2: #{context_seg_forward.4} parent=0 // loop_pre_header
    _
  $region3: #{context_seg_forward.4} parent=0 // loop_header
    %s9 = sphi 0, %s13
    %p10 = scmp.ge.s32.totalorder %s9, 4
    %s16 = sphi 0, %s28
    %s17 = sphi 0, %s24
    %s18 = sphi 0, %s16
    %s19 = sphi 0, %s17
    %s20 = sphi 0, %s18
    %s21 = sphi 0, %s19
    %s33 = sphi 0, %s35
    %s36 = sphi 0, %s33
    %s37 = sphi 0, %s36
    %s53 = sphi 0, %s37
    %s57 = sphi 0, %s57
    %s59 = sphi 0, %s57
    %s60 = sphi 0, %s59
    %s74 = sphi 0, %s60
    %s78 = sphi 0, %s78
    %s80 = sphi 0, %s78
    %s81 = sphi 0, %s80
    %s95 = sphi 0, %s81
    %s103 = sphi 0, %s105
    %s106 = sphi 0, %s103
    %s107 = sphi 0, %s106
    %s123 = sphi 0, %s107
  $region4: #{context_seg_forward.4} parent=0 // loop_header_branch
    %12 = sbr.rel (%p10) target = $region8
  $region5: #{context_seg_forward.4} parent=0 // loop_body
    %s14 = ssub.s32 %s9, 1
    %s15 = ssub.s32 %s9, 2
    %s22 = sadd.s32 1, %s17
    %p23 = scmp.ge.s32.totalorder %s22, 1
    %s24 = scalar_select %p23, 0, %s22
    %s25 = sadd.s32 1, %s16
    %s26 = scalar_select %p23, %s25, %s16
    %p27 = scmp.ge.s32.totalorder %s26, 2
    %s28 = scalar_select %p27, 0, %s26
    %s29 = ssub.s32 %s16, %s28
    %s30 = ssub.s32 %s17, %s24
    %s31 = sor.u32 %s29, %s30
    %p32 = scmp.eq.s32.totalorder %s31, 0
    %s34 = sadd.s32 %s33, 1
    %s35 = scalar_select %p32, %s33, %s34
    %p38 = pneg %p32
    %p39 = scmp.eq.s32.totalorder %s9, 1
    %p40 = por %p38, %p39
    %p41 = scmp.ne.s32.totalorder %s33, %s36
    %p42 = scmp.eq.s32.totalorder %s9, 0
    %p43 = por %p41, %p42
    %p44 = scmp.ne.s32.totalorder %s33, %s36
    %p45 = scmp.eq.s32.totalorder %s14, 1
    %p46 = por %p44, %p45
    %p47 = scmp.ne.s32.totalorder %s36, %s37
    %p48 = scmp.eq.s32.totalorder %s14, 0
    %p49 = por %p47, %p48
    %p50 = scmp.ne.s32.totalorder %s36, %s37
    %p51 = scmp.eq.s32.totalorder %s15, 1
    %p52 = por %p50, %p51
    %p54 = scmp.ne.s32.totalorder %s37, %s53
    %p55 = scmp.eq.s32.totalorder %s15, 0
    %p56 = por %p54, %p55
    %s58 = sadd.s32 %s57, 1
    %p61 = scmp.eq.s32.totalorder %s9, 1
    %p62 = scmp.ne.s32.totalorder %s57, %s59
    %p63 = scmp.eq.s32.totalorder %s9, 0
    %p64 = por %p62, %p63
    %p65 = scmp.ne.s32.totalorder %s57, %s59
    %p66 = scmp.eq.s32.totalorder %s14, 1
    %p67 = por %p65, %p66
    %p68 = scmp.ne.s32.totalorder %s59, %s60
    %p69 = scmp.eq.s32.totalorder %s14, 0
    %p70 = por %p68, %p69
    %p71 = scmp.ne.s32.totalorder %s59, %s60
    %p72 = scmp.eq.s32.totalorder %s15, 1
    %p73 = por %p71, %p72
    %p75 = scmp.ne.s32.totalorder %s60, %s74
    %p76 = scmp.eq.s32.totalorder %s15, 0
    %p77 = por %p75, %p76
    %s79 = sadd.s32 %s78, 1
    %p82 = scmp.eq.s32.totalorder %s9, 1
    %p83 = scmp.ne.s32.totalorder %s78, %s80
    %p84 = scmp.eq.s32.totalorder %s9, 0
    %p85 = por %p83, %p84
    %p86 = scmp.ne.s32.totalorder %s78, %s80
    %p87 = scmp.eq.s32.totalorder %s14, 1
    %p88 = por %p86, %p87
    %p89 = scmp.ne.s32.totalorder %s80, %s81
    %p90 = scmp.eq.s32.totalorder %s14, 0
    %p91 = por %p89, %p90
    %p92 = scmp.ne.s32.totalorder %s80, %s81
    %p93 = scmp.eq.s32.totalorder %s15, 1
    %p94 = por %p92, %p93
    %p96 = scmp.ne.s32.totalorder %s81, %s95
    %p97 = scmp.eq.s32.totalorder %s15, 0
    %p98 = por %p96, %p97
    %s99 = ssub.s32 %s16, %s28
    %s100 = ssub.s32 %s17, %s24
    %s101 = sor.u32 %s99, %s100
    %p102 = scmp.eq.s32.totalorder %s101, 0
    %s104 = sadd.s32 %s103, 1
    %s105 = scalar_select %p102, %s103, %s104
    %p108 = pneg %p102
    %p109 = scmp.eq.s32.totalorder %s9, 1
    %p110 = por %p108, %p109
    %p111 = scmp.ne.s32.totalorder %s103, %s106
    %p112 = scmp.eq.s32.totalorder %s9, 0
    %p113 = por %p111, %p112
    %p114 = scmp.ne.s32.totalorder %s103, %s106
    %p115 = scmp.eq.s32.totalorder %s14, 1
    %p116 = por %p114, %p115
    %p117 = scmp.ne.s32.totalorder %s106, %s107
    %p118 = scmp.eq.s32.totalorder %s14, 0
    %p119 = por %p117, %p118
    %p120 = scmp.ne.s32.totalorder %s106, %s107
    %p121 = scmp.eq.s32.totalorder %s15, 1
    %p122 = por %p120, %p121
    %p124 = scmp.ne.s32.totalorder %s107, %s123
    %p125 = scmp.eq.s32.totalorder %s15, 0
    %p126 = por %p124, %p125
    %p127 = scmp.le.s32.totalorder 1, %s9
    %p128 = scmp.lt.s32.totalorder %s9, 3
    %p129 = pnand %p127, %p128
    %p130 = pneg %p129
    // Predicated region
    $region9: #{context_seg_forward.4} parent=5 // pred_check
      _
    $region10: #{context_seg_forward.4} parent=5 // pred_check_branch
      %132 = sbr.rel (%p129) target = $region12
    $region11: #{context_seg_forward.4} parent=5 // pred_region
      %s133 = ssub.s32 %s9, 1
      // Predicated region
      $region13: #{context_seg_forward.4} parent=11 // pred_check
        %p134 = pneg %p70
      $region14: #{context_seg_forward.4} parent=11 // pred_check_branch
        %136 = sbr.rel (%p134) target = $region16
      $region15: #{context_seg_forward.4} parent=11 // pred_region
        _
      $region16: #{context_seg_forward.4} parent=11 // pred_fallthru
        _
      // Predicated region
      $region17: #{context_seg_forward.4} parent=11 // pred_check
        %p137 = pneg %p91
      $region18: #{context_seg_forward.4} parent=11 // pred_check_branch
        %139 = sbr.rel (%p137) target = $region20
      $region19: #{context_seg_forward.4} parent=11 // pred_region
        _
      $region20: #{context_seg_forward.4} parent=11 // pred_fallthru
        _
    $region12: #{context_seg_forward.4} parent=5 // pred_fallthru
      _
    %p140 = scmp.lt.s32.totalorder %s9, 2
    // Predicated region
    $region21: #{context_seg_forward.4} parent=5 // pred_check
      %p141 = pneg %p140
    $region22: #{context_seg_forward.4} parent=5 // pred_check_branch
      %143 = sbr.rel (%p141) target = $region24
    $region23: #{context_seg_forward.4} parent=5 // pred_region
      // Predicated region
      $region25: #{context_seg_forward.4} parent=23 // pred_check
        %p144 = pneg %p43
      $region26: #{context_seg_forward.4} parent=23 // pred_check_branch
        %146 = sbr.rel (%p144) target = $region28
      $region27: #{context_seg_forward.4} parent=23 // pred_region
        %p147 = scmp.lt.s32.totalorder %s16, 1
        %s148 = scalar_select %p147, %s16, 1
        %p149 = scmp.lt.s32.totalorder %s17, 0
        %s150 = scalar_select %p149, %s17, 0
        %s151 = sadd.s32 %s150, %s148
        %s152 = smul.addr %s151, 4
        %s153 = scalar_lea.vmem %s0, %s152
      $region28: #{context_seg_forward.4} parent=23 // pred_fallthru
        _
    $region24: #{context_seg_forward.4} parent=5 // pred_fallthru
      _
    %p154 = scmp.le.s32.totalorder 1, %s9
    %p155 = scmp.lt.s32.totalorder %s9, 3
    %p156 = pnand %p154, %p155
    %p157 = pneg %p156
    // Predicated region
    $region29: #{context_seg_forward.4} parent=5 // pred_check
      _
    $region30: #{context_seg_forward.4} parent=5 // pred_check_branch
      %159 = sbr.rel (%p156) target = $region32
    $region31: #{context_seg_forward.4} parent=5 // pred_region
      %s160 = ssub.s32 %s9, 1
      %p161 = scmp.lt.s32.totalorder %s18, 1
      %s162 = scalar_select %p161, %s18, 1
      %p163 = scmp.lt.s32.totalorder %s19, 0
      %s164 = scalar_select %p163, %s19, 0
      %s165 = sadd.s32 %s164, %s162
      %s166 = smul.addr %s165, 4
      %s167 = scalar_lea.vmem %s0, %s166
      %p168 = pneg %p49
      %p169 = pneg %p46
      %p170 = pneg %p70
      %p171 = pneg %p67
      %p172 = pneg %p91
      %p173 = pneg %p88
      %p174 = pneg %p119
      %p175 = pneg %p116
      %p176 = scmp.lt.s32.totalorder %s18, 1
      %s177 = scalar_select %p176, %s18, 1
      %p178 = scmp.lt.s32.totalorder %s19, 0
      %s179 = scalar_select %p178, %s19, 0
      %s180 = sadd.s32 %s179, %s177
      %s181 = smul.addr %s180, 2
      %s182 = scalar_lea.vmem %s3, %s181
      %p183 = scmp.lt.s32.totalorder %s18, 1
      %s184 = scalar_select %p183, %s18, 1
      %p185 = scmp.lt.s32.totalorder %s19, 0
      %s186 = scalar_select %p185, %s19, 0
      %s187 = sadd.s32 %s186, %s184
      %s188 = smul.addr %s187, 4
      %s189 = scalar_lea.vmem %s0, %s188
      %p190 = scmp.lt.s32.totalorder %s18, 1
      %s191 = scalar_select %p190, %s18, 1
      %p192 = scmp.lt.s32.totalorder %s19, 0
      %s193 = scalar_select %p192, %s19, 0
      %s194 = sadd.s32 %s193, %s191
      %s195 = smul.addr %s194, 2
      %s196 = scalar_lea.vmem %s3, %s195
      %v198 = vld [vmem:[%s1] sm:$0x3]
      %v199 = vld [vmem:[%s189] sm:$0xf]
      %v200 = vpack.c.bf16 %v199, %v199
      %v201 = vld [vmem:[%s2] sm:$0xf]
      %203 = vset.pattern.permute.xlu0 0
      %204 = vperm.xlu0 %203, %v201
      %v205 = vpop.permute.xlu0 %204
      %vm207 = vcmask 31744
      %v209 = vsel %vm207, %v198, 0
      %vm211 = vcmask 1041408
      %v213 = vsel %vm211, %v200, 0
      %215 = vmatprep.subr.bf16.mxu0 0
      %216 = vmatpush1.bf16.msra.mxu0 %v213
      %217 = vmatprep.subr.bf16.mxu0 0
      %218 = vmatpush1.bf16.msra.mxu0 0
      %219 = vmatprep.subr.bf16.mxu0 0
      %220 = vmatpush1.bf16.msra.mxu0 0
      %221 = vmatprep.subr.bf16.mxu0 0
      %222 = vmatpush1.bf16.msra.mxu0 0
      %223 = vmatprep.subr.bf16.mxu0 0
      %224 = vmatpush1.bf16.msra.mxu0 0
      %225 = vmatprep.subr.bf16.mxu0 0
      %226 = vmatpush1.bf16.msra.mxu0 0
      %227 = vmatprep.subr.bf16.mxu0 0
      %228 = vmatpush1.bf16.msra.mxu0 0
      %229 = vmatprep.subr.bf16.mxu0 0
      %230 = vmatpush1.bf16.msra.mxu0 0
      %231 = vmatprep.subr.bf16.mxu0 0
      %232 = vmatpush1.bf16.msra.mxu0 0
      %233 = vmatprep.subr.bf16.mxu0 0
      %234 = vmatpush1.bf16.msra.mxu0 0
      %235 = vmatprep.subr.bf16.mxu0 0
      %236 = vmatpush1.bf16.msra.mxu0 0
      %237 = vmatprep.subr.bf16.mxu0 0
      %238 = vmatpush1.bf16.msra.mxu0 0
      %239 = vmatprep.subr.bf16.mxu0 0
      %240 = vmatpush1.bf16.msra.mxu0 0
      %241 = vmatprep.subr.bf16.mxu0 0
      %242 = vmatpush1.bf16.msra.mxu0 0
      %243 = vmatprep.subr.bf16.mxu0 0
      %244 = vmatpush1.bf16.msra.mxu0 0
      %245 = vmatprep.subr.bf16.mxu0 0
      %246 = vmatpush1.bf16.msra.mxu0 0
      %247 = vmatprep.mubr.bf16.mxu0 0
      %248 = vmatmul.mubr.bf16.gmra.mrb[0].mxu0 %v209
      %v249 = vpop.f32.mrb[0].mxu0
      %v250 = vadd.f32 %v205, %v249
      %v251 = vpop.f32.mrb[0].mxu0
      %v252 = vpop.f32.mrb[0].mxu0
      %v253 = vpop.f32.mrb[0].mxu0
      %254 = vdwg.mxu0
      %v255 = vpack.c.bf16 %v250, %v250
      %vm256 = vcmask 517120
      %257 = vst.msk [vmem:[%s196] sm:$0x3] %vm256, %v255
      %p258 = scmp.lt.s32.totalorder %s18, 1
      %s259 = scalar_select %p258, %s18, 1
      %p260 = scmp.lt.s32.totalorder %s19, 0
      %s261 = scalar_select %p260, %s19, 0
      %s262 = sadd.s32 %s261, %s259
      %s263 = smul.addr %s262, 2
      %s264 = scalar_lea.vmem %s3, %s263
      // Predicated region
      $region33: #{context_seg_forward.4} parent=31 // pred_check
        %p265 = pneg %p116
      $region34: #{context_seg_forward.4} parent=31 // pred_check_branch
        %267 = sbr.rel (%p265) target = $region36
      $region35: #{context_seg_forward.4} parent=31 // pred_region
        _
      $region36: #{context_seg_forward.4} parent=31 // pred_fallthru
        _
    $region32: #{context_seg_forward.4} parent=5 // pred_fallthru
      _
    %p268 = scmp.le.s32.totalorder 2, %s9
    // Predicated region
    $region37: #{context_seg_forward.4} parent=5 // pred_check
      %p269 = pneg %p268
    $region38: #{context_seg_forward.4} parent=5 // pred_check_branch
      %271 = sbr.rel (%p269) target = $region40
    $region39: #{context_seg_forward.4} parent=5 // pred_region
      %s272 = ssub.s32 %s9, 2
      // Predicated region
      $region41: #{context_seg_forward.4} parent=39 // pred_check
        %p273 = pneg %p122
      $region42: #{context_seg_forward.4} parent=39 // pred_check_branch
        %275 = sbr.rel (%p273) target = $region44
      $region43: #{context_seg_forward.4} parent=39 // pred_region
        %p276 = scmp.lt.s32.totalorder %s20, 1
        %s277 = scalar_select %p276, %s20, 1
        %p278 = scmp.lt.s32.totalorder %s21, 0
        %s279 = scalar_select %p278, %s21, 0
        %s280 = sadd.s32 %s279, %s277
        %s281 = smul.addr %s280, 2
        %s282 = scalar_lea.vmem %s3, %s281
      $region44: #{context_seg_forward.4} parent=39 // pred_fallthru
        _
    $region40: #{context_seg_forward.4} parent=5 // pred_fallthru
      _
  $region6: #{context_seg_forward.4} parent=0 // loop_footer
    %s13 = sadd.s32 1, %s9
  $region7: #{context_seg_forward.4} parent=0 // loop_footer_branch
    %8 = sbr.rel target = $region3
  $region8: #{context_seg_forward.4} parent=0 // loop_exit
    _

// kernel: context_seg_forward.5
$region0: #{context_seg_forward.5}
  #allocation0 [shape = 'u32[]', space=smem, size = 0x4, offset = 0x4, fixed_abs, tag = 'smem constant byte address 0x4 - core index']
  #allocation1 [shape = 'u32[144,128]{1,0:T(1,128)}', space=vmem, size = 0x12000, scoped, tag = 'internal scratch']
  %s0 = inlined_call_operand.vmem [shape: bf16[2,4,8,8], index: 0, kind: input, shape index: {}]
  %s1 = inlined_call_operand.vmem [shape: bf16[16,8], index: 1, kind: input, shape index: {}]
  %s2 = inlined_call_operand.vmem [shape: bf16[8,16], index: 2, kind: input, shape index: {}]
  %s3 = inlined_call_operand.vmem [shape: bf16[4,16], index: 3, kind: input, shape index: {}]
  %s4 = inlined_call_operand.vmem [shape: bf16[16,4], index: 4, kind: input, shape index: {}]
  %s5 = inlined_call_operand.vmem [shape: f32[2,4,16,16], index: 5, kind: output, shape index: {0}]
  %s6 = inlined_call_operand.vmem [shape: f32[2,4,4,4], index: 6, kind: output, shape index: {1}]
  %7 = xla_tuple %s5, %s6
  %s8 = sld [smem:[#allocation0]]
  $region61: #{context_seg_forward.5} parent=0
    _
  %s10 = ssub.s32 1, %s8
  %s11 = scalar_select 0, %s10, %s8
  loop: start=0, step=1, limit=4
  $region2: #{context_seg_forward.5} parent=0 // loop_pre_header
    _
  $region3: #{context_seg_forward.5} parent=0 // loop_header
    %s13 = sphi 0, %s17
    %p14 = scmp.ge.s32.totalorder %s13, 4
    %s23 = sphi 0, %s25
    %s26 = sphi 0, %s23
    %s27 = sphi 0, %s26
    %s43 = sphi 0, %s27
    %s47 = sphi 0, %s47
    %s49 = sphi 0, %s47
    %s50 = sphi 0, %s49
    %s64 = sphi 0, %s50
    %s68 = sphi 0, %s68
    %s70 = sphi 0, %s68
    %s71 = sphi 0, %s70
    %s85 = sphi 0, %s71
    %s89 = sphi 0, %s89
    %s91 = sphi 0, %s89
    %s92 = sphi 0, %s91
    %s106 = sphi 0, %s92
    %s110 = sphi 0, %s110
    %s112 = sphi 0, %s110
    %s113 = sphi 0, %s112
    %s127 = sphi 0, %s113
    %s133 = sphi 0, %s135
    %s136 = sphi 0, %s133
    %s137 = sphi 0, %s136
    %s153 = sphi 0, %s137
    %s159 = sphi 0, %s161
    %s162 = sphi 0, %s159
    %s163 = sphi 0, %s162
    %s179 = sphi 0, %s163
  $region4: #{context_seg_forward.5} parent=0 // loop_header_branch
    %16 = sbr.rel (%p14) target = $region8
  $region5: #{context_seg_forward.5} parent=0 // loop_body
    %s18 = ssub.s32 %s13, 1
    %s19 = ssub.s32 %s13, 2
    %s20 = sadd.s32 %s13, 1
    %s21 = ssub.s32 %s13, %s20
    %p22 = scmp.eq.s32.totalorder %s21, 0
    %s24 = sadd.s32 %s23, 1
    %s25 = scalar_select %p22, %s23, %s24
    %p28 = pneg %p22
    %p29 = scmp.eq.s32.totalorder %s13, 1
    %p30 = por %p28, %p29
    %p31 = scmp.ne.s32.totalorder %s23, %s26
    %p32 = scmp.eq.s32.totalorder %s13, 0
    %p33 = por %p31, %p32
    %p34 = scmp.ne.s32.totalorder %s23, %s26
    %p35 = scmp.eq.s32.totalorder %s18, 1
    %p36 = por %p34, %p35
    %p37 = scmp.ne.s32.totalorder %s26, %s27
    %p38 = scmp.eq.s32.totalorder %s18, 0
    %p39 = por %p37, %p38
    %p40 = scmp.ne.s32.totalorder %s26, %s27
    %p41 = scmp.eq.s32.totalorder %s19, 1
    %p42 = por %p40, %p41
    %p44 = scmp.ne.s32.totalorder %s27, %s43
    %p45 = scmp.eq.s32.totalorder %s19, 0
    %p46 = por %p44, %p45
    %s48 = sadd.s32 %s47, 1
    %p51 = scmp.eq.s32.totalorder %s13, 1
    %p52 = scmp.ne.s32.totalorder %s47, %s49
    %p53 = scmp.eq.s32.totalorder %s13, 0
    %p54 = por %p52, %p53
    %p55 = scmp.ne.s32.totalorder %s47, %s49
    %p56 = scmp.eq.s32.totalorder %s18, 1
    %p57 = por %p55, %p56
    %p58 = scmp.ne.s32.totalorder %s49, %s50
    %p59 = scmp.eq.s32.totalorder %s18, 0
    %p60 = por %p58, %p59
    %p61 = scmp.ne.s32.totalorder %s49, %s50
    %p62 = scmp.eq.s32.totalorder %s19, 1
    %p63 = por %p61, %p62
    %p65 = scmp.ne.s32.totalorder %s50, %s64
    %p66 = scmp.eq.s32.totalorder %s19, 0
    %p67 = por %p65, %p66
    %s69 = sadd.s32 %s68, 1
    %p72 = scmp.eq.s32.totalorder %s13, 1
    %p73 = scmp.ne.s32.totalorder %s68, %s70
    %p74 = scmp.eq.s32.totalorder %s13, 0
    %p75 = por %p73, %p74
    %p76 = scmp.ne.s32.totalorder %s68, %s70
    %p77 = scmp.eq.s32.totalorder %s18, 1
    %p78 = por %p76, %p77
    %p79 = scmp.ne.s32.totalorder %s70, %s71
    %p80 = scmp.eq.s32.totalorder %s18, 0
    %p81 = por %p79, %p80
    %p82 = scmp.ne.s32.totalorder %s70, %s71
    %p83 = scmp.eq.s32.totalorder %s19, 1
    %p84 = por %p82, %p83
    %p86 = scmp.ne.s32.totalorder %s71, %s85
    %p87 = scmp.eq.s32.totalorder %s19, 0
    %p88 = por %p86, %p87
    %s90 = sadd.s32 %s89, 1
    %p93 = scmp.eq.s32.totalorder %s13, 1
    %p94 = scmp.ne.s32.totalorder %s89, %s91
    %p95 = scmp.eq.s32.totalorder %s13, 0
    %p96 = por %p94, %p95
    %p97 = scmp.ne.s32.totalorder %s89, %s91
    %p98 = scmp.eq.s32.totalorder %s18, 1
    %p99 = por %p97, %p98
    %p100 = scmp.ne.s32.totalorder %s91, %s92
    %p101 = scmp.eq.s32.totalorder %s18, 0
    %p102 = por %p100, %p101
    %p103 = scmp.ne.s32.totalorder %s91, %s92
    %p104 = scmp.eq.s32.totalorder %s19, 1
    %p105 = por %p103, %p104
    %p107 = scmp.ne.s32.totalorder %s92, %s106
    %p108 = scmp.eq.s32.totalorder %s19, 0
    %p109 = por %p107, %p108
    %s111 = sadd.s32 %s110, 1
    %p114 = scmp.eq.s32.totalorder %s13, 1
    %p115 = scmp.ne.s32.totalorder %s110, %s112
    %p116 = scmp.eq.s32.totalorder %s13, 0
    %p117 = por %p115, %p116
    %p118 = scmp.ne.s32.totalorder %s110, %s112
    %p119 = scmp.eq.s32.totalorder %s18, 1
    %p120 = por %p118, %p119
    %p121 = scmp.ne.s32.totalorder %s112, %s113
    %p122 = scmp.eq.s32.totalorder %s18, 0
    %p123 = por %p121, %p122
    %p124 = scmp.ne.s32.totalorder %s112, %s113
    %p125 = scmp.eq.s32.totalorder %s19, 1
    %p126 = por %p124, %p125
    %p128 = scmp.ne.s32.totalorder %s113, %s127
    %p129 = scmp.eq.s32.totalorder %s19, 0
    %p130 = por %p128, %p129
    %s131 = ssub.s32 %s13, %s20
    %p132 = scmp.eq.s32.totalorder %s131, 0
    %s134 = sadd.s32 %s133, 1
    %s135 = scalar_select %p132, %s133, %s134
    %p138 = pneg %p132
    %p139 = scmp.eq.s32.totalorder %s13, 1
    %p140 = por %p138, %p139
    %p141 = scmp.ne.s32.totalorder %s133, %s136
    %p142 = scmp.eq.s32.totalorder %s13, 0
    %p143 = por %p141, %p142
    %p144 = scmp.ne.s32.totalorder %s133, %s136
    %p145 = scmp.eq.s32.totalorder %s18, 1
    %p146 = por %p144, %p145
    %p147 = scmp.ne.s32.totalorder %s136, %s137
    %p148 = scmp.eq.s32.totalorder %s18, 0
    %p149 = por %p147, %p148
    %p150 = scmp.ne.s32.totalorder %s136, %s137
    %p151 = scmp.eq.s32.totalorder %s19, 1
    %p152 = por %p150, %p151
    %p154 = scmp.ne.s32.totalorder %s137, %s153
    %p155 = scmp.eq.s32.totalorder %s19, 0
    %p156 = por %p154, %p155
    %s157 = ssub.s32 %s13, %s20
    %p158 = scmp.eq.s32.totalorder %s157, 0
    %s160 = sadd.s32 %s159, 1
    %s161 = scalar_select %p158, %s159, %s160
    %p164 = pneg %p158
    %p165 = scmp.eq.s32.totalorder %s13, 1
    %p166 = por %p164, %p165
    %p167 = scmp.ne.s32.totalorder %s159, %s162
    %p168 = scmp.eq.s32.totalorder %s13, 0
    %p169 = por %p167, %p168
    %p170 = scmp.ne.s32.totalorder %s159, %s162
    %p171 = scmp.eq.s32.totalorder %s18, 1
    %p172 = por %p170, %p171
    %p173 = scmp.ne.s32.totalorder %s162, %s163
    %p174 = scmp.eq.s32.totalorder %s18, 0
    %p175 = por %p173, %p174
    %p176 = scmp.ne.s32.totalorder %s162, %s163
    %p177 = scmp.eq.s32.totalorder %s19, 1
    %p178 = por %p176, %p177
    %p180 = scmp.ne.s32.totalorder %s163, %s179
    %p181 = scmp.eq.s32.totalorder %s19, 0
    %p182 = por %p180, %p181
    %p183 = scmp.le.s32.totalorder 1, %s13
    %p184 = scmp.lt.s32.totalorder %s13, 3
    %p185 = pnand %p183, %p184
    %p186 = pneg %p185
    // Predicated region
    $region9: #{context_seg_forward.5} parent=5 // pred_check
      _
    $region10: #{context_seg_forward.5} parent=5 // pred_check_branch
      %188 = sbr.rel (%p185) target = $region12
    $region11: #{context_seg_forward.5} parent=5 // pred_region
      %s189 = ssub.s32 %s13, 1
      // Predicated region
      $region13: #{context_seg_forward.5} parent=11 // pred_check
        %p190 = pneg %p60
      $region14: #{context_seg_forward.5} parent=11 // pred_check_branch
        %192 = sbr.rel (%p190) target = $region16
      $region15: #{context_seg_forward.5} parent=11 // pred_region
        _
      $region16: #{context_seg_forward.5} parent=11 // pred_fallthru
        _
      // Predicated region
      $region17: #{context_seg_forward.5} parent=11 // pred_check
        %p193 = pneg %p81
      $region18: #{context_seg_forward.5} parent=11 // pred_check_branch
        %195 = sbr.rel (%p193) target = $region20
      $region19: #{context_seg_forward.5} parent=11 // pred_region
        _
      $region20: #{context_seg_forward.5} parent=11 // pred_fallthru
        _
      // Predicated region
      $region21: #{context_seg_forward.5} parent=11 // pred_check
        %p196 = pneg %p102
      $region22: #{context_seg_forward.5} parent=11 // pred_check_branch
        %198 = sbr.rel (%p196) target = $region24
      $region23: #{context_seg_forward.5} parent=11 // pred_region
        _
      $region24: #{context_seg_forward.5} parent=11 // pred_fallthru
        _
      // Predicated region
      $region25: #{context_seg_forward.5} parent=11 // pred_check
        %p199 = pneg %p123
      $region26: #{context_seg_forward.5} parent=11 // pred_check_branch
        %201 = sbr.rel (%p199) target = $region28
      $region27: #{context_seg_forward.5} parent=11 // pred_region
        _
      $region28: #{context_seg_forward.5} parent=11 // pred_fallthru
        _
    $region12: #{context_seg_forward.5} parent=5 // pred_fallthru
      _
    %p202 = scmp.lt.s32.totalorder %s13, 2
    // Predicated region
    $region29: #{context_seg_forward.5} parent=5 // pred_check
      %p203 = pneg %p202
    $region30: #{context_seg_forward.5} parent=5 // pred_check_branch
      %205 = sbr.rel (%p203) target = $region32
    $region31: #{context_seg_forward.5} parent=5 // pred_region
      // Predicated region
      $region33: #{context_seg_forward.5} parent=31 // pred_check
        %p206 = pneg %p33
      $region34: #{context_seg_forward.5} parent=31 // pred_check_branch
        %208 = sbr.rel (%p206) target = $region36
      $region35: #{context_seg_forward.5} parent=31 // pred_region
        %p209 = scmp.lt.s32.totalorder %s13, 1
        %s210 = scalar_select %p209, %s13, 1
        %s211 = smul.addr %s210, 4
        %s212 = smul.addr %s211, 4
        %s213 = scalar_lea.vmem %s0, %s212
      $region36: #{context_seg_forward.5} parent=31 // pred_fallthru
        _
    $region32: #{context_seg_forward.5} parent=5 // pred_fallthru
      _
    %p214 = scmp.le.s32.totalorder 1, %s13
    %p215 = scmp.lt.s32.totalorder %s13, 3
    %p216 = pnand %p214, %p215
    %p217 = pneg %p216
    // Predicated region
    $region37: #{context_seg_forward.5} parent=5 // pred_check
      _
    $region38: #{context_seg_forward.5} parent=5 // pred_check_branch
      %219 = sbr.rel (%p216) target = $region40
    $region39: #{context_seg_forward.5} parent=5 // pred_region
      %s220 = ssub.s32 %s13, 1
      %p221 = scmp.lt.s32.totalorder %s18, 1
      %s222 = scalar_select %p221, %s18, 1
      %s223 = smul.addr %s222, 4
      %s224 = smul.addr %s223, 4
      %s225 = scalar_lea.vmem %s0, %s224
      %p226 = pneg %p39
      %p227 = pneg %p36
      %p228 = pneg %p60
      %p229 = pneg %p57
      %p230 = pneg %p81
      %p231 = pneg %p78
      %p232 = pneg %p102
      %p233 = pneg %p99
      %p234 = pneg %p123
      %p235 = pneg %p120
      %p236 = pneg %p149
      %p237 = pneg %p146
      %p238 = scmp.lt.s32.totalorder %s18, 1
      %s239 = scalar_select %p238, %s18, 1
      %s240 = smul.addr %s239, 8
      %s241 = smul.addr %s240, 8
      %s242 = scalar_lea.vmem %s5, %s241
      %p243 = pneg %p175
      %p244 = pneg %p172
      %p245 = scmp.lt.s32.totalorder %s18, 1
      %s246 = scalar_select %p245, %s18, 1
      %s247 = smul.addr %s246, 4
      %s248 = smul.addr %s247, 4
      %s249 = scalar_lea.vmem %s6, %s248
      %p250 = scmp.lt.s32.totalorder %s18, 1
      %s251 = scalar_select %p250, %s18, 1
      %s252 = smul.addr %s251, 4
      %s253 = smul.addr %s252, 4
      %s254 = scalar_lea.vmem %s0, %s253
      %p255 = scmp.lt.s32.totalorder %s18, 1
      %s256 = scalar_select %p255, %s18, 1
      %s257 = smul.addr %s256, 8
      %s258 = smul.addr %s257, 8
      %s259 = scalar_lea.vmem %s5, %s258
      %p260 = scmp.lt.s32.totalorder %s18, 1
      %s261 = scalar_select %p260, %s18, 1
      %s262 = smul.addr %s261, 4
      %s263 = smul.addr %s262, 4
      %s264 = scalar_lea.vmem %s6, %s263
      %v266 = vld [vmem:[%s1] sm:$0xf]
      %v267 = vld [vmem:[%s1 + $0x4] sm:$0xf]
      %v268 = vld [vmem:[%s2] sm:$0xf]
      %v269 = vld [vmem:[%s3] sm:$0x3]
      %v270 = vld [vmem:[%s4] sm:$0xf]
      %v271 = vld [vmem:[%s4 + $0x4] sm:$0xf]
      %v272 = vld [vmem:[%s254] sm:$0xf]
      %vm273 = vcmask 64512
      %v275 = vsel %vm273, %v272, 0
      %vm277 = vcmask 1043456
      %v279 = vsel %vm277, %v268, 0
      %281 = vmatprep.subr.bf16.mxu0 0
      %282 = vmatpush1.bf16.msra.mxu0 %v279
      %283 = vmatprep.subr.bf16.mxu0 0
      %284 = vmatpush1.bf16.msra.mxu0 0
      %285 = vmatprep.subr.bf16.mxu0 0
      %286 = vmatpush1.bf16.msra.mxu0 0
      %287 = vmatprep.subr.bf16.mxu0 0
      %288 = vmatpush1.bf16.msra.mxu0 0
      %289 = vmatprep.subr.bf16.mxu0 0
      %290 = vmatpush1.bf16.msra.mxu0 0
      %291 = vmatprep.subr.bf16.mxu0 0
      %292 = vmatpush1.bf16.msra.mxu0 0
      %293 = vmatprep.subr.bf16.mxu0 0
      %294 = vmatpush1.bf16.msra.mxu0 0
      %295 = vmatprep.subr.bf16.mxu0 0
      %296 = vmatpush1.bf16.msra.mxu0 0
      %297 = vmatprep.subr.bf16.mxu0 0
      %298 = vmatpush1.bf16.msra.mxu0 0
      %299 = vmatprep.subr.bf16.mxu0 0
      %300 = vmatpush1.bf16.msra.mxu0 0
      %301 = vmatprep.subr.bf16.mxu0 0
      %302 = vmatpush1.bf16.msra.mxu0 0
      %303 = vmatprep.subr.bf16.mxu0 0
      %304 = vmatpush1.bf16.msra.mxu0 0
      %305 = vmatprep.subr.bf16.mxu0 0
      %306 = vmatpush1.bf16.msra.mxu0 0
      %307 = vmatprep.subr.bf16.mxu0 0
      %308 = vmatpush1.bf16.msra.mxu0 0
      %309 = vmatprep.subr.bf16.mxu0 0
      %310 = vmatpush1.bf16.msra.mxu0 0
      %311 = vmatprep.subr.bf16.mxu0 0
      %312 = vmatpush1.bf16.msra.mxu0 0
      %313 = vmatprep.mubr.bf16.mxu0 0
      %314 = vmatmul.mubr.bf16.gmra.mrb[0].mxu0 %v275
      %v315 = vpop.f32.mrb[0].mxu0
      %v316 = vadd.f32 0.0, %v315
      %v317 = vpop.f32.mrb[0].mxu0
      %v318 = vpop.f32.mrb[0].mxu0
      %v319 = vpop.f32.mrb[0].mxu0
      %320 = vdwg.mxu0
      %v321 = vpack.c.bf16 %v316, %v316
      %v324 = vunpack.c.l.b16 %v266
      %v325 = vunpack.c.l.b16 %v267
      %v326 = vpack.c.b16 %v325, %v324
      %v328 = vsel %vm273, %v326, 0
      %v331 = vsel %vm277, %v321, 0
      %333 = vmatprep.subr.bf16.mxu0 0
      %334 = vmatpush1.bf16.msra.mxu0 %v331
      %335 = vmatprep.subr.bf16.mxu0 0
      %336 = vmatpush1.bf16.msra.mxu0 0
      %337 = vmatprep.subr.bf16.mxu0 0
      %338 = vmatpush1.bf16.msra.mxu0 0
      %339 = vmatprep.subr.bf16.mxu0 0
      %340 = vmatpush1.bf16.msra.mxu0 0
      %341 = vmatprep.subr.bf16.mxu0 0
      %342 = vmatpush1.bf16.msra.mxu0 0
      %343 = vmatprep.subr.bf16.mxu0 0
      %344 = vmatpush1.bf16.msra.mxu0 0
      %345 = vmatprep.subr.bf16.mxu0 0
      %346 = vmatpush1.bf16.msra.mxu0 0
      %347 = vmatprep.subr.bf16.mxu0 0
      %348 = vmatpush1.bf16.msra.mxu0 0
      %349 = vmatprep.subr.bf16.mxu0 0
      %350 = vmatpush1.bf16.msra.mxu0 0
      %351 = vmatprep.subr.bf16.mxu0 0
      %352 = vmatpush1.bf16.msra.mxu0 0
      %353 = vmatprep.subr.bf16.mxu0 0
      %354 = vmatpush1.bf16.msra.mxu0 0
      %355 = vmatprep.subr.bf16.mxu0 0
      %356 = vmatpush1.bf16.msra.mxu0 0
      %357 = vmatprep.subr.bf16.mxu0 0
      %358 = vmatpush1.bf16.msra.mxu0 0
      %359 = vmatprep.subr.bf16.mxu0 0
      %360 = vmatpush1.bf16.msra.mxu0 0
      %361 = vmatprep.subr.bf16.mxu0 0
      %362 = vmatpush1.bf16.msra.mxu0 0
      %363 = vmatprep.subr.bf16.mxu0 0
      %364 = vmatpush1.bf16.msra.mxu0 0
      %365 = vmatprep.mubr.bf16.mxu0 0
      %366 = vmatmul.mubr.bf16.gmra.mrb[0].mxu0 %v328
      %v367 = vpop.f32.mrb[0].mxu0
      %v368 = vadd.f32 0.0, %v367
      %v369 = vpop.f32.mrb[0].mxu0
      %v370 = vpop.f32.mrb[0].mxu0
      %v371 = vadd.f32 0.0, %v370
      %v372 = vpop.f32.mrb[0].mxu0
      %373 = vdwg.mxu0
      %vm374 = vcmask 130048
      %375 = vst.msk [vmem:[%s259] sm:$0xff] %vm374, %v368
      %376 = vst.msk [vmem:[%s259 + $0x8] sm:$0xff] %vm374, %v371
      %s377 = scalar_lea.vmem %s254, 4
      %v378 = vld [vmem:[%s377] sm:$0xf]
      %v380 = vsel %vm273, %v378, 0
      %382 = vmatprep.subr.bf16.mxu0 0
      %383 = vmatpush1.bf16.msra.mxu0 %v279
      %384 = vmatprep.subr.bf16.mxu0 0
      %385 = vmatpush1.bf16.msra.mxu0 0
      %386 = vmatprep.subr.bf16.mxu0 0
      %387 = vmatpush1.bf16.msra.mxu0 0
      %388 = vmatprep.subr.bf16.mxu0 0
      %389 = vmatpush1.bf16.msra.mxu0 0
      %390 = vmatprep.subr.bf16.mxu0 0
      %391 = vmatpush1.bf16.msra.mxu0 0
      %392 = vmatprep.subr.bf16.mxu0 0
      %393 = vmatpush1.bf16.msra.mxu0 0
      %394 = vmatprep.subr.bf16.mxu0 0
      %395 = vmatpush1.bf16.msra.mxu0 0
      %396 = vmatprep.subr.bf16.mxu0 0
      %397 = vmatpush1.bf16.msra.mxu0 0
      %398 = vmatprep.subr.bf16.mxu0 0
      %399 = vmatpush1.bf16.msra.mxu0 0
      %400 = vmatprep.subr.bf16.mxu0 0
      %401 = vmatpush1.bf16.msra.mxu0 0
      %402 = vmatprep.subr.bf16.mxu0 0
      %403 = vmatpush1.bf16.msra.mxu0 0
      %404 = vmatprep.subr.bf16.mxu0 0
      %405 = vmatpush1.bf16.msra.mxu0 0
      %406 = vmatprep.subr.bf16.mxu0 0
      %407 = vmatpush1.bf16.msra.mxu0 0
      %408 = vmatprep.subr.bf16.mxu0 0
      %409 = vmatpush1.bf16.msra.mxu0 0
      %410 = vmatprep.subr.bf16.mxu0 0
      %411 = vmatpush1.bf16.msra.mxu0 0
      %412 = vmatprep.subr.bf16.mxu0 0
      %413 = vmatpush1.bf16.msra.mxu0 0
      %414 = vmatprep.mubr.bf16.mxu0 0
      %415 = vmatmul.mubr.bf16.gmra.mrb[0].mxu0 %v380
      %v416 = vpop.f32.mrb[0].mxu0
      %v417 = vadd.f32 0.0, %v416
      %v418 = vpop.f32.mrb[0].mxu0
      %v419 = vpop.f32.mrb[0].mxu0
      %v420 = vpop.f32.mrb[0].mxu0
      %421 = vdwg.mxu0
      %v422 = vpack.c.bf16 %v417, %v417
      %v424 = vsel %vm277, %v422, 0
      %426 = vmatprep.subr.bf16.mxu0 0
      %427 = vmatpush1.bf16.msra.mxu0 %v424
      %428 = vmatprep.subr.bf16.mxu0 0
      %429 = vmatpush1.bf16.msra.mxu0 0
      %430 = vmatprep.subr.bf16.mxu0 0
      %431 = vmatpush1.bf16.msra.mxu0 0
      %432 = vmatprep.subr.bf16.mxu0 0
      %433 = vmatpush1.bf16.msra.mxu0 0
      %434 = vmatprep.subr.bf16.mxu0 0
      %435 = vmatpush1.bf16.msra.mxu0 0
      %436 = vmatprep.subr.bf16.mxu0 0
      %437 = vmatpush1.bf16.msra.mxu0 0
      %438 = vmatprep.subr.bf16.mxu0 0
      %439 = vmatpush1.bf16.msra.mxu0 0
      %440 = vmatprep.subr.bf16.mxu0 0
      %441 = vmatpush1.bf16.msra.mxu0 0
      %442 = vmatprep.subr.bf16.mxu0 0
      %443 = vmatpush1.bf16.msra.mxu0 0
      %444 = vmatprep.subr.bf16.mxu0 0
      %445 = vmatpush1.bf16.msra.mxu0 0
      %446 = vmatprep.subr.bf16.mxu0 0
      %447 = vmatpush1.bf16.msra.mxu0 0
      %448 = vmatprep.subr.bf16.mxu0 0
      %449 = vmatpush1.bf16.msra.mxu0 0
      %450 = vmatprep.subr.bf16.mxu0 0
      %451 = vmatpush1.bf16.msra.mxu0 0
      %452 = vmatprep.subr.bf16.mxu0 0
      %453 = vmatpush1.bf16.msra.mxu0 0
      %454 = vmatprep.subr.bf16.mxu0 0
      %455 = vmatpush1.bf16.msra.mxu0 0
      %456 = vmatprep.subr.bf16.mxu0 0
      %457 = vmatpush1.bf16.msra.mxu0 0
      %458 = vmatprep.mubr.bf16.mxu0 0
      %459 = vmatmul.mubr.bf16.gmra.mrb[0].mxu0 %v328
      %v460 = vpop.f32.mrb[0].mxu0
      %v461 = vadd.f32 0.0, %v460
      %v462 = vpop.f32.mrb[0].mxu0
      %v463 = vpop.f32.mrb[0].mxu0
      %v464 = vadd.f32 0.0, %v463
      %v465 = vpop.f32.mrb[0].mxu0
      %466 = vdwg.mxu0
      %s467 = scalar_lea.vmem %s259, 16
      %468 = vst.msk [vmem:[%s467] sm:$0xff] %vm374, %v461
      %469 = vst.msk [vmem:[%s467 + $0x8] sm:$0xff] %vm374, %v464
      %s470 = scalar_lea.vmem %s254, 8
      %v471 = vld [vmem:[%s470] sm:$0xf]
      %v473 = vsel %vm273, %v471, 0
      %475 = vmatprep.subr.bf16.mxu0 0
      %476 = vmatpush1.bf16.msra.mxu0 %v279
      %477 = vmatprep.subr.bf16.mxu0 0
      %478 = vmatpush1.bf16.msra.mxu0 0
      %479 = vmatprep.subr.bf16.mxu0 0
      %480 = vmatpush1.bf16.msra.mxu0 0
      %481 = vmatprep.subr.bf16.mxu0 0
      %482 = vmatpush1.bf16.msra.mxu0 0
      %483 = vmatprep.subr.bf16.mxu0 0
      %484 = vmatpush1.bf16.msra.mxu0 0
      %485 = vmatprep.subr.bf16.mxu0 0
      %486 = vmatpush1.bf16.msra.mxu0 0
      %487 = vmatprep.subr.bf16.mxu0 0
      %488 = vmatpush1.bf16.msra.mxu0 0
      %489 = vmatprep.subr.bf16.mxu0 0
      %490 = vmatpush1.bf16.msra.mxu0 0
      %491 = vmatprep.subr.bf16.mxu0 0
      %492 = vmatpush1.bf16.msra.mxu0 0
      %493 = vmatprep.subr.bf16.mxu0 0
      %494 = vmatpush1.bf16.msra.mxu0 0
      %495 = vmatprep.subr.bf16.mxu0 0
      %496 = vmatpush1.bf16.msra.mxu0 0
      %497 = vmatprep.subr.bf16.mxu0 0
      %498 = vmatpush1.bf16.msra.mxu0 0
      %499 = vmatprep.subr.bf16.mxu0 0
      %500 = vmatpush1.bf16.msra.mxu0 0
      %501 = vmatprep.subr.bf16.mxu0 0
      %502 = vmatpush1.bf16.msra.mxu0 0
      %503 = vmatprep.subr.bf16.mxu0 0
      %504 = vmatpush1.bf16.msra.mxu0 0
      %505 = vmatprep.subr.bf16.mxu0 0
      %506 = vmatpush1.bf16.msra.mxu0 0
      %507 = vmatprep.mubr.bf16.mxu0 0
      %508 = vmatmul.mubr.bf16.gmra.mrb[0].mxu0 %v473
      %v509 = vpop.f32.mrb[0].mxu0
      %v510 = vadd.f32 0.0, %v509
      %v511 = vpop.f32.mrb[0].mxu0
      %v512 = vpop.f32.mrb[0].mxu0
      %v513 = vpop.f32.mrb[0].mxu0
      %514 = vdwg.mxu0
      %v515 = vpack.c.bf16 %v510, %v510
      %v517 = vsel %vm277, %v515, 0
      %519 = vmatprep.subr.bf16.mxu0 0
      %520 = vmatpush1.bf16.msra.mxu0 %v517
      %521 = vmatprep.subr.bf16.mxu0 0
      %522 = vmatpush1.bf16.msra.mxu0 0
      %523 = vmatprep.subr.bf16.mxu0 0
      %524 = vmatpush1.bf16.msra.mxu0 0
      %525 = vmatprep.subr.bf16.mxu0 0
      %526 = vmatpush1.bf16.msra.mxu0 0
      %527 = vmatprep.subr.bf16.mxu0 0
      %528 = vmatpush1.bf16.msra.mxu0 0
      %529 = vmatprep.subr.bf16.mxu0 0
      %530 = vmatpush1.bf16.msra.mxu0 0
      %531 = vmatprep.subr.bf16.mxu0 0
      %532 = vmatpush1.bf16.msra.mxu0 0
      %533 = vmatprep.subr.bf16.mxu0 0
      %534 = vmatpush1.bf16.msra.mxu0 0
      %535 = vmatprep.subr.bf16.mxu0 0
      %536 = vmatpush1.bf16.msra.mxu0 0
      %537 = vmatprep.subr.bf16.mxu0 0
      %538 = vmatpush1.bf16.msra.mxu0 0
      %539 = vmatprep.subr.bf16.mxu0 0
      %540 = vmatpush1.bf16.msra.mxu0 0
      %541 = vmatprep.subr.bf16.mxu0 0
      %542 = vmatpush1.bf16.msra.mxu0 0
      %543 = vmatprep.subr.bf16.mxu0 0
      %544 = vmatpush1.bf16.msra.mxu0 0
      %545 = vmatprep.subr.bf16.mxu0 0
      %546 = vmatpush1.bf16.msra.mxu0 0
      %547 = vmatprep.subr.bf16.mxu0 0
      %548 = vmatpush1.bf16.msra.mxu0 0
      %549 = vmatprep.subr.bf16.mxu0 0
      %550 = vmatpush1.bf16.msra.mxu0 0
      %551 = vmatprep.mubr.bf16.mxu0 0
      %552 = vmatmul.mubr.bf16.gmra.mrb[0].mxu0 %v328
      %v553 = vpop.f32.mrb[0].mxu0
      %v554 = vadd.f32 0.0, %v553
      %v555 = vpop.f32.mrb[0].mxu0
      %v556 = vpop.f32.mrb[0].mxu0
      %v557 = vadd.f32 0.0, %v556
      %v558 = vpop.f32.mrb[0].mxu0
      %559 = vdwg.mxu0
      %s560 = scalar_lea.vmem %s259, 32
      %561 = vst.msk [vmem:[%s560] sm:$0xff] %vm374, %v554
      %562 = vst.msk [vmem:[%s560 + $0x8] sm:$0xff] %vm374, %v557
      %s563 = scalar_lea.vmem %s254, 12
      %v564 = vld [vmem:[%s563] sm:$0xf]
      %v566 = vsel %vm273, %v564, 0
      %568 = vmatprep.subr.bf16.mxu0 0
      %569 = vmatpush1.bf16.msra.mxu0 %v279
      %570 = vmatprep.subr.bf16.mxu0 0
      %571 = vmatpush1.bf16.msra.mxu0 0
      %572 = vmatprep.subr.bf16.mxu0 0
      %573 = vmatpush1.bf16.msra.mxu0 0
      %574 = vmatprep.subr.bf16.mxu0 0
      %575 = vmatpush1.bf16.msra.mxu0 0
      %576 = vmatprep.subr.bf16.mxu0 0
      %577 = vmatpush1.bf16.msra.mxu0 0
      %578 = vmatprep.subr.bf16.mxu0 0
      %579 = vmatpush1.bf16.msra.mxu0 0
      %580 = vmatprep.subr.bf16.mxu0 0
      %581 = vmatpush1.bf16.msra.mxu0 0
      %582 = vmatprep.subr.bf16.mxu0 0
      %583 = vmatpush1.bf16.msra.mxu0 0
      %584 = vmatprep.subr.bf16.mxu0 0
      %585 = vmatpush1.bf16.msra.mxu0 0
      %586 = vmatprep.subr.bf16.mxu0 0
      %587 = vmatpush1.bf16.msra.mxu0 0
      %588 = vmatprep.subr.bf16.mxu0 0
      %589 = vmatpush1.bf16.msra.mxu0 0
      %590 = vmatprep.subr.bf16.mxu0 0
      %591 = vmatpush1.bf16.msra.mxu0 0
      %592 = vmatprep.subr.bf16.mxu0 0
      %593 = vmatpush1.bf16.msra.mxu0 0
      %594 = vmatprep.subr.bf16.mxu0 0
      %595 = vmatpush1.bf16.msra.mxu0 0
      %596 = vmatprep.subr.bf16.mxu0 0
      %597 = vmatpush1.bf16.msra.mxu0 0
      %598 = vmatprep.subr.bf16.mxu0 0
      %599 = vmatpush1.bf16.msra.mxu0 0
      %600 = vmatprep.mubr.bf16.mxu0 0
      %601 = vmatmul.mubr.bf16.gmra.mrb[0].mxu0 %v566
      %v602 = vpop.f32.mrb[0].mxu0
      %v603 = vadd.f32 0.0, %v602
      %v604 = vpop.f32.mrb[0].mxu0
      %v605 = vpop.f32.mrb[0].mxu0
      %v606 = vpop.f32.mrb[0].mxu0
      %607 = vdwg.mxu0
      %v608 = vpack.c.bf16 %v603, %v603
      %v610 = vsel %vm277, %v608, 0
      %612 = vmatprep.subr.bf16.mxu0 0
      %613 = vmatpush1.bf16.msra.mxu0 %v610
      %614 = vmatprep.subr.bf16.mxu0 0
      %615 = vmatpush1.bf16.msra.mxu0 0
      %616 = vmatprep.subr.bf16.mxu0 0
      %617 = vmatpush1.bf16.msra.mxu0 0
      %618 = vmatprep.subr.bf16.mxu0 0
      %619 = vmatpush1.bf16.msra.mxu0 0
      %620 = vmatprep.subr.bf16.mxu0 0
      %621 = vmatpush1.bf16.msra.mxu0 0
      %622 = vmatprep.subr.bf16.mxu0 0
      %623 = vmatpush1.bf16.msra.mxu0 0
      %624 = vmatprep.subr.bf16.mxu0 0
      %625 = vmatpush1.bf16.msra.mxu0 0
      %626 = vmatprep.subr.bf16.mxu0 0
      %627 = vmatpush1.bf16.msra.mxu0 0
      %628 = vmatprep.subr.bf16.mxu0 0
      %629 = vmatpush1.bf16.msra.mxu0 0
      %630 = vmatprep.subr.bf16.mxu0 0
      %631 = vmatpush1.bf16.msra.mxu0 0
      %632 = vmatprep.subr.bf16.mxu0 0
      %633 = vmatpush1.bf16.msra.mxu0 0
      %634 = vmatprep.subr.bf16.mxu0 0
      %635 = vmatpush1.bf16.msra.mxu0 0
      %636 = vmatprep.subr.bf16.mxu0 0
      %637 = vmatpush1.bf16.msra.mxu0 0
      %638 = vmatprep.subr.bf16.mxu0 0
      %639 = vmatpush1.bf16.msra.mxu0 0
      %640 = vmatprep.subr.bf16.mxu0 0
      %641 = vmatpush1.bf16.msra.mxu0 0
      %642 = vmatprep.subr.bf16.mxu0 0
      %643 = vmatpush1.bf16.msra.mxu0 0
      %644 = vmatprep.mubr.bf16.mxu0 0
      %645 = vmatmul.mubr.bf16.gmra.mrb[0].mxu0 %v328
      %v646 = vpop.f32.mrb[0].mxu0
      %v647 = vadd.f32 0.0, %v646
      %v648 = vpop.f32.mrb[0].mxu0
      %v649 = vpop.f32.mrb[0].mxu0
      %v650 = vadd.f32 0.0, %v649
      %v651 = vpop.f32.mrb[0].mxu0
      %652 = vdwg.mxu0
      %s653 = scalar_lea.vmem %s259, 48
      %654 = vst.msk [vmem:[%s653] sm:$0xff] %vm374, %v647
      %655 = vst.msk [vmem:[%s653 + $0x8] sm:$0xff] %vm374, %v650
      %v656 = vmax.f32 %v368, %v461
      %v657 = vmax.f32 %v371, %v464
      %v658 = vmax.f32 %v656, %v554
      %v659 = vmax.f32 %v657, %v557
      %v660 = vmax.f32 %v658, %v647
      %v661 = vmax.f32 %v659, %v650
      %vm662 = vcmp.eq.f32.partialorder %v368, %v660
      %vm663 = vcmp.eq.f32.partialorder %v371, %v661
      %v664 = vsel %vm662, 1.0, 0.0
      %v665 = vsel %vm663, 1.0, 0.0
      %v666 = vpack.c.bf16 %v665, %v664
      %v669 = vunpack.c.l.b16 %v270
      %v670 = vunpack.c.l.b16 %v271
      %v671 = vpack.c.b16 %v670, %v669
      %v674 = vsel %vm374, %v666, 0
      %676 = vmatprep.subr.bf16.mxu0 0
      %677 = vmatpush1.bf16.msra.mxu0 %v671
      %678 = vmatprep.subr.bf16.mxu0 0
      %679 = vmatpush1.bf16.msra.mxu0 0
      %680 = vmatprep.subr.bf16.mxu0 0
      %681 = vmatpush1.bf16.msra.mxu0 0
      %682 = vmatprep.subr.bf16.mxu0 0
      %683 = vmatpush1.bf16.msra.mxu0 0
      %684 = vmatprep.subr.bf16.mxu0 0
      %685 = vmatpush1.bf16.msra.mxu0 0
      %686 = vmatprep.subr.bf16.mxu0 0
      %687 = vmatpush1.bf16.msra.mxu0 0
      %688 = vmatprep.subr.bf16.mxu0 0
      %689 = vmatpush1.bf16.msra.mxu0 0
      %690 = vmatprep.subr.bf16.mxu0 0
      %691 = vmatpush1.bf16.msra.mxu0 0
      %692 = vmatprep.subr.bf16.mxu0 0
      %693 = vmatpush1.bf16.msra.mxu0 0
      %694 = vmatprep.subr.bf16.mxu0 0
      %695 = vmatpush1.bf16.msra.mxu0 0
      %696 = vmatprep.subr.bf16.mxu0 0
      %697 = vmatpush1.bf16.msra.mxu0 0
      %698 = vmatprep.subr.bf16.mxu0 0
      %699 = vmatpush1.bf16.msra.mxu0 0
      %700 = vmatprep.subr.bf16.mxu0 0
      %701 = vmatpush1.bf16.msra.mxu0 0
      %702 = vmatprep.subr.bf16.mxu0 0
      %703 = vmatpush1.bf16.msra.mxu0 0
      %704 = vmatprep.subr.bf16.mxu0 0
      %705 = vmatpush1.bf16.msra.mxu0 0
      %706 = vmatprep.subr.bf16.mxu0 0
      %707 = vmatpush1.bf16.msra.mxu0 0
      %708 = vmatprep.mubr.bf16.mxu0 0
      %709 = vmatmul.mubr.bf16.gmra.mrb[0].mxu0 %v674
      %v710 = vpop.f32.mrb[0].mxu0
      %v711 = vadd.f32 0.0, %v710
      %v712 = vpop.f32.mrb[0].mxu0
      %v713 = vpop.f32.mrb[0].mxu0
      %v714 = vadd.f32 0.0, %v713
      %v715 = vpop.f32.mrb[0].mxu0
      %716 = vdwg.mxu0
      %v717 = vpack.c.bf16 %v714, %v711
      %v719 = vsel %vm374, %v269, 0
      %721 = vmatprep.subr.bf16.mxu0 0
      %722 = vmatpush1.bf16.msra.mxu0 %v717
      %723 = vmatprep.subr.bf16.mxu0 0
      %724 = vmatpush1.bf16.msra.mxu0 0
      %725 = vmatprep.subr.bf16.mxu0 0
      %726 = vmatpush1.bf16.msra.mxu0 0
      %727 = vmatprep.subr.bf16.mxu0 0
      %728 = vmatpush1.bf16.msra.mxu0 0
      %729 = vmatprep.subr.bf16.mxu0 0
      %730 = vmatpush1.bf16.msra.mxu0 0
      %731 = vmatprep.subr.bf16.mxu0 0
      %732 = vmatpush1.bf16.msra.mxu0 0
      %733 = vmatprep.subr.bf16.mxu0 0
      %734 = vmatpush1.bf16.msra.mxu0 0
      %735 = vmatprep.subr.bf16.mxu0 0
      %736 = vmatpush1.bf16.msra.mxu0 0
      %737 = vmatprep.subr.bf16.mxu0 0
      %738 = vmatpush1.bf16.msra.mxu0 0
      %739 = vmatprep.subr.bf16.mxu0 0
      %740 = vmatpush1.bf16.msra.mxu0 0
      %741 = vmatprep.subr.bf16.mxu0 0
      %742 = vmatpush1.bf16.msra.mxu0 0
      %743 = vmatprep.subr.bf16.mxu0 0
      %744 = vmatpush1.bf16.msra.mxu0 0
      %745 = vmatprep.subr.bf16.mxu0 0
      %746 = vmatpush1.bf16.msra.mxu0 0
      %747 = vmatprep.subr.bf16.mxu0 0
      %748 = vmatpush1.bf16.msra.mxu0 0
      %749 = vmatprep.subr.bf16.mxu0 0
      %750 = vmatpush1.bf16.msra.mxu0 0
      %751 = vmatprep.subr.bf16.mxu0 0
      %752 = vmatpush1.bf16.msra.mxu0 0
      %753 = vmatprep.mubr.bf16.mxu0 0
      %754 = vmatmul.mubr.bf16.gmra.mrb[0].mxu0 %v719
      %v755 = vpop.f32.mrb[0].mxu0
      %v756 = vadd.f32 0.0, %v755
      %v757 = vpop.f32.mrb[0].mxu0
      %v758 = vpop.f32.mrb[0].mxu0
      %v759 = vpop.f32.mrb[0].mxu0
      %760 = vdwg.mxu0
      %vm761 = vcmask 27648
      %762 = vst.msk [vmem:[%s264] sm:$0xf] %vm761, %v756
      %vm763 = vcmp.eq.f32.partialorder %v461, %v660
      %vm764 = vcmp.eq.f32.partialorder %v464, %v661
      %vm765 = vmxor %vm662, 1
      %vm766 = vmxor %vm663, 1
      %vm767 = vmand %vm763, %vm765
      %vm768 = vmand %vm764, %vm766
      %vm769 = vmor %vm662, %vm767
      %vm770 = vmor %vm663, %vm768
      %v771 = vsel %vm767, 1.0, 0.0
      %v772 = vsel %vm768, 1.0, 0.0
      %v773 = vpack.c.bf16 %v772, %v771
      %v775 = vsel %vm374, %v773, 0
      %777 = vmatprep.subr.bf16.mxu0 0
      %778 = vmatpush1.bf16.msra.mxu0 %v671
      %779 = vmatprep.subr.bf16.mxu0 0
      %780 = vmatpush1.bf16.msra.mxu0 0
      %781 = vmatprep.subr.bf16.mxu0 0
      %782 = vmatpush1.bf16.msra.mxu0 0
      %783 = vmatprep.subr.bf16.mxu0 0
      %784 = vmatpush1.bf16.msra.mxu0 0
      %785 = vmatprep.subr.bf16.mxu0 0
      %786 = vmatpush1.bf16.msra.mxu0 0
      %787 = vmatprep.subr.bf16.mxu0 0
      %788 = vmatpush1.bf16.msra.mxu0 0
      %789 = vmatprep.subr.bf16.mxu0 0
      %790 = vmatpush1.bf16.msra.mxu0 0
      %791 = vmatprep.subr.bf16.mxu0 0
      %792 = vmatpush1.bf16.msra.mxu0 0
      %793 = vmatprep.subr.bf16.mxu0 0
      %794 = vmatpush1.bf16.msra.mxu0 0
      %795 = vmatprep.subr.bf16.mxu0 0
      %796 = vmatpush1.bf16.msra.mxu0 0
      %797 = vmatprep.subr.bf16.mxu0 0
      %798 = vmatpush1.bf16.msra.mxu0 0
      %799 = vmatprep.subr.bf16.mxu0 0
      %800 = vmatpush1.bf16.msra.mxu0 0
      %801 = vmatprep.subr.bf16.mxu0 0
      %802 = vmatpush1.bf16.msra.mxu0 0
      %803 = vmatprep.subr.bf16.mxu0 0
      %804 = vmatpush1.bf16.msra.mxu0 0
      %805 = vmatprep.subr.bf16.mxu0 0
      %806 = vmatpush1.bf16.msra.mxu0 0
      %807 = vmatprep.subr.bf16.mxu0 0
      %808 = vmatpush1.bf16.msra.mxu0 0
      %809 = vmatprep.mubr.bf16.mxu0 0
      %810 = vmatmul.mubr.bf16.gmra.mrb[0].mxu0 %v775
      %v811 = vpop.f32.mrb[0].mxu0
      %v812 = vadd.f32 0.0, %v811
      %v813 = vpop.f32.mrb[0].mxu0
      %v814 = vpop.f32.mrb[0].mxu0
      %v815 = vadd.f32 0.0, %v814
      %v816 = vpop.f32.mrb[0].mxu0
      %817 = vdwg.mxu0
      %v818 = vpack.c.bf16 %v815, %v812
      %819 = vmatprep.subr.bf16.mxu0 0
      %820 = vmatpush1.bf16.msra.mxu0 %v818
      %821 = vmatprep.subr.bf16.mxu0 0
      %822 = vmatpush1.bf16.msra.mxu0 0
      %823 = vmatprep.subr.bf16.mxu0 0
      %824 = vmatpush1.bf16.msra.mxu0 0
      %825 = vmatprep.subr.bf16.mxu0 0
      %826 = vmatpush1.bf16.msra.mxu0 0
      %827 = vmatprep.subr.bf16.mxu0 0
      %828 = vmatpush1.bf16.msra.mxu0 0
      %829 = vmatprep.subr.bf16.mxu0 0
      %830 = vmatpush1.bf16.msra.mxu0 0
      %831 = vmatprep.subr.bf16.mxu0 0
      %832 = vmatpush1.bf16.msra.mxu0 0
      %833 = vmatprep.subr.bf16.mxu0 0
      %834 = vmatpush1.bf16.msra.mxu0 0
      %835 = vmatprep.subr.bf16.mxu0 0
      %836 = vmatpush1.bf16.msra.mxu0 0
      %837 = vmatprep.subr.bf16.mxu0 0
      %838 = vmatpush1.bf16.msra.mxu0 0
      %839 = vmatprep.subr.bf16.mxu0 0
      %840 = vmatpush1.bf16.msra.mxu0 0
      %841 = vmatprep.subr.bf16.mxu0 0
      %842 = vmatpush1.bf16.msra.mxu0 0
      %843 = vmatprep.subr.bf16.mxu0 0
      %844 = vmatpush1.bf16.msra.mxu0 0
      %845 = vmatprep.subr.bf16.mxu0 0
      %846 = vmatpush1.bf16.msra.mxu0 0
      %847 = vmatprep.subr.bf16.mxu0 0
      %848 = vmatpush1.bf16.msra.mxu0 0
      %849 = vmatprep.subr.bf16.mxu0 0
      %850 = vmatpush1.bf16.msra.mxu0 0
      %851 = vmatprep.mubr.bf16.mxu0 0
      %852 = vmatmul.mubr.bf16.gmra.mrb[0].mxu0 %v719
      %v853 = vpop.f32.mrb[0].mxu0
      %v854 = vadd.f32 0.0, %v853
      %v855 = vpop.f32.mrb[0].mxu0
      %v856 = vpop.f32.mrb[0].mxu0
      %v857 = vpop.f32.mrb[0].mxu0
      %858 = vdwg.mxu0
      %s859 = scalar_lea.vmem %s264, 4
      %860 = vst.msk [vmem:[%s859] sm:$0xf] %vm761, %v854
      %vm861 = vcmp.eq.f32.partialorder %v554, %v660
      %vm862 = vcmp.eq.f32.partialorder %v557, %v661
      %vm863 = vmxor %vm769, 1
      %vm864 = vmxor %vm770, 1
      %vm865 = vmand %vm861, %vm863
      %vm866 = vmand %vm862, %vm864
      %vm867 = vmor %vm769, %vm865
      %vm868 = vmor %vm770, %vm866
      %v869 = vsel %vm865, 1.0, 0.0
      %v870 = vsel %vm866, 1.0, 0.0
      %v871 = vpack.c.bf16 %v870, %v869
      %v873 = vsel %vm374, %v871, 0
      %875 = vmatprep.subr.bf16.mxu0 0
      %876 = vmatpush1.bf16.msra.mxu0 %v671
      %877 = vmatprep.subr.bf16.mxu0 0
      %878 = vmatpush1.bf16.msra.mxu0 0
      %879 = vmatprep.subr.bf16.mxu0 0
      %880 = vmatpush1.bf16.msra.mxu0 0
      %881 = vmatprep.subr.bf16.mxu0 0
      %882 = vmatpush1.bf16.msra.mxu0 0
      %883 = vmatprep.subr.bf16.mxu0 0
      %884 = vmatpush1.bf16.msra.mxu0 0
      %885 = vmatprep.subr.bf16.mxu0 0
      %886 = vmatpush1.bf16.msra.mxu0 0
      %887 = vmatprep.subr.bf16.mxu0 0
      %888 = vmatpush1.bf16.msra.mxu0 0
      %889 = vmatprep.subr.bf16.mxu0 0
      %890 = vmatpush1.bf16.msra.mxu0 0
      %891 = vmatprep.subr.bf16.mxu0 0
      %892 = vmatpush1.bf16.msra.mxu0 0
      %893 = vmatprep.subr.bf16.mxu0 0
      %894 = vmatpush1.bf16.msra.mxu0 0
      %895 = vmatprep.subr.bf16.mxu0 0
      %896 = vmatpush1.bf16.msra.mxu0 0
      %897 = vmatprep.subr.bf16.mxu0 0
      %898 = vmatpush1.bf16.msra.mxu0 0
      %899 = vmatprep.subr.bf16.mxu0 0
      %900 = vmatpush1.bf16.msra.mxu0 0
      %901 = vmatprep.subr.bf16.mxu0 0
      %902 = vmatpush1.bf16.msra.mxu0 0
      %903 = vmatprep.subr.bf16.mxu0 0
      %904 = vmatpush1.bf16.msra.mxu0 0
      %905 = vmatprep.subr.bf16.mxu0 0
      %906 = vmatpush1.bf16.msra.mxu0 0
      %907 = vmatprep.mubr.bf16.mxu0 0
      %908 = vmatmul.mubr.bf16.gmra.mrb[0].mxu0 %v873
      %v909 = vpop.f32.mrb[0].mxu0
      %v910 = vadd.f32 0.0, %v909
      %v911 = vpop.f32.mrb[0].mxu0
      %v912 = vpop.f32.mrb[0].mxu0
      %v913 = vadd.f32 0.0, %v912
      %v914 = vpop.f32.mrb[0].mxu0
      %915 = vdwg.mxu0
      %v916 = vpack.c.bf16 %v913, %v910
      %917 = vmatprep.subr.bf16.mxu0 0
      %918 = vmatpush1.bf16.msra.mxu0 %v916
      %919 = vmatprep.subr.bf16.mxu0 0
      %920 = vmatpush1.bf16.msra.mxu0 0
      %921 = vmatprep.subr.bf16.mxu0 0
      %922 = vmatpush1.bf16.msra.mxu0 0
      %923 = vmatprep.subr.bf16.mxu0 0
      %924 = vmatpush1.bf16.msra.mxu0 0
      %925 = vmatprep.subr.bf16.mxu0 0
      %926 = vmatpush1.bf16.msra.mxu0 0
      %927 = vmatprep.subr.bf16.mxu0 0
      %928 = vmatpush1.bf16.msra.mxu0 0
      %929 = vmatprep.subr.bf16.mxu0 0
      %930 = vmatpush1.bf16.msra.mxu0 0
      %931 = vmatprep.subr.bf16.mxu0 0
      %932 = vmatpush1.bf16.msra.mxu0 0
      %933 = vmatprep.subr.bf16.mxu0 0
      %934 = vmatpush1.bf16.msra.mxu0 0
      %935 = vmatprep.subr.bf16.mxu0 0
      %936 = vmatpush1.bf16.msra.mxu0 0
      %937 = vmatprep.subr.bf16.mxu0 0
      %938 = vmatpush1.bf16.msra.mxu0 0
      %939 = vmatprep.subr.bf16.mxu0 0
      %940 = vmatpush1.bf16.msra.mxu0 0
      %941 = vmatprep.subr.bf16.mxu0 0
      %942 = vmatpush1.bf16.msra.mxu0 0
      %943 = vmatprep.subr.bf16.mxu0 0
      %944 = vmatpush1.bf16.msra.mxu0 0
      %945 = vmatprep.subr.bf16.mxu0 0
      %946 = vmatpush1.bf16.msra.mxu0 0
      %947 = vmatprep.subr.bf16.mxu0 0
      %948 = vmatpush1.bf16.msra.mxu0 0
      %949 = vmatprep.mubr.bf16.mxu0 0
      %950 = vmatmul.mubr.bf16.gmra.mrb[0].mxu0 %v719
      %v951 = vpop.f32.mrb[0].mxu0
      %v952 = vadd.f32 0.0, %v951
      %v953 = vpop.f32.mrb[0].mxu0
      %v954 = vpop.f32.mrb[0].mxu0
      %v955 = vpop.f32.mrb[0].mxu0
      %956 = vdwg.mxu0
      %s957 = scalar_lea.vmem %s264, 8
      %958 = vst.msk [vmem:[%s957] sm:$0xf] %vm761, %v952
      %vm959 = vcmp.eq.f32.partialorder %v647, %v660
      %vm960 = vcmp.eq.f32.partialorder %v650, %v661
      %vm961 = vmxor %vm867, 1
      %vm962 = vmxor %vm868, 1
      %vm963 = vmand %vm959, %vm961
      %vm964 = vmand %vm960, %vm962
      %v965 = vsel %vm963, 1.0, 0.0
      %v966 = vsel %vm964, 1.0, 0.0
      %v967 = vpack.c.bf16 %v966, %v965
      %v969 = vsel %vm374, %v967, 0
      %971 = vmatprep.subr.bf16.mxu0 0
      %972 = vmatpush1.bf16.msra.mxu0 %v671
      %973 = vmatprep.subr.bf16.mxu0 0
      %974 = vmatpush1.bf16.msra.mxu0 0
      %975 = vmatprep.subr.bf16.mxu0 0
      %976 = vmatpush1.bf16.msra.mxu0 0
      %977 = vmatprep.subr.bf16.mxu0 0
      %978 = vmatpush1.bf16.msra.mxu0 0
      %979 = vmatprep.subr.bf16.mxu0 0
      %980 = vmatpush1.bf16.msra.mxu0 0
      %981 = vmatprep.subr.bf16.mxu0 0
      %982 = vmatpush1.bf16.msra.mxu0 0
      %983 = vmatprep.subr.bf16.mxu0 0
      %984 = vmatpush1.bf16.msra.mxu0 0
      %985 = vmatprep.subr.bf16.mxu0 0
      %986 = vmatpush1.bf16.msra.mxu0 0
      %987 = vmatprep.subr.bf16.mxu0 0
      %988 = vmatpush1.bf16.msra.mxu0 0
      %989 = vmatprep.subr.bf16.mxu0 0
      %990 = vmatpush1.bf16.msra.mxu0 0
      %991 = vmatprep.subr.bf16.mxu0 0
      %992 = vmatpush1.bf16.msra.mxu0 0
      %993 = vmatprep.subr.bf16.mxu0 0
      %994 = vmatpush1.bf16.msra.mxu0 0
      %995 = vmatprep.subr.bf16.mxu0 0
      %996 = vmatpush1.bf16.msra.mxu0 0
      %997 = vmatprep.subr.bf16.mxu0 0
      %998 = vmatpush1.bf16.msra.mxu0 0
      %999 = vmatprep.subr.bf16.mxu0 0
      %1000 = vmatpush1.bf16.msra.mxu0 0
      %1001 = vmatprep.subr.bf16.mxu0 0
      %1002 = vmatpush1.bf16.msra.mxu0 0
      %1003 = vmatprep.mubr.bf16.mxu0 0
      %1004 = vmatmul.mubr.bf16.gmra.mrb[0].mxu0 %v969
      %v1005 = vpop.f32.mrb[0].mxu0
      %v1006 = vadd.f32 0.0, %v1005
      %v1007 = vpop.f32.mrb[0].mxu0
      %v1008 = vpop.f32.mrb[0].mxu0
      %v1009 = vadd.f32 0.0, %v1008
      %v1010 = vpop.f32.mrb[0].mxu0
      %1011 = vdwg.mxu0
      %v1012 = vpack.c.bf16 %v1009, %v1006
      %1013 = vmatprep.subr.bf16.mxu0 0
      %1014 = vmatpush1.bf16.msra.mxu0 %v1012
      %1015 = vmatprep.subr.bf16.mxu0 0
      %1016 = vmatpush1.bf16.msra.mxu0 0
      %1017 = vmatprep.subr.bf16.mxu0 0
      %1018 = vmatpush1.bf16.msra.mxu0 0
      %1019 = vmatprep.subr.bf16.mxu0 0
      %1020 = vmatpush1.bf16.msra.mxu0 0
      %1021 = vmatprep.subr.bf16.mxu0 0
      %1022 = vmatpush1.bf16.msra.mxu0 0
      %1023 = vmatprep.subr.bf16.mxu0 0
      %1024 = vmatpush1.bf16.msra.mxu0 0
      %1025 = vmatprep.subr.bf16.mxu0 0
      %1026 = vmatpush1.bf16.msra.mxu0 0
      %1027 = vmatprep.subr.bf16.mxu0 0
      %1028 = vmatpush1.bf16.msra.mxu0 0
      %1029 = vmatprep.subr.bf16.mxu0 0
      %1030 = vmatpush1.bf16.msra.mxu0 0
      %1031 = vmatprep.subr.bf16.mxu0 0
      %1032 = vmatpush1.bf16.msra.mxu0 0
      %1033 = vmatprep.subr.bf16.mxu0 0
      %1034 = vmatpush1.bf16.msra.mxu0 0
      %1035 = vmatprep.subr.bf16.mxu0 0
      %1036 = vmatpush1.bf16.msra.mxu0 0
      %1037 = vmatprep.subr.bf16.mxu0 0
      %1038 = vmatpush1.bf16.msra.mxu0 0
      %1039 = vmatprep.subr.bf16.mxu0 0
      %1040 = vmatpush1.bf16.msra.mxu0 0
      %1041 = vmatprep.subr.bf16.mxu0 0
      %1042 = vmatpush1.bf16.msra.mxu0 0
      %1043 = vmatprep.subr.bf16.mxu0 0
      %1044 = vmatpush1.bf16.msra.mxu0 0
      %1045 = vmatprep.mubr.bf16.mxu0 0
      %1046 = vmatmul.mubr.bf16.gmra.mrb[0].mxu0 %v719
      %v1047 = vpop.f32.mrb[0].mxu0
      %v1048 = vadd.f32 0.0, %v1047
      %v1049 = vpop.f32.mrb[0].mxu0
      %v1050 = vpop.f32.mrb[0].mxu0
      %v1051 = vpop.f32.mrb[0].mxu0
      %1052 = vdwg.mxu0
      %s1053 = scalar_lea.vmem %s264, 12
      %1054 = vst.msk [vmem:[%s1053] sm:$0xf] %vm761, %v1048
      %p1055 = scmp.lt.s32.totalorder %s18, 1
      %s1056 = scalar_select %p1055, %s18, 1
      %s1057 = smul.addr %s1056, 8
      %s1058 = smul.addr %s1057, 8
      %s1059 = scalar_lea.vmem %s5, %s1058
      %p1060 = scmp.lt.s32.totalorder %s18, 1
      %s1061 = scalar_select %p1060, %s18, 1
      %s1062 = smul.addr %s1061, 4
      %s1063 = smul.addr %s1062, 4
      %s1064 = scalar_lea.vmem %s6, %s1063
      // Predicated region
      $region41: #{context_seg_forward.5} parent=39 // pred_check
        %p1065 = pneg %p146
      $region42: #{context_seg_forward.5} parent=39 // pred_check_branch
        %1067 = sbr.rel (%p1065) target = $region44
      $region43: #{context_seg_forward.5} parent=39 // pred_region
        _
      $region44: #{context_seg_forward.5} parent=39 // pred_fallthru
        _
      // Predicated region
      $region45: #{context_seg_forward.5} parent=39 // pred_check
        %p1068 = pneg %p172
      $region46: #{context_seg_forward.5} parent=39 // pred_check_branch
        %1070 = sbr.rel (%p1068) target = $region48
      $region47: #{context_seg_forward.5} parent=39 // pred_region
        _
      $region48: #{context_seg_forward.5} parent=39 // pred_fallthru
        _
    $region40: #{context_seg_forward.5} parent=5 // pred_fallthru
      _
    %p1071 = scmp.le.s32.totalorder 2, %s13
    // Predicated region
    $region49: #{context_seg_forward.5} parent=5 // pred_check
      %p1072 = pneg %p1071
    $region50: #{context_seg_forward.5} parent=5 // pred_check_branch
      %1074 = sbr.rel (%p1072) target = $region52
    $region51: #{context_seg_forward.5} parent=5 // pred_region
      %s1075 = ssub.s32 %s13, 2
      // Predicated region
      $region53: #{context_seg_forward.5} parent=51 // pred_check
        %p1076 = pneg %p152
      $region54: #{context_seg_forward.5} parent=51 // pred_check_branch
        %1078 = sbr.rel (%p1076) target = $region56
      $region55: #{context_seg_forward.5} parent=51 // pred_region
        %p1079 = scmp.lt.s32.totalorder %s19, 1
        %s1080 = scalar_select %p1079, %s19, 1
        %s1081 = smul.addr %s1080, 8
        %s1082 = smul.addr %s1081, 8
        %s1083 = scalar_lea.vmem %s5, %s1082
      $region56: #{context_seg_forward.5} parent=51 // pred_fallthru
        _
      // Predicated region
      $region57: #{context_seg_forward.5} parent=51 // pred_check
        %p1084 = pneg %p178
      $region58: #{context_seg_forward.5} parent=51 // pred_check_branch
        %1086 = sbr.rel (%p1084) target = $region60
      $region59: #{context_seg_forward.5} parent=51 // pred_region
        %p1087 = scmp.lt.s32.totalorder %s19, 1
        %s1088 = scalar_select %p1087, %s19, 1
        %s1089 = smul.addr %s1088, 4
        %s1090 = smul.addr %s1089, 4
        %s1091 = scalar_lea.vmem %s6, %s1090
      $region60: #{context_seg_forward.5} parent=51 // pred_fallthru
        _
    $region52: #{context_seg_forward.5} parent=5 // pred_fallthru
      _
  $region6: #{context_seg_forward.5} parent=0 // loop_footer
    %s17 = sadd.s32 1, %s13
  $region7: #{context_seg_forward.5} parent=0 // loop_footer_branch
    %12 = sbr.rel target = $region3
  $region8: #{context_seg_forward.5} parent=0 // loop_exit
    _

// kernel: context_seg_forward.6
$region0: #{context_seg_forward.6}
  #allocation0 [shape = 'u32[]', space=smem, size = 0x4, offset = 0x4, fixed_abs, tag = 'smem constant byte address 0x4 - core index']
  #allocation1 [shape = 'u32[144,128]{1,0:T(1,128)}', space=vmem, size = 0x12000, scoped, tag = 'internal scratch']
  %s0 = inlined_call_operand.vmem [shape: f32[2,4,64,4], index: 0, kind: input, shape index: {}]
  %s1 = inlined_call_operand.vmem [shape: f32[2,4,4,4], index: 1, kind: input, shape index: {}]
  %s2 = inlined_call_operand.vmem [shape: f32[2,4,64,4], index: 2, kind: output, shape index: {}]
  %s3 = sld [smem:[#allocation0]]
  $region41: #{context_seg_forward.6} parent=0
    _
  %s5 = ssub.s32 1, %s3
  %s6 = scalar_select 0, %s5, %s3
  loop: start=0, step=1, limit=4
  $region2: #{context_seg_forward.6} parent=0 // loop_pre_header
    _
  $region3: #{context_seg_forward.6} parent=0 // loop_header
    %s8 = sphi 0, %s12
    %p9 = scmp.ge.s32.totalorder %s8, 4
    %s18 = sphi 0, %s20
    %s21 = sphi 0, %s18
    %s22 = sphi 0, %s21
    %s38 = sphi 0, %s22
    %s44 = sphi 0, %s46
    %s47 = sphi 0, %s44
    %s48 = sphi 0, %s47
    %s64 = sphi 0, %s48
    %s70 = sphi 0, %s72
    %s73 = sphi 0, %s70
    %s74 = sphi 0, %s73
    %s90 = sphi 0, %s74
  $region4: #{context_seg_forward.6} parent=0 // loop_header_branch
    %11 = sbr.rel (%p9) target = $region8
  $region5: #{context_seg_forward.6} parent=0 // loop_body
    %s13 = ssub.s32 %s8, 1
    %s14 = ssub.s32 %s8, 2
    %s15 = sadd.s32 %s8, 1
    %s16 = ssub.s32 %s8, %s15
    %p17 = scmp.eq.s32.totalorder %s16, 0
    %s19 = sadd.s32 %s18, 1
    %s20 = scalar_select %p17, %s18, %s19
    %p23 = pneg %p17
    %p24 = scmp.eq.s32.totalorder %s8, 1
    %p25 = por %p23, %p24
    %p26 = scmp.ne.s32.totalorder %s18, %s21
    %p27 = scmp.eq.s32.totalorder %s8, 0
    %p28 = por %p26, %p27
    %p29 = scmp.ne.s32.totalorder %s18, %s21
    %p30 = scmp.eq.s32.totalorder %s13, 1
    %p31 = por %p29, %p30
    %p32 = scmp.ne.s32.totalorder %s21, %s22
    %p33 = scmp.eq.s32.totalorder %s13, 0
    %p34 = por %p32, %p33
    %p35 = scmp.ne.s32.totalorder %s21, %s22
    %p36 = scmp.eq.s32.totalorder %s14, 1
    %p37 = por %p35, %p36
    %p39 = scmp.ne.s32.totalorder %s22, %s38
    %p40 = scmp.eq.s32.totalorder %s14, 0
    %p41 = por %p39, %p40
    %s42 = ssub.s32 %s8, %s15
    %p43 = scmp.eq.s32.totalorder %s42, 0
    %s45 = sadd.s32 %s44, 1
    %s46 = scalar_select %p43, %s44, %s45
    %p49 = pneg %p43
    %p50 = scmp.eq.s32.totalorder %s8, 1
    %p51 = por %p49, %p50
    %p52 = scmp.ne.s32.totalorder %s44, %s47
    %p53 = scmp.eq.s32.totalorder %s8, 0
    %p54 = por %p52, %p53
    %p55 = scmp.ne.s32.totalorder %s44, %s47
    %p56 = scmp.eq.s32.totalorder %s13, 1
    %p57 = por %p55, %p56
    %p58 = scmp.ne.s32.totalorder %s47, %s48
    %p59 = scmp.eq.s32.totalorder %s13, 0
    %p60 = por %p58, %p59
    %p61 = scmp.ne.s32.totalorder %s47, %s48
    %p62 = scmp.eq.s32.totalorder %s14, 1
    %p63 = por %p61, %p62
    %p65 = scmp.ne.s32.totalorder %s48, %s64
    %p66 = scmp.eq.s32.totalorder %s14, 0
    %p67 = por %p65, %p66
    %s68 = ssub.s32 %s8, %s15
    %p69 = scmp.eq.s32.totalorder %s68, 0
    %s71 = sadd.s32 %s70, 1
    %s72 = scalar_select %p69, %s70, %s71
    %p75 = pneg %p69
    %p76 = scmp.eq.s32.totalorder %s8, 1
    %p77 = por %p75, %p76
    %p78 = scmp.ne.s32.totalorder %s70, %s73
    %p79 = scmp.eq.s32.totalorder %s8, 0
    %p80 = por %p78, %p79
    %p81 = scmp.ne.s32.totalorder %s70, %s73
    %p82 = scmp.eq.s32.totalorder %s13, 1
    %p83 = por %p81, %p82
    %p84 = scmp.ne.s32.totalorder %s73, %s74
    %p85 = scmp.eq.s32.totalorder %s13, 0
    %p86 = por %p84, %p85
    %p87 = scmp.ne.s32.totalorder %s73, %s74
    %p88 = scmp.eq.s32.totalorder %s14, 1
    %p89 = por %p87, %p88
    %p91 = scmp.ne.s32.totalorder %s74, %s90
    %p92 = scmp.eq.s32.totalorder %s14, 0
    %p93 = por %p91, %p92
    %p94 = scmp.le.s32.totalorder 1, %s8
    %p95 = scmp.lt.s32.totalorder %s8, 3
    %p96 = pnand %p94, %p95
    %p97 = pneg %p96
    // Predicated region
    $region9: #{context_seg_forward.6} parent=5 // pred_check
      _
    $region10: #{context_seg_forward.6} parent=5 // pred_check_branch
      %99 = sbr.rel (%p96) target = $region12
    $region11: #{context_seg_forward.6} parent=5 // pred_region
      %s100 = ssub.s32 %s8, 1
    $region12: #{context_seg_forward.6} parent=5 // pred_fallthru
      _
    %p101 = scmp.lt.s32.totalorder %s8, 2
    // Predicated region
    $region13: #{context_seg_forward.6} parent=5 // pred_check
      %p102 = pneg %p101
    $region14: #{context_seg_forward.6} parent=5 // pred_check_branch
      %104 = sbr.rel (%p102) target = $region16
    $region15: #{context_seg_forward.6} parent=5 // pred_region
      // Predicated region
      $region17: #{context_seg_forward.6} parent=15 // pred_check
        %p105 = pneg %p28
      $region18: #{context_seg_forward.6} parent=15 // pred_check_branch
        %107 = sbr.rel (%p105) target = $region20
      $region19: #{context_seg_forward.6} parent=15 // pred_region
        %p108 = scmp.lt.s32.totalorder %s8, 1
        %s109 = scalar_select %p108, %s8, 1
        %s110 = smul.addr %s109, 32
        %s111 = smul.addr %s110, 8
        %s112 = scalar_lea.vmem %s0, %s111
      $region20: #{context_seg_forward.6} parent=15 // pred_fallthru
        _
      // Predicated region
      $region21: #{context_seg_forward.6} parent=15 // pred_check
        %p113 = pneg %p54
      $region22: #{context_seg_forward.6} parent=15 // pred_check_branch
        %115 = sbr.rel (%p113) target = $region24
      $region23: #{context_seg_forward.6} parent=15 // pred_region
        %p116 = scmp.lt.s32.totalorder %s8, 1
        %s117 = scalar_select %p116, %s8, 1
        %s118 = smul.addr %s117, 4
        %s119 = smul.addr %s118, 4
        %s120 = scalar_lea.vmem %s1, %s119
      $region24: #{context_seg_forward.6} parent=15 // pred_fallthru
        _
    $region16: #{context_seg_forward.6} parent=5 // pred_fallthru
      _
    %p121 = scmp.le.s32.totalorder 1, %s8
    %p122 = scmp.lt.s32.totalorder %s8, 3
    %p123 = pnand %p121, %p122
    %p124 = pneg %p123
    // Predicated region
    $region25: #{context_seg_forward.6} parent=5 // pred_check
      _
    $region26: #{context_seg_forward.6} parent=5 // pred_check_branch
      %126 = sbr.rel (%p123) target = $region28
    $region27: #{context_seg_forward.6} parent=5 // pred_region
      %s127 = ssub.s32 %s8, 1
      %p128 = scmp.lt.s32.totalorder %s13, 1
      %s129 = scalar_select %p128, %s13, 1
      %s130 = smul.addr %s129, 32
      %s131 = smul.addr %s130, 8
      %s132 = scalar_lea.vmem %s0, %s131
      %p133 = pneg %p34
      %p134 = pneg %p31
      %p135 = scmp.lt.s32.totalorder %s13, 1
      %s136 = scalar_select %p135, %s13, 1
      %s137 = smul.addr %s136, 4
      %s138 = smul.addr %s137, 4
      %s139 = scalar_lea.vmem %s1, %s138
      %p140 = pneg %p60
      %p141 = pneg %p57
      %p142 = pneg %p86
      %p143 = pneg %p83
      %p144 = scmp.lt.s32.totalorder %s13, 1
      %s145 = scalar_select %p144, %s13, 1
      %s146 = smul.addr %s145, 32
      %s147 = smul.addr %s146, 8
      %s148 = scalar_lea.vmem %s2, %s147
      %p149 = scmp.lt.s32.totalorder %s13, 1
      %s150 = scalar_select %p149, %s13, 1
      %s151 = smul.addr %s150, 32
      %s152 = smul.addr %s151, 8
      %s153 = scalar_lea.vmem %s0, %s152
      %p154 = scmp.lt.s32.totalorder %s13, 1
      %s155 = scalar_select %p154, %s13, 1
      %s156 = smul.addr %s155, 4
      %s157 = smul.addr %s156, 4
      %s158 = scalar_lea.vmem %s1, %s157
      %p159 = scmp.lt.s32.totalorder %s13, 1
      %s160 = scalar_select %p159, %s13, 1
      %s161 = smul.addr %s160, 32
      %s162 = smul.addr %s161, 8
      %s163 = scalar_lea.vmem %s2, %s162
      %v164 = vld [vmem:[%s153] sm:$0xff]
      %v165 = vld [vmem:[%s153 + $0x8] sm:$0xff]
      %v166 = vld [vmem:[%s153 + $0x10] sm:$0xff]
      %v167 = vld [vmem:[%s153 + $0x18] sm:$0xff]
      %v168 = vld [vmem:[%s153 + $0x20] sm:$0xff]
      %v169 = vld [vmem:[%s153 + $0x28] sm:$0xff]
      %v170 = vld [vmem:[%s153 + $0x30] sm:$0xff]
      %v171 = vld [vmem:[%s153 + $0x38] sm:$0xff]
      %v172 = vld [vmem:[%s153 + $0x40] sm:$0xff]
      %v173 = vld [vmem:[%s153 + $0x48] sm:$0xff]
      %v174 = vld [vmem:[%s153 + $0x50] sm:$0xff]
      %v175 = vld [vmem:[%s153 + $0x58] sm:$0xff]
      %v176 = vld [vmem:[%s153 + $0x60] sm:$0xff]
      %v177 = vld [vmem:[%s153 + $0x68] sm:$0xff]
      %v178 = vld [vmem:[%s153 + $0x70] sm:$0xff]
      %v179 = vld [vmem:[%s153 + $0x78] sm:$0xff]
      %v180 = vld [vmem:[%s153 + $0x80] sm:$0xff]
      %v181 = vld [vmem:[%s153 + $0x88] sm:$0xff]
      %v182 = vld [vmem:[%s153 + $0x90] sm:$0xff]
      %v183 = vld [vmem:[%s153 + $0x98] sm:$0xff]
      %v184 = vld [vmem:[%s153 + $0xa0] sm:$0xff]
      %v185 = vld [vmem:[%s153 + $0xa8] sm:$0xff]
      %v186 = vld [vmem:[%s153 + $0xb0] sm:$0xff]
      %v187 = vld [vmem:[%s153 + $0xb8] sm:$0xff]
      %v188 = vld [vmem:[%s153 + $0xc0] sm:$0xff]
      %v189 = vld [vmem:[%s153 + $0xc8] sm:$0xff]
      %v190 = vld [vmem:[%s153 + $0xd0] sm:$0xff]
      %v191 = vld [vmem:[%s153 + $0xd8] sm:$0xff]
      %v192 = vld [vmem:[%s153 + $0xe0] sm:$0xff]
      %v193 = vld [vmem:[%s153 + $0xe8] sm:$0xff]
      %v194 = vld [vmem:[%s153 + $0xf0] sm:$0xff]
      %v195 = vld [vmem:[%s153 + $0xf8] sm:$0xff]
      %vm196 = vcmp.ne.f32.partialorder %v164, 0.0
      %vm197 = vcmp.ne.f32.partialorder %v165, 0.0
      %vm198 = vcmp.ne.f32.partialorder %v166, 0.0
      %vm199 = vcmp.ne.f32.partialorder %v167, 0.0
      %vm200 = vcmp.ne.f32.partialorder %v168, 0.0
      %vm201 = vcmp.ne.f32.partialorder %v169, 0.0
      %vm202 = vcmp.ne.f32.partialorder %v170, 0.0
      %vm203 = vcmp.ne.f32.partialorder %v171, 0.0
      %vm204 = vcmp.ne.f32.partialorder %v172, 0.0
      %vm205 = vcmp.ne.f32.partialorder %v173, 0.0
      %vm206 = vcmp.ne.f32.partialorder %v174, 0.0
      %vm207 = vcmp.ne.f32.partialorder %v175, 0.0
      %vm208 = vcmp.ne.f32.partialorder %v176, 0.0
      %vm209 = vcmp.ne.f32.partialorder %v177, 0.0
      %vm210 = vcmp.ne.f32.partialorder %v178, 0.0
      %vm211 = vcmp.ne.f32.partialorder %v179, 0.0
      %vm212 = vcmp.ne.f32.partialorder %v180, 0.0
      %vm213 = vcmp.ne.f32.partialorder %v181, 0.0
      %vm214 = vcmp.ne.f32.partialorder %v182, 0.0
      %vm215 = vcmp.ne.f32.partialorder %v183, 0.0
      %vm216 = vcmp.ne.f32.partialorder %v184, 0.0
      %vm217 = vcmp.ne.f32.partialorder %v185, 0.0
      %vm218 = vcmp.ne.f32.partialorder %v186, 0.0
      %vm219 = vcmp.ne.f32.partialorder %v187, 0.0
      %vm220 = vcmp.ne.f32.partialorder %v188, 0.0
      %vm221 = vcmp.ne.f32.partialorder %v189, 0.0
      %vm222 = vcmp.ne.f32.partialorder %v190, 0.0
      %vm223 = vcmp.ne.f32.partialorder %v191, 0.0
      %vm224 = vcmp.ne.f32.partialorder %v192, 0.0
      %vm225 = vcmp.ne.f32.partialorder %v193, 0.0
      %vm226 = vcmp.ne.f32.partialorder %v194, 0.0
      %vm227 = vcmp.ne.f32.partialorder %v195, 0.0
      %v228 = vsel %vm196, 1.0, 0.0
      %v229 = vsel %vm197, 1.0, 0.0
      %v230 = vsel %vm198, 1.0, 0.0
      %v231 = vsel %vm199, 1.0, 0.0
      %v232 = vsel %vm200, 1.0, 0.0
      %v233 = vsel %vm201, 1.0, 0.0
      %v234 = vsel %vm202, 1.0, 0.0
      %v235 = vsel %vm203, 1.0, 0.0
      %v236 = vsel %vm204, 1.0, 0.0
      %v237 = vsel %vm205, 1.0, 0.0
      %v238 = vsel %vm206, 1.0, 0.0
      %v239 = vsel %vm207, 1.0, 0.0
      %v240 = vsel %vm208, 1.0, 0.0
      %v241 = vsel %vm209, 1.0, 0.0
      %v242 = vsel %vm210, 1.0, 0.0
      %v243 = vsel %vm211, 1.0, 0.0
      %v244 = vsel %vm212, 1.0, 0.0
      %v245 = vsel %vm213, 1.0, 0.0
      %v246 = vsel %vm214, 1.0, 0.0
      %v247 = vsel %vm215, 1.0, 0.0
      %v248 = vsel %vm216, 1.0, 0.0
      %v249 = vsel %vm217, 1.0, 0.0
      %v250 = vsel %vm218, 1.0, 0.0
      %v251 = vsel %vm219, 1.0, 0.0
      %v252 = vsel %vm220, 1.0, 0.0
      %v253 = vsel %vm221, 1.0, 0.0
      %v254 = vsel %vm222, 1.0, 0.0
      %v255 = vsel %vm223, 1.0, 0.0
      %v256 = vsel %vm224, 1.0, 0.0
      %v257 = vsel %vm225, 1.0, 0.0
      %v258 = vsel %vm226, 1.0, 0.0
      %v259 = vsel %vm227, 1.0, 0.0
      %vm260 = vcmask 31744
      %v261 = vsel %vm260, %v228, 0.0
      %262 = vadd.xlane.f32.xlu0 %v261
      %v263 = vpop.xlane.xlu0 %262
      %v264 = vsel %vm260, %v229, 0.0
      %265 = vadd.xlane.f32.xlu0 %v264
      %v266 = vpop.xlane.xlu0 %265
      %v267 = vsel %vm260, %v230, 0.0
      %268 = vadd.xlane.f32.xlu0 %v267
      %v269 = vpop.xlane.xlu0 %268
      %v270 = vsel %vm260, %v231, 0.0
      %271 = vadd.xlane.f32.xlu0 %v270
      %v272 = vpop.xlane.xlu0 %271
      %v273 = vsel %vm260, %v232, 0.0
      %274 = vadd.xlane.f32.xlu0 %v273
      %v275 = vpop.xlane.xlu0 %274
      %v276 = vsel %vm260, %v233, 0.0
      %277 = vadd.xlane.f32.xlu0 %v276
      %v278 = vpop.xlane.xlu0 %277
      %v279 = vsel %vm260, %v234, 0.0
      %280 = vadd.xlane.f32.xlu0 %v279
      %v281 = vpop.xlane.xlu0 %280
      %v282 = vsel %vm260, %v235, 0.0
      %283 = vadd.xlane.f32.xlu0 %v282
      %v284 = vpop.xlane.xlu0 %283
      %v285 = vsel %vm260, %v236, 0.0
      %286 = vadd.xlane.f32.xlu0 %v285
      %v287 = vpop.xlane.xlu0 %286
      %v288 = vsel %vm260, %v237, 0.0
      %289 = vadd.xlane.f32.xlu0 %v288
      %v290 = vpop.xlane.xlu0 %289
      %v291 = vsel %vm260, %v238, 0.0
      %292 = vadd.xlane.f32.xlu0 %v291
      %v293 = vpop.xlane.xlu0 %292
      %v294 = vsel %vm260, %v239, 0.0
      %295 = vadd.xlane.f32.xlu0 %v294
      %v296 = vpop.xlane.xlu0 %295
      %v297 = vsel %vm260, %v240, 0.0
      %298 = vadd.xlane.f32.xlu0 %v297
      %v299 = vpop.xlane.xlu0 %298
      %v300 = vsel %vm260, %v241, 0.0
      %301 = vadd.xlane.f32.xlu0 %v300
      %v302 = vpop.xlane.xlu0 %301
      %v303 = vsel %vm260, %v242, 0.0
      %304 = vadd.xlane.f32.xlu0 %v303
      %v305 = vpop.xlane.xlu0 %304
      %v306 = vsel %vm260, %v243, 0.0
      %307 = vadd.xlane.f32.xlu0 %v306
      %v308 = vpop.xlane.xlu0 %307
      %v309 = vsel %vm260, %v244, 0.0
      %310 = vadd.xlane.f32.xlu0 %v309
      %v311 = vpop.xlane.xlu0 %310
      %v312 = vsel %vm260, %v245, 0.0
      %313 = vadd.xlane.f32.xlu0 %v312
      %v314 = vpop.xlane.xlu0 %313
      %v315 = vsel %vm260, %v246, 0.0
      %316 = vadd.xlane.f32.xlu0 %v315
      %v317 = vpop.xlane.xlu0 %316
      %v318 = vsel %vm260, %v247, 0.0
      %319 = vadd.xlane.f32.xlu0 %v318
      %v320 = vpop.xlane.xlu0 %319
      %v321 = vsel %vm260, %v248, 0.0
      %322 = vadd.xlane.f32.xlu0 %v321
      %v323 = vpop.xlane.xlu0 %322
      %v324 = vsel %vm260, %v249, 0.0
      %325 = vadd.xlane.f32.xlu0 %v324
      %v326 = vpop.xlane.xlu0 %325
      %v327 = vsel %vm260, %v250, 0.0
      %328 = vadd.xlane.f32.xlu0 %v327
      %v329 = vpop.xlane.xlu0 %328
      %v330 = vsel %vm260, %v251, 0.0
      %331 = vadd.xlane.f32.xlu0 %v330
      %v332 = vpop.xlane.xlu0 %331
      %v333 = vsel %vm260, %v252, 0.0
      %334 = vadd.xlane.f32.xlu0 %v333
      %v335 = vpop.xlane.xlu0 %334
      %v336 = vsel %vm260, %v253, 0.0
      %337 = vadd.xlane.f32.xlu0 %v336
      %v338 = vpop.xlane.xlu0 %337
      %v339 = vsel %vm260, %v254, 0.0
      %340 = vadd.xlane.f32.xlu0 %v339
      %v341 = vpop.xlane.xlu0 %340
      %v342 = vsel %vm260, %v255, 0.0
      %343 = vadd.xlane.f32.xlu0 %v342
      %v344 = vpop.xlane.xlu0 %343
      %v345 = vsel %vm260, %v256, 0.0
      %346 = vadd.xlane.f32.xlu0 %v345
      %v347 = vpop.xlane.xlu0 %346
      %v348 = vsel %vm260, %v257, 0.0
      %349 = vadd.xlane.f32.xlu0 %v348
      %v350 = vpop.xlane.xlu0 %349
      %v351 = vsel %vm260, %v258, 0.0
      %352 = vadd.xlane.f32.xlu0 %v351
      %v353 = vpop.xlane.xlu0 %352
      %v354 = vsel %vm260, %v259, 0.0
      %355 = vadd.xlane.f32.xlu0 %v354
      %v356 = vpop.xlane.xlu0 %355
      %v357 = vadd.f32 %v263, 1e-05
      %v358 = vadd.f32 %v266, 1e-05
      %v359 = vadd.f32 %v269, 1e-05
      %v360 = vadd.f32 %v272, 1e-05
      %v361 = vadd.f32 %v275, 1e-05
      %v362 = vadd.f32 %v278, 1e-05
      %v363 = vadd.f32 %v281, 1e-05
      %v364 = vadd.f32 %v284, 1e-05
      %v365 = vadd.f32 %v287, 1e-05
      %v366 = vadd.f32 %v290, 1e-05
      %v367 = vadd.f32 %v293, 1e-05
      %v368 = vadd.f32 %v296, 1e-05
      %v369 = vadd.f32 %v299, 1e-05
      %v370 = vadd.f32 %v302, 1e-05
      %v371 = vadd.f32 %v305, 1e-05
      %v372 = vadd.f32 %v308, 1e-05
      %v373 = vadd.f32 %v311, 1e-05
      %v374 = vadd.f32 %v314, 1e-05
      %v375 = vadd.f32 %v317, 1e-05
      %v376 = vadd.f32 %v320, 1e-05
      %v377 = vadd.f32 %v323, 1e-05
      %v378 = vadd.f32 %v326, 1e-05
      %v379 = vadd.f32 %v329, 1e-05
      %v380 = vadd.f32 %v332, 1e-05
      %v381 = vadd.f32 %v335, 1e-05
      %v382 = vadd.f32 %v338, 1e-05
      %v383 = vadd.f32 %v341, 1e-05
      %v384 = vadd.f32 %v344, 1e-05
      %v385 = vadd.f32 %v347, 1e-05
      %v386 = vadd.f32 %v350, 1e-05
      %v387 = vadd.f32 %v353, 1e-05
      %v388 = vadd.f32 %v356, 1e-05
      %v389 = vrcp.pop %v357
      %v390 = vrcp.pop %v358
      %v391 = vrcp.pop %v359
      %v392 = vrcp.pop %v360
      %v393 = vrcp.pop %v361
      %v394 = vrcp.pop %v362
      %v395 = vrcp.pop %v363
      %v396 = vrcp.pop %v364
      %v397 = vrcp.pop %v365
      %v398 = vrcp.pop %v366
      %v399 = vrcp.pop %v367
      %v400 = vrcp.pop %v368
      %v401 = vrcp.pop %v369
      %v402 = vrcp.pop %v370
      %v403 = vrcp.pop %v371
      %v404 = vrcp.pop %v372
      %v405 = vrcp.pop %v373
      %v406 = vrcp.pop %v374
      %v407 = vrcp.pop %v375
      %v408 = vrcp.pop %v376
      %v409 = vrcp.pop %v377
      %v410 = vrcp.pop %v378
      %v411 = vrcp.pop %v379
      %v412 = vrcp.pop %v380
      %v413 = vrcp.pop %v381
      %v414 = vrcp.pop %v382
      %v415 = vrcp.pop %v383
      %v416 = vrcp.pop %v384
      %v417 = vrcp.pop %v385
      %v418 = vrcp.pop %v386
      %v419 = vrcp.pop %v387
      %v420 = vrcp.pop %v388
      %v421 = vmul.f32 %v164, %v389
      %v422 = vmul.f32 %v165, %v390
      %v423 = vmul.f32 %v166, %v391
      %v424 = vmul.f32 %v167, %v392
      %v425 = vmul.f32 %v168, %v393
      %v426 = vmul.f32 %v169, %v394
      %v427 = vmul.f32 %v170, %v395
      %v428 = vmul.f32 %v171, %v396
      %v429 = vmul.f32 %v172, %v397
      %v430 = vmul.f32 %v173, %v398
      %v431 = vmul.f32 %v174, %v399
      %v432 = vmul.f32 %v175, %v400
      %v433 = vmul.f32 %v176, %v401
      %v434 = vmul.f32 %v177, %v402
      %v435 = vmul.f32 %v178, %v403
      %v436 = vmul.f32 %v179, %v404
      %v437 = vmul.f32 %v180, %v405
      %v438 = vmul.f32 %v181, %v406
      %v439 = vmul.f32 %v182, %v407
      %v440 = vmul.f32 %v183, %v408
      %v441 = vmul.f32 %v184, %v409
      %v442 = vmul.f32 %v185, %v410
      %v443 = vmul.f32 %v186, %v411
      %v444 = vmul.f32 %v187, %v412
      %v445 = vmul.f32 %v188, %v413
      %v446 = vmul.f32 %v189, %v414
      %v447 = vmul.f32 %v190, %v415
      %v448 = vmul.f32 %v191, %v416
      %v449 = vmul.f32 %v192, %v417
      %v450 = vmul.f32 %v193, %v418
      %v451 = vmul.f32 %v194, %v419
      %v452 = vmul.f32 %v195, %v420
      %v453 = vld [vmem:[%s158] sm:$0xf]
      %v454 = vld [vmem:[%s158 + $0x4] sm:$0xf]
      %v455 = vld [vmem:[%s158 + $0x8] sm:$0xf]
      %v456 = vld [vmem:[%s158 + $0xc] sm:$0xf]
      %v458 = vsel %vm260, %v421, 0
      %v461 = vsel %vm260, %v422, 0
      %v464 = vsel %vm260, %v423, 0
      %v467 = vsel %vm260, %v424, 0
      %v470 = vsel %vm260, %v425, 0
      %v473 = vsel %vm260, %v426, 0
      %v476 = vsel %vm260, %v427, 0
      %v479 = vsel %vm260, %v428, 0
      %v482 = vsel %vm260, %v453, 0
      %484 = vmatprep.subr.mxu0 0.0
      %485 = vmatpush1.xpose.msra.mxu0 %v482
      %486 = vmatprep.subr.mxu0 0.0
      %487 = vmatpush1.xpose.msra.mxu0 0.0
      %488 = vmatprep.subr.mxu0 0.0
      %489 = vmatpush1.xpose.msra.mxu0 0.0
      %490 = vmatprep.subr.mxu0 0.0
      %491 = vmatpush1.xpose.msra.mxu0 0.0
      %492 = vmatprep.subr.mxu0 0.0
      %493 = vmatpush1.xpose.msra.mxu0 0.0
      %494 = vmatprep.subr.mxu0 0.0
      %495 = vmatpush1.xpose.msra.mxu0 0.0
      %496 = vmatprep.subr.mxu0 0.0
      %497 = vmatpush1.xpose.msra.mxu0 0.0
      %498 = vmatprep.subr.mxu0 0.0
      %499 = vmatpush1.xpose.msra.mxu0 0.0
      %500 = vmatprep.subr.mxu0 0.0
      %501 = vmatpush1.xpose.msra.mxu0 0.0
      %502 = vmatprep.subr.mxu0 0.0
      %503 = vmatpush1.xpose.msra.mxu0 0.0
      %504 = vmatprep.subr.mxu0 0.0
      %505 = vmatpush1.xpose.msra.mxu0 0.0
      %506 = vmatprep.subr.mxu0 0.0
      %507 = vmatpush1.xpose.msra.mxu0 0.0
      %508 = vmatprep.subr.mxu0 0.0
      %509 = vmatpush1.xpose.msra.mxu0 0.0
      %510 = vmatprep.subr.mxu0 0.0
      %511 = vmatpush1.xpose.msra.mxu0 0.0
      %512 = vmatprep.subr.mxu0 0.0
      %513 = vmatpush1.xpose.msra.mxu0 0.0
      %514 = vmatprep.subr.mxu0 0.0
      %515 = vmatpush1.xpose.msra.mxu0 0.0
      %516 = vmatprep.subr.mxu0 0.0
      %517 = vmatpush1.xpose.msra.mxu0 0.0
      %518 = vmatprep.subr.mxu0 0.0
      %519 = vmatpush1.xpose.msra.mxu0 0.0
      %520 = vmatprep.subr.mxu0 0.0
      %521 = vmatpush1.xpose.msra.mxu0 0.0
      %522 = vmatprep.subr.mxu0 0.0
      %523 = vmatpush1.xpose.msra.mxu0 0.0
      %524 = vmatprep.subr.mxu0 0.0
      %525 = vmatpush1.xpose.msra.mxu0 0.0
      %526 = vmatprep.subr.mxu0 0.0
      %527 = vmatpush1.xpose.msra.mxu0 0.0
      %528 = vmatprep.subr.mxu0 0.0
      %529 = vmatpush1.xpose.msra.mxu0 0.0
      %530 = vmatprep.subr.mxu0 0.0
      %531 = vmatpush1.xpose.msra.mxu0 0.0
      %532 = vmatprep.subr.mxu0 0.0
      %533 = vmatpush1.xpose.msra.mxu0 0.0
      %534 = vmatprep.subr.mxu0 0.0
      %535 = vmatpush1.xpose.msra.mxu0 0.0
      %536 = vmatprep.subr.mxu0 0.0
      %537 = vmatpush1.xpose.msra.mxu0 0.0
      %538 = vmatprep.subr.mxu0 0.0
      %539 = vmatpush1.xpose.msra.mxu0 0.0
      %540 = vmatprep.subr.mxu0 0.0
      %541 = vmatpush1.xpose.msra.mxu0 0.0
      %542 = vmatprep.subr.mxu0 0.0
      %543 = vmatpush1.xpose.msra.mxu0 0.0
      %544 = vmatprep.subr.mxu0 0.0
      %545 = vmatpush1.xpose.msra.mxu0 0.0
      %546 = vmatprep.subr.mxu0 0.0
      %547 = vmatpush1.xpose.msra.mxu0 0.0
      %548 = vmatprep.mubr.f32.mxu0 0.0
      %549 = vmatmul.mubr.f32.gmra.mrb[0].mxu0 %v458
      %v550 = vpop.f32.mrb[0].mxu0
      %v551 = vadd.f32 0.0, %v550
      %v552 = vpop.f32.mrb[0].mxu0
      %553 = vmatprep.mubr.f32.mxu0 0.0
      %554 = vmatmul.mubr.f32.gmra.mrb[0].mxu0 %v461
      %v555 = vpop.f32.mrb[0].mxu0
      %v556 = vadd.f32 0.0, %v555
      %v557 = vpop.f32.mrb[0].mxu0
      %558 = vmatprep.mubr.f32.mxu0 0.0
      %559 = vmatmul.mubr.f32.gmra.mrb[0].mxu0 %v464
      %v560 = vpop.f32.mrb[0].mxu0
      %v561 = vadd.f32 0.0, %v560
      %v562 = vpop.f32.mrb[0].mxu0
      %563 = vmatprep.mubr.f32.mxu0 0.0
      %564 = vmatmul.mubr.f32.gmra.mrb[0].mxu0 %v467
      %v565 = vpop.f32.mrb[0].mxu0
      %v566 = vadd.f32 0.0, %v565
      %v567 = vpop.f32.mrb[0].mxu0
      %568 = vmatprep.mubr.f32.mxu0 0.0
      %569 = vmatmul.mubr.f32.gmra.mrb[0].mxu0 %v470
      %v570 = vpop.f32.mrb[0].mxu0
      %v571 = vadd.f32 0.0, %v570
      %v572 = vpop.f32.mrb[0].mxu0
      %573 = vmatprep.mubr.f32.mxu0 0.0
      %574 = vmatmul.mubr.f32.gmra.mrb[0].mxu0 %v473
      %v575 = vpop.f32.mrb[0].mxu0
      %v576 = vadd.f32 0.0, %v575
      %v577 = vpop.f32.mrb[0].mxu0
      %578 = vmatprep.mubr.f32.mxu0 0.0
      %579 = vmatmul.mubr.f32.gmra.mrb[0].mxu0 %v476
      %v580 = vpop.f32.mrb[0].mxu0
      %v581 = vadd.f32 0.0, %v580
      %v582 = vpop.f32.mrb[0].mxu0
      %583 = vmatprep.mubr.f32.mxu0 0.0
      %584 = vmatmul.mubr.f32.gmra.mrb[0].mxu0 %v479
      %v585 = vpop.f32.mrb[0].mxu0
      %v586 = vadd.f32 0.0, %v585
      %v587 = vpop.f32.mrb[0].mxu0
      %588 = vdwg.mxu0
      %v590 = vsel %vm260, %v429, 0
      %v593 = vsel %vm260, %v430, 0
      %v596 = vsel %vm260, %v431, 0
      %v599 = vsel %vm260, %v432, 0
      %v602 = vsel %vm260, %v433, 0
      %v605 = vsel %vm260, %v434, 0
      %v608 = vsel %vm260, %v435, 0
      %v611 = vsel %vm260, %v436, 0
      %v614 = vsel %vm260, %v454, 0
      %616 = vmatprep.subr.mxu0 0.0
      %617 = vmatpush1.xpose.msra.mxu0 %v614
      %618 = vmatprep.subr.mxu0 0.0
      %619 = vmatpush1.xpose.msra.mxu0 0.0
      %620 = vmatprep.subr.mxu0 0.0
      %621 = vmatpush1.xpose.msra.mxu0 0.0
      %622 = vmatprep.subr.mxu0 0.0
      %623 = vmatpush1.xpose.msra.mxu0 0.0
      %624 = vmatprep.subr.mxu0 0.0
      %625 = vmatpush1.xpose.msra.mxu0 0.0
      %626 = vmatprep.subr.mxu0 0.0
      %627 = vmatpush1.xpose.msra.mxu0 0.0
      %628 = vmatprep.subr.mxu0 0.0
      %629 = vmatpush1.xpose.msra.mxu0 0.0
      %630 = vmatprep.subr.mxu0 0.0
      %631 = vmatpush1.xpose.msra.mxu0 0.0
      %632 = vmatprep.subr.mxu0 0.0
      %633 = vmatpush1.xpose.msra.mxu0 0.0
      %634 = vmatprep.subr.mxu0 0.0
      %635 = vmatpush1.xpose.msra.mxu0 0.0
      %636 = vmatprep.subr.mxu0 0.0
      %637 = vmatpush1.xpose.msra.mxu0 0.0
      %638 = vmatprep.subr.mxu0 0.0
      %639 = vmatpush1.xpose.msra.mxu0 0.0
      %640 = vmatprep.subr.mxu0 0.0
      %641 = vmatpush1.xpose.msra.mxu0 0.0
      %642 = vmatprep.subr.mxu0 0.0
      %643 = vmatpush1.xpose.msra.mxu0 0.0
      %644 = vmatprep.subr.mxu0 0.0
      %645 = vmatpush1.xpose.msra.mxu0 0.0
      %646 = vmatprep.subr.mxu0 0.0
      %647 = vmatpush1.xpose.msra.mxu0 0.0
      %648 = vmatprep.subr.mxu0 0.0
      %649 = vmatpush1.xpose.msra.mxu0 0.0
      %650 = vmatprep.subr.mxu0 0.0
      %651 = vmatpush1.xpose.msra.mxu0 0.0
      %652 = vmatprep.subr.mxu0 0.0
      %653 = vmatpush1.xpose.msra.mxu0 0.0
      %654 = vmatprep.subr.mxu0 0.0
      %655 = vmatpush1.xpose.msra.mxu0 0.0
      %656 = vmatprep.subr.mxu0 0.0
      %657 = vmatpush1.xpose.msra.mxu0 0.0
      %658 = vmatprep.subr.mxu0 0.0
      %659 = vmatpush1.xpose.msra.mxu0 0.0
      %660 = vmatprep.subr.mxu0 0.0
      %661 = vmatpush1.xpose.msra.mxu0 0.0
      %662 = vmatprep.subr.mxu0 0.0
      %663 = vmatpush1.xpose.msra.mxu0 0.0
      %664 = vmatprep.subr.mxu0 0.0
      %665 = vmatpush1.xpose.msra.mxu0 0.0
      %666 = vmatprep.subr.mxu0 0.0
      %667 = vmatpush1.xpose.msra.mxu0 0.0
      %668 = vmatprep.subr.mxu0 0.0
      %669 = vmatpush1.xpose.msra.mxu0 0.0
      %670 = vmatprep.subr.mxu0 0.0
      %671 = vmatpush1.xpose.msra.mxu0 0.0
      %672 = vmatprep.subr.mxu0 0.0
      %673 = vmatpush1.xpose.msra.mxu0 0.0
      %674 = vmatprep.subr.mxu0 0.0
      %675 = vmatpush1.xpose.msra.mxu0 0.0
      %676 = vmatprep.subr.mxu0 0.0
      %677 = vmatpush1.xpose.msra.mxu0 0.0
      %678 = vmatprep.subr.mxu0 0.0
      %679 = vmatpush1.xpose.msra.mxu0 0.0
      %680 = vmatprep.mubr.f32.mxu0 0.0
      %681 = vmatmul.mubr.f32.gmra.mrb[0].mxu0 %v590
      %v682 = vpop.f32.mrb[0].mxu0
      %v683 = vadd.f32 0.0, %v682
      %v684 = vpop.f32.mrb[0].mxu0
      %685 = vmatprep.mubr.f32.mxu0 0.0
      %686 = vmatmul.mubr.f32.gmra.mrb[0].mxu0 %v593
      %v687 = vpop.f32.mrb[0].mxu0
      %v688 = vadd.f32 0.0, %v687
      %v689 = vpop.f32.mrb[0].mxu0
      %690 = vmatprep.mubr.f32.mxu0 0.0
      %691 = vmatmul.mubr.f32.gmra.mrb[0].mxu0 %v596
      %v692 = vpop.f32.mrb[0].mxu0
      %v693 = vadd.f32 0.0, %v692
      %v694 = vpop.f32.mrb[0].mxu0
      %695 = vmatprep.mubr.f32.mxu0 0.0
      %696 = vmatmul.mubr.f32.gmra.mrb[0].mxu0 %v599
      %v697 = vpop.f32.mrb[0].mxu0
      %v698 = vadd.f32 0.0, %v697
      %v699 = vpop.f32.mrb[0].mxu0
      %700 = vmatprep.mubr.f32.mxu0 0.0
      %701 = vmatmul.mubr.f32.gmra.mrb[0].mxu0 %v602
      %v702 = vpop.f32.mrb[0].mxu0
      %v703 = vadd.f32 0.0, %v702
      %v704 = vpop.f32.mrb[0].mxu0
      %705 = vmatprep.mubr.f32.mxu0 0.0
      %706 = vmatmul.mubr.f32.gmra.mrb[0].mxu0 %v605
      %v707 = vpop.f32.mrb[0].mxu0
      %v708 = vadd.f32 0.0, %v707
      %v709 = vpop.f32.mrb[0].mxu0
      %710 = vmatprep.mubr.f32.mxu0 0.0
      %711 = vmatmul.mubr.f32.gmra.mrb[0].mxu0 %v608
      %v712 = vpop.f32.mrb[0].mxu0
      %v713 = vadd.f32 0.0, %v712
      %v714 = vpop.f32.mrb[0].mxu0
      %715 = vmatprep.mubr.f32.mxu0 0.0
      %716 = vmatmul.mubr.f32.gmra.mrb[0].mxu0 %v611
      %v717 = vpop.f32.mrb[0].mxu0
      %v718 = vadd.f32 0.0, %v717
      %v719 = vpop.f32.mrb[0].mxu0
      %720 = vdwg.mxu0
      %v722 = vsel %vm260, %v437, 0
      %v725 = vsel %vm260, %v438, 0
      %v728 = vsel %vm260, %v439, 0
      %v731 = vsel %vm260, %v440, 0
      %v734 = vsel %vm260, %v441, 0
      %v737 = vsel %vm260, %v442, 0
      %v740 = vsel %vm260, %v443, 0
      %v743 = vsel %vm260, %v444, 0
      %v746 = vsel %vm260, %v455, 0
      %748 = vmatprep.subr.mxu0 0.0
      %749 = vmatpush1.xpose.msra.mxu0 %v746
      %750 = vmatprep.subr.mxu0 0.0
      %751 = vmatpush1.xpose.msra.mxu0 0.0
      %752 = vmatprep.subr.mxu0 0.0
      %753 = vmatpush1.xpose.msra.mxu0 0.0
      %754 = vmatprep.subr.mxu0 0.0
      %755 = vmatpush1.xpose.msra.mxu0 0.0
      %756 = vmatprep.subr.mxu0 0.0
      %757 = vmatpush1.xpose.msra.mxu0 0.0
      %758 = vmatprep.subr.mxu0 0.0
      %759 = vmatpush1.xpose.msra.mxu0 0.0
      %760 = vmatprep.subr.mxu0 0.0
      %761 = vmatpush1.xpose.msra.mxu0 0.0
      %762 = vmatprep.subr.mxu0 0.0
      %763 = vmatpush1.xpose.msra.mxu0 0.0
      %764 = vmatprep.subr.mxu0 0.0
      %765 = vmatpush1.xpose.msra.mxu0 0.0
      %766 = vmatprep.subr.mxu0 0.0
      %767 = vmatpush1.xpose.msra.mxu0 0.0
      %768 = vmatprep.subr.mxu0 0.0
      %769 = vmatpush1.xpose.msra.mxu0 0.0
      %770 = vmatprep.subr.mxu0 0.0
      %771 = vmatpush1.xpose.msra.mxu0 0.0
      %772 = vmatprep.subr.mxu0 0.0
      %773 = vmatpush1.xpose.msra.mxu0 0.0
      %774 = vmatprep.subr.mxu0 0.0
      %775 = vmatpush1.xpose.msra.mxu0 0.0
      %776 = vmatprep.subr.mxu0 0.0
      %777 = vmatpush1.xpose.msra.mxu0 0.0
      %778 = vmatprep.subr.mxu0 0.0
      %779 = vmatpush1.xpose.msra.mxu0 0.0
      %780 = vmatprep.subr.mxu0 0.0
      %781 = vmatpush1.xpose.msra.mxu0 0.0
      %782 = vmatprep.subr.mxu0 0.0
      %783 = vmatpush1.xpose.msra.mxu0 0.0
      %784 = vmatprep.subr.mxu0 0.0
      %785 = vmatpush1.xpose.msra.mxu0 0.0
      %786 = vmatprep.subr.mxu0 0.0
      %787 = vmatpush1.xpose.msra.mxu0 0.0
      %788 = vmatprep.subr.mxu0 0.0
      %789 = vmatpush1.xpose.msra.mxu0 0.0
      %790 = vmatprep.subr.mxu0 0.0
      %791 = vmatpush1.xpose.msra.mxu0 0.0
      %792 = vmatprep.subr.mxu0 0.0
      %793 = vmatpush1.xpose.msra.mxu0 0.0
      %794 = vmatprep.subr.mxu0 0.0
      %795 = vmatpush1.xpose.msra.mxu0 0.0
      %796 = vmatprep.subr.mxu0 0.0
      %797 = vmatpush1.xpose.msra.mxu0 0.0
      %798 = vmatprep.subr.mxu0 0.0
      %799 = vmatpush1.xpose.msra.mxu0 0.0
      %800 = vmatprep.subr.mxu0 0.0
      %801 = vmatpush1.xpose.msra.mxu0 0.0
      %802 = vmatprep.subr.mxu0 0.0
      %803 = vmatpush1.xpose.msra.mxu0 0.0
      %804 = vmatprep.subr.mxu0 0.0
      %805 = vmatpush1.xpose.msra.mxu0 0.0
      %806 = vmatprep.subr.mxu0 0.0
      %807 = vmatpush1.xpose.msra.mxu0 0.0
      %808 = vmatprep.subr.mxu0 0.0
      %809 = vmatpush1.xpose.msra.mxu0 0.0
      %810 = vmatprep.subr.mxu0 0.0
      %811 = vmatpush1.xpose.msra.mxu0 0.0
      %812 = vmatprep.mubr.f32.mxu0 0.0
      %813 = vmatmul.mubr.f32.gmra.mrb[0].mxu0 %v722
      %v814 = vpop.f32.mrb[0].mxu0
      %v815 = vadd.f32 0.0, %v814
      %v816 = vpop.f32.mrb[0].mxu0
      %817 = vmatprep.mubr.f32.mxu0 0.0
      %818 = vmatmul.mubr.f32.gmra.mrb[0].mxu0 %v725
      %v819 = vpop.f32.mrb[0].mxu0
      %v820 = vadd.f32 0.0, %v819
      %v821 = vpop.f32.mrb[0].mxu0
      %822 = vmatprep.mubr.f32.mxu0 0.0
      %823 = vmatmul.mubr.f32.gmra.mrb[0].mxu0 %v728
      %v824 = vpop.f32.mrb[0].mxu0
      %v825 = vadd.f32 0.0, %v824
      %v826 = vpop.f32.mrb[0].mxu0
      %827 = vmatprep.mubr.f32.mxu0 0.0
      %828 = vmatmul.mubr.f32.gmra.mrb[0].mxu0 %v731
      %v829 = vpop.f32.mrb[0].mxu0
      %v830 = vadd.f32 0.0, %v829
      %v831 = vpop.f32.mrb[0].mxu0
      %832 = vmatprep.mubr.f32.mxu0 0.0
      %833 = vmatmul.mubr.f32.gmra.mrb[0].mxu0 %v734
      %v834 = vpop.f32.mrb[0].mxu0
      %v835 = vadd.f32 0.0, %v834
      %v836 = vpop.f32.mrb[0].mxu0
      %837 = vmatprep.mubr.f32.mxu0 0.0
      %838 = vmatmul.mubr.f32.gmra.mrb[0].mxu0 %v737
      %v839 = vpop.f32.mrb[0].mxu0
      %v840 = vadd.f32 0.0, %v839
      %v841 = vpop.f32.mrb[0].mxu0
      %842 = vmatprep.mubr.f32.mxu0 0.0
      %843 = vmatmul.mubr.f32.gmra.mrb[0].mxu0 %v740
      %v844 = vpop.f32.mrb[0].mxu0
      %v845 = vadd.f32 0.0, %v844
      %v846 = vpop.f32.mrb[0].mxu0
      %847 = vmatprep.mubr.f32.mxu0 0.0
      %848 = vmatmul.mubr.f32.gmra.mrb[0].mxu0 %v743
      %v849 = vpop.f32.mrb[0].mxu0
      %v850 = vadd.f32 0.0, %v849
      %v851 = vpop.f32.mrb[0].mxu0
      %852 = vdwg.mxu0
      %v854 = vsel %vm260, %v445, 0
      %v857 = vsel %vm260, %v446, 0
      %v860 = vsel %vm260, %v447, 0
      %v863 = vsel %vm260, %v448, 0
      %v866 = vsel %vm260, %v449, 0
      %v869 = vsel %vm260, %v450, 0
      %v872 = vsel %vm260, %v451, 0
      %v875 = vsel %vm260, %v452, 0
      %v878 = vsel %vm260, %v456, 0
      %880 = vmatprep.subr.mxu0 0.0
      %881 = vmatpush1.xpose.msra.mxu0 %v878
      %882 = vmatprep.subr.mxu0 0.0
      %883 = vmatpush1.xpose.msra.mxu0 0.0
      %884 = vmatprep.subr.mxu0 0.0
      %885 = vmatpush1.xpose.msra.mxu0 0.0
      %886 = vmatprep.subr.mxu0 0.0
      %887 = vmatpush1.xpose.msra.mxu0 0.0
      %888 = vmatprep.subr.mxu0 0.0
      %889 = vmatpush1.xpose.msra.mxu0 0.0
      %890 = vmatprep.subr.mxu0 0.0
      %891 = vmatpush1.xpose.msra.mxu0 0.0
      %892 = vmatprep.subr.mxu0 0.0
      %893 = vmatpush1.xpose.msra.mxu0 0.0
      %894 = vmatprep.subr.mxu0 0.0
      %895 = vmatpush1.xpose.msra.mxu0 0.0
      %896 = vmatprep.subr.mxu0 0.0
      %897 = vmatpush1.xpose.msra.mxu0 0.0
      %898 = vmatprep.subr.mxu0 0.0
      %899 = vmatpush1.xpose.msra.mxu0 0.0
      %900 = vmatprep.subr.mxu0 0.0
      %901 = vmatpush1.xpose.msra.mxu0 0.0
      %902 = vmatprep.subr.mxu0 0.0
      %903 = vmatpush1.xpose.msra.mxu0 0.0
      %904 = vmatprep.subr.mxu0 0.0
      %905 = vmatpush1.xpose.msra.mxu0 0.0
      %906 = vmatprep.subr.mxu0 0.0
      %907 = vmatpush1.xpose.msra.mxu0 0.0
      %908 = vmatprep.subr.mxu0 0.0
      %909 = vmatpush1.xpose.msra.mxu0 0.0
      %910 = vmatprep.subr.mxu0 0.0
      %911 = vmatpush1.xpose.msra.mxu0 0.0
      %912 = vmatprep.subr.mxu0 0.0
      %913 = vmatpush1.xpose.msra.mxu0 0.0
      %914 = vmatprep.subr.mxu0 0.0
      %915 = vmatpush1.xpose.msra.mxu0 0.0
      %916 = vmatprep.subr.mxu0 0.0
      %917 = vmatpush1.xpose.msra.mxu0 0.0
      %918 = vmatprep.subr.mxu0 0.0
      %919 = vmatpush1.xpose.msra.mxu0 0.0
      %920 = vmatprep.subr.mxu0 0.0
      %921 = vmatpush1.xpose.msra.mxu0 0.0
      %922 = vmatprep.subr.mxu0 0.0
      %923 = vmatpush1.xpose.msra.mxu0 0.0
      %924 = vmatprep.subr.mxu0 0.0
      %925 = vmatpush1.xpose.msra.mxu0 0.0
      %926 = vmatprep.subr.mxu0 0.0
      %927 = vmatpush1.xpose.msra.mxu0 0.0
      %928 = vmatprep.subr.mxu0 0.0
      %929 = vmatpush1.xpose.msra.mxu0 0.0
      %930 = vmatprep.subr.mxu0 0.0
      %931 = vmatpush1.xpose.msra.mxu0 0.0
      %932 = vmatprep.subr.mxu0 0.0
      %933 = vmatpush1.xpose.msra.mxu0 0.0
      %934 = vmatprep.subr.mxu0 0.0
      %935 = vmatpush1.xpose.msra.mxu0 0.0
      %936 = vmatprep.subr.mxu0 0.0
      %937 = vmatpush1.xpose.msra.mxu0 0.0
      %938 = vmatprep.subr.mxu0 0.0
      %939 = vmatpush1.xpose.msra.mxu0 0.0
      %940 = vmatprep.subr.mxu0 0.0
      %941 = vmatpush1.xpose.msra.mxu0 0.0
      %942 = vmatprep.subr.mxu0 0.0
      %943 = vmatpush1.xpose.msra.mxu0 0.0
      %944 = vmatprep.mubr.f32.mxu0 0.0
      %945 = vmatmul.mubr.f32.gmra.mrb[0].mxu0 %v854
      %v946 = vpop.f32.mrb[0].mxu0
      %v947 = vadd.f32 0.0, %v946
      %v948 = vpop.f32.mrb[0].mxu0
      %949 = vmatprep.mubr.f32.mxu0 0.0
      %950 = vmatmul.mubr.f32.gmra.mrb[0].mxu0 %v857
      %v951 = vpop.f32.mrb[0].mxu0
      %v952 = vadd.f32 0.0, %v951
      %v953 = vpop.f32.mrb[0].mxu0
      %954 = vmatprep.mubr.f32.mxu0 0.0
      %955 = vmatmul.mubr.f32.gmra.mrb[0].mxu0 %v860
      %v956 = vpop.f32.mrb[0].mxu0
      %v957 = vadd.f32 0.0, %v956
      %v958 = vpop.f32.mrb[0].mxu0
      %959 = vmatprep.mubr.f32.mxu0 0.0
      %960 = vmatmul.mubr.f32.gmra.mrb[0].mxu0 %v863
      %v961 = vpop.f32.mrb[0].mxu0
      %v962 = vadd.f32 0.0, %v961
      %v963 = vpop.f32.mrb[0].mxu0
      %964 = vmatprep.mubr.f32.mxu0 0.0
      %965 = vmatmul.mubr.f32.gmra.mrb[0].mxu0 %v866
      %v966 = vpop.f32.mrb[0].mxu0
      %v967 = vadd.f32 0.0, %v966
      %v968 = vpop.f32.mrb[0].mxu0
      %969 = vmatprep.mubr.f32.mxu0 0.0
      %970 = vmatmul.mubr.f32.gmra.mrb[0].mxu0 %v869
      %v971 = vpop.f32.mrb[0].mxu0
      %v972 = vadd.f32 0.0, %v971
      %v973 = vpop.f32.mrb[0].mxu0
      %974 = vmatprep.mubr.f32.mxu0 0.0
      %975 = vmatmul.mubr.f32.gmra.mrb[0].mxu0 %v872
      %v976 = vpop.f32.mrb[0].mxu0
      %v977 = vadd.f32 0.0, %v976
      %v978 = vpop.f32.mrb[0].mxu0
      %979 = vmatprep.mubr.f32.mxu0 0.0
      %980 = vmatmul.mubr.f32.gmra.mrb[0].mxu0 %v875
      %v981 = vpop.f32.mrb[0].mxu0
      %v982 = vadd.f32 0.0, %v981
      %v983 = vpop.f32.mrb[0].mxu0
      %984 = vdwg.mxu0
      %985 = vst.msk [vmem:[%s163] sm:$0xff] %vm260, %v551
      %986 = vst.msk [vmem:[%s163 + $0x8] sm:$0xff] %vm260, %v556
      %987 = vst.msk [vmem:[%s163 + $0x10] sm:$0xff] %vm260, %v561
      %988 = vst.msk [vmem:[%s163 + $0x18] sm:$0xff] %vm260, %v566
      %989 = vst.msk [vmem:[%s163 + $0x20] sm:$0xff] %vm260, %v571
      %990 = vst.msk [vmem:[%s163 + $0x28] sm:$0xff] %vm260, %v576
      %991 = vst.msk [vmem:[%s163 + $0x30] sm:$0xff] %vm260, %v581
      %992 = vst.msk [vmem:[%s163 + $0x38] sm:$0xff] %vm260, %v586
      %993 = vst.msk [vmem:[%s163 + $0x40] sm:$0xff] %vm260, %v683
      %994 = vst.msk [vmem:[%s163 + $0x48] sm:$0xff] %vm260, %v688
      %995 = vst.msk [vmem:[%s163 + $0x50] sm:$0xff] %vm260, %v693
      %996 = vst.msk [vmem:[%s163 + $0x58] sm:$0xff] %vm260, %v698
      %997 = vst.msk [vmem:[%s163 + $0x60] sm:$0xff] %vm260, %v703
      %998 = vst.msk [vmem:[%s163 + $0x68] sm:$0xff] %vm260, %v708
      %999 = vst.msk [vmem:[%s163 + $0x70] sm:$0xff] %vm260, %v713
      %1000 = vst.msk [vmem:[%s163 + $0x78] sm:$0xff] %vm260, %v718
      %1001 = vst.msk [vmem:[%s163 + $0x80] sm:$0xff] %vm260, %v815
      %1002 = vst.msk [vmem:[%s163 + $0x88] sm:$0xff] %vm260, %v820
      %1003 = vst.msk [vmem:[%s163 + $0x90] sm:$0xff] %vm260, %v825
      %1004 = vst.msk [vmem:[%s163 + $0x98] sm:$0xff] %vm260, %v830
      %1005 = vst.msk [vmem:[%s163 + $0xa0] sm:$0xff] %vm260, %v835
      %1006 = vst.msk [vmem:[%s163 + $0xa8] sm:$0xff] %vm260, %v840
      %1007 = vst.msk [vmem:[%s163 + $0xb0] sm:$0xff] %vm260, %v845
      %1008 = vst.msk [vmem:[%s163 + $0xb8] sm:$0xff] %vm260, %v850
      %1009 = vst.msk [vmem:[%s163 + $0xc0] sm:$0xff] %vm260, %v947
      %1010 = vst.msk [vmem:[%s163 + $0xc8] sm:$0xff] %vm260, %v952
      %1011 = vst.msk [vmem:[%s163 + $0xd0] sm:$0xff] %vm260, %v957
      %1012 = vst.msk [vmem:[%s163 + $0xd8] sm:$0xff] %vm260, %v962
      %1013 = vst.msk [vmem:[%s163 + $0xe0] sm:$0xff] %vm260, %v967
      %1014 = vst.msk [vmem:[%s163 + $0xe8] sm:$0xff] %vm260, %v972
      %1015 = vst.msk [vmem:[%s163 + $0xf0] sm:$0xff] %vm260, %v977
      %1016 = vst.msk [vmem:[%s163 + $0xf8] sm:$0xff] %vm260, %v982
      %p1017 = scmp.lt.s32.totalorder %s13, 1
      %s1018 = scalar_select %p1017, %s13, 1
      %s1019 = smul.addr %s1018, 32
      %s1020 = smul.addr %s1019, 8
      %s1021 = scalar_lea.vmem %s2, %s1020
      // Predicated region
      $region29: #{context_seg_forward.6} parent=27 // pred_check
        %p1022 = pneg %p83
      $region30: #{context_seg_forward.6} parent=27 // pred_check_branch
        %1024 = sbr.rel (%p1022) target = $region32
      $region31: #{context_seg_forward.6} parent=27 // pred_region
        _
      $region32: #{context_seg_forward.6} parent=27 // pred_fallthru
        _
    $region28: #{context_seg_forward.6} parent=5 // pred_fallthru
      _
    %p1025 = scmp.le.s32.totalorder 2, %s8
    // Predicated region
    $region33: #{context_seg_forward.6} parent=5 // pred_check
      %p1026 = pneg %p1025
    $region34: #{context_seg_forward.6} parent=5 // pred_check_branch
      %1028 = sbr.rel (%p1026) target = $region36
    $region35: #{context_seg_forward.6} parent=5 // pred_region
      %s1029 = ssub.s32 %s8, 2
      // Predicated region
      $region37: #{context_seg_forward.6} parent=35 // pred_check
        %p1030 = pneg %p89
      $region38: #{context_seg_forward.6} parent=35 // pred_check_branch
        %1032 = sbr.rel (%p1030) target = $region40
      $region39: #{context_seg_forward.6} parent=35 // pred_region
        %p1033 = scmp.lt.s32.totalorder %s14, 1
        %s1034 = scalar_select %p1033, %s14, 1
        %s1035 = smul.addr %s1034, 32
        %s1036 = smul.addr %s1035, 8
        %s1037 = scalar_lea.vmem %s2, %s1036
      $region40: #{context_seg_forward.6} parent=35 // pred_fallthru
        _
    $region36: #{context_seg_forward.6} parent=5 // pred_fallthru
      _
  $region6: #{context_seg_forward.6} parent=0 // loop_footer
    %s12 = sadd.s32 1, %s8
  $region7: #{context_seg_forward.6} parent=0 // loop_footer_branch
    %7 = sbr.rel target = $region3
  $region8: #{context_seg_forward.6} parent=0 // loop_exit
    _

// kernel: context_seg_forward.7
$region0: #{context_seg_forward.7}
  #allocation0 [shape = 'u32[]', space=smem, size = 0x4, offset = 0x4, fixed_abs, tag = 'smem constant byte address 0x4 - core index']
  #allocation1 [shape = 'u32[144,128]{1,0:T(1,128)}', space=vmem, size = 0x12000, scoped, tag = 'internal scratch']
  %s0 = inlined_call_operand.vmem [shape: f32[2,4,2,128], index: 0, kind: input, shape index: {}]
  %s1 = inlined_call_operand.vmem [shape: f32[2,4,2,128], index: 1, kind: input, shape index: {}]
  %s2 = inlined_call_operand.vmem [shape: f32[2,4,2,128], index: 2, kind: output, shape index: {}]
  %s3 = sld [smem:[#allocation0]]
  $region41: #{context_seg_forward.7} parent=0
    _
  %s5 = ssub.s32 1, %s3
  %s6 = scalar_select 0, %s5, %s3
  loop: start=0, step=1, limit=4
  $region2: #{context_seg_forward.7} parent=0 // loop_pre_header
    _
  $region3: #{context_seg_forward.7} parent=0 // loop_header
    %s8 = sphi 0, %s12
    %p9 = scmp.ge.s32.totalorder %s8, 4
    %s15 = sphi 0, %s27
    %s16 = sphi 0, %s23
    %s17 = sphi 0, %s15
    %s18 = sphi 0, %s16
    %s19 = sphi 0, %s17
    %s20 = sphi 0, %s18
    %s32 = sphi 0, %s34
    %s35 = sphi 0, %s32
    %s36 = sphi 0, %s35
    %s52 = sphi 0, %s36
    %s60 = sphi 0, %s62
    %s63 = sphi 0, %s60
    %s64 = sphi 0, %s63
    %s80 = sphi 0, %s64
    %s88 = sphi 0, %s90
    %s91 = sphi 0, %s88
    %s92 = sphi 0, %s91
    %s108 = sphi 0, %s92
  $region4: #{context_seg_forward.7} parent=0 // loop_header_branch
    %11 = sbr.rel (%p9) target = $region8
  $region5: #{context_seg_forward.7} parent=0 // loop_body
    %s13 = ssub.s32 %s8, 1
    %s14 = ssub.s32 %s8, 2
    %s21 = sadd.s32 1, %s16
    %p22 = scmp.ge.s32.totalorder %s21, 1
    %s23 = scalar_select %p22, 0, %s21
    %s24 = sadd.s32 1, %s15
    %s25 = scalar_select %p22, %s24, %s15
    %p26 = scmp.ge.s32.totalorder %s25, 2
    %s27 = scalar_select %p26, 0, %s25
    %s28 = ssub.s32 %s15, %s27
    %s29 = ssub.s32 %s16, %s23
    %s30 = sor.u32 %s28, %s29
    %p31 = scmp.eq.s32.totalorder %s30, 0
    %s33 = sadd.s32 %s32, 1
    %s34 = scalar_select %p31, %s32, %s33
    %p37 = pneg %p31
    %p38 = scmp.eq.s32.totalorder %s8, 1
    %p39 = por %p37, %p38
    %p40 = scmp.ne.s32.totalorder %s32, %s35
    %p41 = scmp.eq.s32.totalorder %s8, 0
    %p42 = por %p40, %p41
    %p43 = scmp.ne.s32.totalorder %s32, %s35
    %p44 = scmp.eq.s32.totalorder %s13, 1
    %p45 = por %p43, %p44
    %p46 = scmp.ne.s32.totalorder %s35, %s36
    %p47 = scmp.eq.s32.totalorder %s13, 0
    %p48 = por %p46, %p47
    %p49 = scmp.ne.s32.totalorder %s35, %s36
    %p50 = scmp.eq.s32.totalorder %s14, 1
    %p51 = por %p49, %p50
    %p53 = scmp.ne.s32.totalorder %s36, %s52
    %p54 = scmp.eq.s32.totalorder %s14, 0
    %p55 = por %p53, %p54
    %s56 = ssub.s32 %s15, %s27
    %s57 = ssub.s32 %s16, %s23
    %s58 = sor.u32 %s56, %s57
    %p59 = scmp.eq.s32.totalorder %s58, 0
    %s61 = sadd.s32 %s60, 1
    %s62 = scalar_select %p59, %s60, %s61
    %p65 = pneg %p59
    %p66 = scmp.eq.s32.totalorder %s8, 1
    %p67 = por %p65, %p66
    %p68 = scmp.ne.s32.totalorder %s60, %s63
    %p69 = scmp.eq.s32.totalorder %s8, 0
    %p70 = por %p68, %p69
    %p71 = scmp.ne.s32.totalorder %s60, %s63
    %p72 = scmp.eq.s32.totalorder %s13, 1
    %p73 = por %p71, %p72
    %p74 = scmp.ne.s32.totalorder %s63, %s64
    %p75 = scmp.eq.s32.totalorder %s13, 0
    %p76 = por %p74, %p75
    %p77 = scmp.ne.s32.totalorder %s63, %s64
    %p78 = scmp.eq.s32.totalorder %s14, 1
    %p79 = por %p77, %p78
    %p81 = scmp.ne.s32.totalorder %s64, %s80
    %p82 = scmp.eq.s32.totalorder %s14, 0
    %p83 = por %p81, %p82
    %s84 = ssub.s32 %s15, %s27
    %s85 = ssub.s32 %s16, %s23
    %s86 = sor.u32 %s84, %s85
    %p87 = scmp.eq.s32.totalorder %s86, 0
    %s89 = sadd.s32 %s88, 1
    %s90 = scalar_select %p87, %s88, %s89
    %p93 = pneg %p87
    %p94 = scmp.eq.s32.totalorder %s8, 1
    %p95 = por %p93, %p94
    %p96 = scmp.ne.s32.totalorder %s88, %s91
    %p97 = scmp.eq.s32.totalorder %s8, 0
    %p98 = por %p96, %p97
    %p99 = scmp.ne.s32.totalorder %s88, %s91
    %p100 = scmp.eq.s32.totalorder %s13, 1
    %p101 = por %p99, %p100
    %p102 = scmp.ne.s32.totalorder %s91, %s92
    %p103 = scmp.eq.s32.totalorder %s13, 0
    %p104 = por %p102, %p103
    %p105 = scmp.ne.s32.totalorder %s91, %s92
    %p106 = scmp.eq.s32.totalorder %s14, 1
    %p107 = por %p105, %p106
    %p109 = scmp.ne.s32.totalorder %s92, %s108
    %p110 = scmp.eq.s32.totalorder %s14, 0
    %p111 = por %p109, %p110
    %p112 = scmp.le.s32.totalorder 1, %s8
    %p113 = scmp.lt.s32.totalorder %s8, 3
    %p114 = pnand %p112, %p113
    %p115 = pneg %p114
    // Predicated region
    $region9: #{context_seg_forward.7} parent=5 // pred_check
      _
    $region10: #{context_seg_forward.7} parent=5 // pred_check_branch
      %117 = sbr.rel (%p114) target = $region12
    $region11: #{context_seg_forward.7} parent=5 // pred_region
      %s118 = ssub.s32 %s8, 1
    $region12: #{context_seg_forward.7} parent=5 // pred_fallthru
      _
    %p119 = scmp.lt.s32.totalorder %s8, 2
    // Predicated region
    $region13: #{context_seg_forward.7} parent=5 // pred_check
      %p120 = pneg %p119
    $region14: #{context_seg_forward.7} parent=5 // pred_check_branch
      %122 = sbr.rel (%p120) target = $region16
    $region15: #{context_seg_forward.7} parent=5 // pred_region
      // Predicated region
      $region17: #{context_seg_forward.7} parent=15 // pred_check
        %p123 = pneg %p42
      $region18: #{context_seg_forward.7} parent=15 // pred_check_branch
        %125 = sbr.rel (%p123) target = $region20
      $region19: #{context_seg_forward.7} parent=15 // pred_region
        %p126 = scmp.lt.s32.totalorder %s15, 1
        %s127 = scalar_select %p126, %s15, 1
        %p128 = scmp.lt.s32.totalorder %s16, 0
        %s129 = scalar_select %p128, %s16, 0
        %s130 = smul.addr %s127, 4
        %s131 = sadd.s32 %s129, %s130
        %s132 = smul.addr %s131, 2
        %s133 = scalar_lea.vmem %s0, %s132
      $region20: #{context_seg_forward.7} parent=15 // pred_fallthru
        _
      // Predicated region
      $region21: #{context_seg_forward.7} parent=15 // pred_check
        %p134 = pneg %p70
      $region22: #{context_seg_forward.7} parent=15 // pred_check_branch
        %136 = sbr.rel (%p134) target = $region24
      $region23: #{context_seg_forward.7} parent=15 // pred_region
        %p137 = scmp.lt.s32.totalorder %s15, 1
        %s138 = scalar_select %p137, %s15, 1
        %p139 = scmp.lt.s32.totalorder %s16, 0
        %s140 = scalar_select %p139, %s16, 0
        %s141 = smul.addr %s138, 4
        %s142 = sadd.s32 %s140, %s141
        %s143 = smul.addr %s142, 2
        %s144 = scalar_lea.vmem %s1, %s143
      $region24: #{context_seg_forward.7} parent=15 // pred_fallthru
        _
    $region16: #{context_seg_forward.7} parent=5 // pred_fallthru
      _
    %p145 = scmp.le.s32.totalorder 1, %s8
    %p146 = scmp.lt.s32.totalorder %s8, 3
    %p147 = pnand %p145, %p146
    %p148 = pneg %p147
    // Predicated region
    $region25: #{context_seg_forward.7} parent=5 // pred_check
      _
    $region26: #{context_seg_forward.7} parent=5 // pred_check_branch
      %150 = sbr.rel (%p147) target = $region28
    $region27: #{context_seg_forward.7} parent=5 // pred_region
      %s151 = ssub.s32 %s8, 1
      %p152 = scmp.lt.s32.totalorder %s17, 1
      %s153 = scalar_select %p152, %s17, 1
      %p154 = scmp.lt.s32.totalorder %s18, 0
      %s155 = scalar_select %p154, %s18, 0
      %s156 = smul.addr %s153, 4
      %s157 = sadd.s32 %s155, %s156
      %s158 = smul.addr %s157, 2
      %s159 = scalar_lea.vmem %s0, %s158
      %p160 = pneg %p48
      %p161 = pneg %p45
      %p162 = scmp.lt.s32.totalorder %s17, 1
      %s163 = scalar_select %p162, %s17, 1
      %p164 = scmp.lt.s32.totalorder %s18, 0
      %s165 = scalar_select %p164, %s18, 0
      %s166 = smul.addr %s163, 4
      %s167 = sadd.s32 %s165, %s166
      %s168 = smul.addr %s167, 2
      %s169 = scalar_lea.vmem %s1, %s168
      %p170 = pneg %p76
      %p171 = pneg %p73
      %p172 = pneg %p104
      %p173 = pneg %p101
      %p174 = scmp.lt.s32.totalorder %s17, 1
      %s175 = scalar_select %p174, %s17, 1
      %p176 = scmp.lt.s32.totalorder %s18, 0
      %s177 = scalar_select %p176, %s18, 0
      %s178 = smul.addr %s175, 4
      %s179 = sadd.s32 %s177, %s178
      %s180 = smul.addr %s179, 2
      %s181 = scalar_lea.vmem %s2, %s180
      %p182 = scmp.lt.s32.totalorder %s17, 1
      %s183 = scalar_select %p182, %s17, 1
      %p184 = scmp.lt.s32.totalorder %s18, 0
      %s185 = scalar_select %p184, %s18, 0
      %s186 = smul.addr %s183, 4
      %s187 = sadd.s32 %s185, %s186
      %s188 = smul.addr %s187, 2
      %s189 = scalar_lea.vmem %s0, %s188
      %p190 = scmp.lt.s32.totalorder %s17, 1
      %s191 = scalar_select %p190, %s17, 1
      %p192 = scmp.lt.s32.totalorder %s18, 0
      %s193 = scalar_select %p192, %s18, 0
      %s194 = smul.addr %s191, 4
      %s195 = sadd.s32 %s193, %s194
      %s196 = smul.addr %s195, 2
      %s197 = scalar_lea.vmem %s1, %s196
      %p198 = scmp.lt.s32.totalorder %s17, 1
      %s199 = scalar_select %p198, %s17, 1
      %p200 = scmp.lt.s32.totalorder %s18, 0
      %s201 = scalar_select %p200, %s18, 0
      %s202 = smul.addr %s199, 4
      %s203 = sadd.s32 %s201, %s202
      %s204 = smul.addr %s203, 2
      %s205 = scalar_lea.vmem %s2, %s204
      %v206 = vld [vmem:[%s197] sm:$0x3]
      %v207 = vld [vmem:[%s197 + $0x2] sm:$0x3]
      %v208 = vld [vmem:[%s197 + $0x4] sm:$0x3]
      %v209 = vld [vmem:[%s197 + $0x6] sm:$0x3]
      %v210 = vadd.f32 %v206, 1.0
      %v211 = vadd.f32 %v207, 1.0
      %v212 = vadd.f32 %v208, 1.0
      %v213 = vadd.f32 %v209, 1.0
      %v214 = vld [vmem:[%s189] sm:$0x3]
      %v215 = vld [vmem:[%s189 + $0x2] sm:$0x3]
      %v216 = vld [vmem:[%s189 + $0x4] sm:$0x3]
      %v217 = vld [vmem:[%s189 + $0x6] sm:$0x3]
      %v218 = vmul.f32 %v210, %v214
      %v219 = vmul.f32 %v211, %v215
      %v220 = vmul.f32 %v212, %v216
      %v221 = vmul.f32 %v213, %v217
      %vm222 = vcmask 1041408
      %v223 = vsel %vm222, %v218, -inf
      %v224 = vsel %vm222, %v219, -inf
      %v225 = vsel %vm222, %v220, -inf
      %v226 = vsel %vm222, %v221, -inf
      %v227 = vmax.f32 %v223, %v224
      %v228 = vmax.f32 %v225, %v226
      %v229 = vmax.f32 %v227, %v228
      %v230 = vsub.f32 %v218, %v229
      %v231 = vsub.f32 %v219, %v229
      %v232 = vsub.f32 %v220, %v229
      %v233 = vsub.f32 %v221, %v229
      %v234 = vmul.f32 %v230, 1.442695
      %v235 = vpow.pop %v234
      %v236 = vmul.f32 %v231, 1.442695
      %v237 = vpow.pop %v236
      %v238 = vmul.f32 %v232, 1.442695
      %v239 = vpow.pop %v238
      %v240 = vmul.f32 %v233, 1.442695
      %v241 = vpow.pop %v240
      %v242 = vsel %vm222, %v235, 0.0
      %v243 = vsel %vm222, %v237, 0.0
      %v244 = vadd.f32 %v242, %v243
      %v245 = vsel %vm222, %v239, 0.0
      %v246 = vadd.f32 %v244, %v245
      %v247 = vsel %vm222, %v241, 0.0
      %v248 = vadd.f32 %v246, %v247
      %v249 = vlog2.pop %v248
      %v250 = vmul.f32 %v249, 0.6931472
      %v251 = vadd.f32 %v229, %v250
      %v252 = vsub.f32 %v218, %v251
      %v253 = vsub.f32 %v219, %v251
      %v254 = vsub.f32 %v220, %v251
      %v255 = vsub.f32 %v221, %v251
      %256 = vst [vmem:[%s205] sm:$0x3] %v252
      %257 = vst [vmem:[%s205 + $0x2] sm:$0x3] %v253
      %258 = vst [vmem:[%s205 + $0x4] sm:$0x3] %v254
      %259 = vst [vmem:[%s205 + $0x6] sm:$0x3] %v255
      %p260 = scmp.lt.s32.totalorder %s17, 1
      %s261 = scalar_select %p260, %s17, 1
      %p262 = scmp.lt.s32.totalorder %s18, 0
      %s263 = scalar_select %p262, %s18, 0
      %s264 = smul.addr %s261, 4
      %s265 = sadd.s32 %s263, %s264
      %s266 = smul.addr %s265, 2
      %s267 = scalar_lea.vmem %s2, %s266
      // Predicated region
      $region29: #{context_seg_forward.7} parent=27 // pred_check
        %p268 = pneg %p101
      $region30: #{context_seg_forward.7} parent=27 // pred_check_branch
        %270 = sbr.rel (%p268) target = $region32
      $region31: #{context_seg_forward.7} parent=27 // pred_region
        _
      $region32: #{context_seg_forward.7} parent=27 // pred_fallthru
        _
    $region28: #{context_seg_forward.7} parent=5 // pred_fallthru
      _
    %p271 = scmp.le.s32.totalorder 2, %s8
    // Predicated region
    $region33: #{context_seg_forward.7} parent=5 // pred_check
      %p272 = pneg %p271
    $region34: #{context_seg_forward.7} parent=5 // pred_check_branch
      %274 = sbr.rel (%p272) target = $region36
    $region35: #{context_seg_forward.7} parent=5 // pred_region
      %s275 = ssub.s32 %s8, 2
      // Predicated region
      $region37: #{context_seg_forward.7} parent=35 // pred_check
        %p276 = pneg %p107
      $region38: #{context_seg_forward.7} parent=35 // pred_check_branch
        %278 = sbr.rel (%p276) target = $region40
      $region39: #{context_seg_forward.7} parent=35 // pred_region
        %p279 = scmp.lt.s32.totalorder %s19, 1
        %s280 = scalar_select %p279, %s19, 1
        %p281 = scmp.lt.s32.totalorder %s20, 0
        %s282 = scalar_select %p281, %s20, 0
        %s283 = smul.addr %s280, 4
        %s284 = sadd.s32 %s282, %s283
        %s285 = smul.addr %s284, 2
        %s286 = scalar_lea.vmem %s2, %s285
      $region40: #{context_seg_forward.7} parent=35 // pred_fallthru
        _
    $region36: #{context_seg_forward.7} parent=5 // pred_fallthru
      _
  $region6: #{context_seg_forward.7} parent=0 // loop_footer
    %s12 = sadd.s32 1, %s8
  $region7: #{context_seg_forward.7} parent=0 // loop_footer_branch
    %7 = sbr.rel target = $region3
  $region8: #{context_seg_forward.7} parent=0 // loop_exit
    _

</llo_original>
